<compile_context>
chip_gen: v5e
topology: v5e:2x2
jax: 0.10.0
libtpu: 0.0.40
codegen_flags: <defaults>
</compile_context>

<pallas_src>
import functools

import numpy as np
import jax
import jax.numpy as jnp
from jax import lax
from jax.experimental import pallas as pl
from jax.experimental.pallas import tpu as pltpu

_LN_EPS = 1e-5
_VMEM_BUDGET = 6 * 1024 * 1024   # conservative per-tile working-set budget (bytes)


# ---------------------------------------------------------------------------
# tiling helpers
# ---------------------------------------------------------------------------
def _largest_divisor(n, cap):
    cap = max(1, min(n, cap))
    for t in range(cap, 0, -1):
        if n % t == 0:
            return t
    return 1


def _row_tile(rows, bytes_per_row):
    """Row tile: multiple of 8, <=1024, VMEM-budget aware, >=2 grid steps when possible."""
    cap = (_VMEM_BUDGET // max(bytes_per_row, 1)) // 8 * 8
    cap = max(8, min(1024, cap))
    if rows >= 16:
        cap = min(cap, max(8, (rows // 2) // 8 * 8))
    for c in range(cap, 7, -8):
        if rows % c == 0:
            return c
    return rows  # full-extent block (legal).  TODO(synk): pad rows to a multiple of 8.


def _group_tile(n_win, per_group_bytes):
    """Window-group tile for the attention kernel; divides n_win (mask indexing)."""
    cap = _VMEM_BUDGET // max(per_group_bytes, 1)
    if n_win >= 2:
        cap = min(cap, n_win // 2)   # keep >=2 grid steps for megacore when possible
    return _largest_divisor(n_win, max(1, cap))


def _adjust_window(window_size, shift_size, resolution):
    """Mirror SwinTransformerBlock.__init__ window/shift adjustment."""
    if min(resolution) <= window_size:
        return min(resolution), 0
    return window_size, shift_size


def _rep_spec(shape):
    nd = len(shape)
    return pl.BlockSpec(shape, lambda i: (0,) * nd)


# ---------------------------------------------------------------------------
# in-kernel math helpers
# ---------------------------------------------------------------------------
def _ln_f32(x, g, b):
    mu = jnp.mean(x, axis=-1, keepdims=True)
    var = jnp.mean(jnp.square(x - mu), axis=-1, keepdims=True)
    return (x - mu) * lax.rsqrt(var + _LN_EPS) * g + b


def _gelu_tanh(x):
    c = jnp.float32(0.7978845608028654)  # sqrt(2/pi)
    return 0.5 * x * (1.0 + jnp.tanh(c * (x + 0.044715 * x * x * x)))


def _one_head_attention(qh, kh, vh, rel_h, mask, scale):
    """qh/kh/vh: (gb, N, Dh) f32; rel_h: (N, N); mask: (gb, N, N) or None."""
    s = jnp.einsum("bnd,bmd->bnm", qh.astype(jnp.bfloat16), kh.astype(jnp.bfloat16),
                   preferred_element_type=jnp.float32) * scale
    s = s + rel_h[None]
    if mask is not None:
        s = s + mask
    s = s - jnp.max(s, axis=-1, keepdims=True)
    p = jnp.exp(s)
    p = p * pl.reciprocal(jnp.sum(p, axis=-1, keepdims=True), approx=True)
    return jnp.einsum("bnm,bmd->bnd", p.astype(jnp.bfloat16), vh.astype(jnp.bfloat16),
                      preferred_element_type=jnp.float32)


# ---------------------------------------------------------------------------
# Pallas kernels
# ---------------------------------------------------------------------------
def _ln_linear_kernel(x_ref, g_ref, b_ref, w_ref, wb_ref, o_ref):
    x = x_ref[...].astype(jnp.float32)
    xn = _ln_f32(x, g_ref[...], b_ref[...])
    y = jnp.dot(xn.astype(w_ref.dtype), w_ref[...], preferred_element_type=jnp.float32)
    o_ref[...] = (y + wb_ref[...]).astype(o_ref.dtype)


def _attn_qkv_body(x_ref, g_ref, b_ref, w_ref, wb_ref, rel_ref, mask, o_ref, num_heads, scale):
    gb, N, C = x_ref.shape
    Dh = C // num_heads
    x = x_ref[...].astype(jnp.float32)
    xn = _ln_f32(x, g_ref[...], b_ref[...])
    qkv = jnp.dot(xn.reshape(gb * N, C).astype(w_ref.dtype), w_ref[...],
                  preferred_element_type=jnp.float32) + wb_ref[...]
    qkv = qkv.reshape(gb, N, 3 * C)
    rel = rel_ref[...]
    outs = []
    for h in range(num_heads):
        qh = qkv[:, :, h * Dh:(h + 1) * Dh]
        kh = qkv[:, :, C + h * Dh:C + (h + 1) * Dh]
        vh = qkv[:, :, 2 * C + h * Dh:2 * C + (h + 1) * Dh]
        outs.append(_one_head_attention(qh, kh, vh, rel[h], mask, scale))
    o_ref[...] = jnp.concatenate(outs, axis=-1).astype(o_ref.dtype)


def _attn_qkv_kernel(x_ref, g_ref, b_ref, w_ref, wb_ref, rel_ref, o_ref, *, num_heads, scale):
    _attn_qkv_body(x_ref, g_ref, b_ref, w_ref, wb_ref, rel_ref, None, o_ref, num_heads, scale)


def _attn_qkv_mask_kernel(x_ref, g_ref, b_ref, w_ref, wb_ref, rel_ref, mask_ref, o_ref,
                          *, num_heads, scale):
    _attn_qkv_body(x_ref, g_ref, b_ref, w_ref, wb_ref, rel_ref, mask_ref[...], o_ref,
                   num_heads, scale)


def _attn_kv_kernel(skip_ref, xup_ref, g_ref, b_ref, w_ref, wb_ref, rel_ref, o_ref,
                    *, num_heads, scale):
    gb, N, C = skip_ref.shape
    Dh = C // num_heads
    skn = _ln_f32(skip_ref[...].astype(jnp.float32), g_ref[...], b_ref[...])
    qn = _ln_f32(xup_ref[...].astype(jnp.float32), g_ref[...], b_ref[...])
    kv = jnp.dot(skn.reshape(gb * N, C).astype(w_ref.dtype), w_ref[...],
                 preferred_element_type=jnp.float32) + wb_ref[...]
    kv = kv.reshape(gb, N, 2 * C)
    rel = rel_ref[...]
    outs = []
    for h in range(num_heads):
        qh = qn[:, :, h * Dh:(h + 1) * Dh]
        kh = kv[:, :, h * Dh:(h + 1) * Dh]
        vh = kv[:, :, C + h * Dh:C + (h + 1) * Dh]
        outs.append(_one_head_attention(qh, kh, vh, rel[h], None, scale))
    o_ref[...] = jnp.concatenate(outs, axis=-1).astype(o_ref.dtype)


def _proj_mlp_body(t_ref, pw_ref, pb_ref, res, g_ref, b_ref, w1_ref, b1_ref, w2_ref, b2_ref,
                   o_ref):
    y = jnp.dot(t_ref[...].astype(pw_ref.dtype), pw_ref[...],
                preferred_element_type=jnp.float32) + pb_ref[...]
    x = y + res
    xn = _ln_f32(x, g_ref[...], b_ref[...])
    h = jnp.dot(xn.astype(w1_ref.dtype), w1_ref[...],
                preferred_element_type=jnp.float32) + b1_ref[...]
    h = _gelu_tanh(h)
    y2 = jnp.dot(h.astype(w2_ref.dtype), w2_ref[...],
                 preferred_element_type=jnp.float32) + b2_ref[...]
    o_ref[...] = (x + y2).astype(o_ref.dtype)


def _proj_mlp_res1_kernel(t_ref, pw_ref, pb_ref, r_ref, g_ref, b_ref, w1_ref, b1_ref,
                          w2_ref, b2_ref, o_ref):
    _proj_mlp_body(t_ref, pw_ref, pb_ref, r_ref[...].astype(jnp.float32),
                   g_ref, b_ref, w1_ref, b1_ref, w2_ref, b2_ref, o_ref)


def _proj_mlp_res2_kernel(t_ref, pw_ref, pb_ref, r1_ref, r2_ref, g_ref, b_ref, w1_ref, b1_ref,
                          w2_ref, b2_ref, o_ref):
    res = r1_ref[...].astype(jnp.float32) + r2_ref[...].astype(jnp.float32)
    _proj_mlp_body(t_ref, pw_ref, pb_ref, res, g_ref, b_ref, w1_ref, b1_ref, w2_ref, b2_ref,
                   o_ref)


# ---------------------------------------------------------------------------
# pallas_call wrappers
# ---------------------------------------------------------------------------
def ln_linear_pallas(x2d, g, b, w, wb):
    rows, C = x2d.shape
    Cout = w.shape[1]
    w = w.astype(jnp.bfloat16)
    tr = _row_tile(rows, 4 * (2 * C + 2 * Cout))
    return pl.pallas_call(
        _ln_linear_kernel,
        out_shape=jax.ShapeDtypeStruct((rows, Cout), jnp.float32),
        grid_spec=pltpu.PrefetchScalarGridSpec(
            num_scalar_prefetch=0,
            grid=(pl.cdiv(rows, tr),),
            in_specs=[pl.BlockSpec((tr, C), lambda i: (i, 0)),
                      _rep_spec((1, C)), _rep_spec((1, C)),
                      _rep_spec((C, Cout)), _rep_spec((1, Cout))],
            out_specs=pl.BlockSpec((tr, Cout), lambda i: (i, 0)),
        ),
        compiler_params=pltpu.CompilerParams(dimension_semantics=("parallel",)),
        cost_estimate=pl.CostEstimate(
            flops=int(2 * rows * C * Cout + 8 * rows * C),
            transcendentals=int(rows),
            bytes_accessed=int(4 * rows * (C + Cout) + 2 * C * Cout)),
    )(x2d, g.reshape(1, C), b.reshape(1, C), w, wb.reshape(1, Cout))


def attn_qkv_pallas(x_win, g, b, qkv_w, qkv_b, rel_bias, mask, num_heads, scale, n_win):
    G, N, C = x_win.shape
    nH = num_heads
    w = qkv_w.astype(jnp.bfloat16)
    per_group = 4 * (N * 6 * C + 4 * nH * N * N)
    gb = _group_tile(n_win, per_group)
    in_specs = [pl.BlockSpec((gb, N, C), lambda i: (i, 0, 0)),
                _rep_spec((1, C)), _rep_spec((1, C)),
                _rep_spec((C, 3 * C)), _rep_spec((1, 3 * C)),
                _rep_spec((nH, N, N))]
    args = [x_win, g.reshape(1, C), b.reshape(1, C), w, qkv_b.reshape(1, 3 * C), rel_bias]
    if mask is not None:
        n_blk = n_win // gb
        in_specs.append(pl.BlockSpec((gb, N, N), lambda i: (i % n_blk, 0, 0)))
        args.append(mask)
        kern = functools.partial(_attn_qkv_mask_kernel, num_heads=nH, scale=scale)
    else:
        kern = functools.partial(_attn_qkv_kernel, num_heads=nH, scale=scale)
    return pl.pallas_call(
        kern,
        out_shape=jax.ShapeDtypeStruct((G, N, C), jnp.bfloat16),
        grid_spec=pltpu.PrefetchScalarGridSpec(
            num_scalar_prefetch=0,
            grid=(G // gb,),
            in_specs=in_specs,
            out_specs=pl.BlockSpec((gb, N, C), lambda i: (i, 0, 0)),
        ),
        compiler_params=pltpu.CompilerParams(dimension_semantics=("parallel",)),
        cost_estimate=pl.CostEstimate(
            flops=int(6 * G * N * C * C + 4 * G * N * N * C),
            transcendentals=int(G * nH * N * N),
            bytes_accessed=int(4 * G * N * C + 2 * G * N * C + 6 * C * C
                               + 4 * nH * N * N + 4 * n_win * N * N)),
    )(*args)


def attn_kv_pallas(skip_win, xup_win, g, b, kv_w, kv_b, rel_bias, num_heads, scale, n_win):
    G, N, C = skip_win.shape
    nH = num_heads
    w = kv_w.astype(jnp.bfloat16)
    per_group = 4 * (N * 6 * C + 4 * nH * N * N)
    gb = _group_tile(n_win, per_group)
    kern = functools.partial(_attn_kv_kernel, num_heads=nH, scale=scale)
    return pl.pallas_call(
        kern,
        out_shape=jax.ShapeDtypeStruct((G, N, C), jnp.bfloat16),
        grid_spec=pltpu.PrefetchScalarGridSpec(
            num_scalar_prefetch=0,
            grid=(G // gb,),
            in_specs=[pl.BlockSpec((gb, N, C), lambda i: (i, 0, 0)),
                      pl.BlockSpec((gb, N, C), lambda i: (i, 0, 0)),
                      _rep_spec((1, C)), _rep_spec((1, C)),
                      _rep_spec((C, 2 * C)), _rep_spec((1, 2 * C)),
                      _rep_spec((nH, N, N))],
            out_specs=pl.BlockSpec((gb, N, C), lambda i: (i, 0, 0)),
        ),
        compiler_params=pltpu.CompilerParams(dimension_semantics=("parallel",)),
        cost_estimate=pl.CostEstimate(
            flops=int(4 * G * N * C * C + 4 * G * N * N * C),
            transcendentals=int(G * nH * N * N),
            bytes_accessed=int(8 * G * N * C + 2 * G * N * C + 4 * C * C + 4 * nH * N * N)),
    )(skip_win, xup_win, g.reshape(1, C), b.reshape(1, C), w, kv_b.reshape(1, 2 * C), rel_bias)


def proj_mlp_pallas(tokens, proj_w, proj_b, residuals, g2, b2, fc1_w, fc1_b, fc2_w, fc2_b):
    rows, C = tokens.shape
    Ch = fc1_w.shape[1]
    pw = proj_w.astype(jnp.bfloat16)
    w1 = fc1_w.astype(jnp.bfloat16)
    w2 = fc2_w.astype(jnp.bfloat16)
    nres = len(residuals)
    tr = _row_tile(rows, 4 * ((3 + nres) * C + Ch) + 2 * C)
    in_specs = [pl.BlockSpec((tr, C), lambda i: (i, 0)),
                _rep_spec((C, C)), _rep_spec((1, C))]
    in_specs += [pl.BlockSpec((tr, C), lambda i: (i, 0)) for _ in residuals]
    in_specs += [_rep_spec((1, C)), _rep_spec((1, C)),
                 _rep_spec((C, Ch)), _rep_spec((1, Ch)),
                 _rep_spec((Ch, C)), _rep_spec((1, C))]
    kern = _proj_mlp_res1_kernel if nres == 1 else _proj_mlp_res2_kernel
    args = [tokens, pw, proj_b.reshape(1, C)] + list(residuals) + \
           [g2.reshape(1, C), b2.reshape(1, C), w1, fc1_b.reshape(1, Ch), w2, fc2_b.reshape(1, C)]
    return pl.pallas_call(
        kern,
        out_shape=jax.ShapeDtypeStruct((rows, C), jnp.float32),
        grid_spec=pltpu.PrefetchScalarGridSpec(
            num_scalar_prefetch=0,
            grid=(pl.cdiv(rows, tr),),
            in_specs=in_specs,
            out_specs=pl.BlockSpec((tr, C), lambda i: (i, 0)),
        ),
        compiler_params=pltpu.CompilerParams(dimension_semantics=("parallel",)),
        cost_estimate=pl.CostEstimate(
            flops=int(2 * rows * C * C + 4 * rows * C * Ch + 12 * rows * C),
            transcendentals=int(rows * (Ch + 1)),
            bytes_accessed=int(4 * rows * C * (2 + nres) + 2 * rows * C
                               + 2 * (C * C + 2 * C * Ch))),
    )(*args)


# ---------------------------------------------------------------------------
# layout plumbing (JAX) and static tables (numpy)
# ---------------------------------------------------------------------------
def window_partition(x, ws):
    B, S, H, W, C = x.shape
    x = x.reshape(B, S // ws, ws, H // ws, ws, W // ws, ws, C)
    x = jnp.transpose(x, (0, 1, 3, 5, 2, 4, 6, 7))
    return x.reshape(-1, ws, ws, ws, C)


def window_reverse(windows, ws, S, H, W):
    B = windows.shape[0] // ((S // ws) * (H // ws) * (W // ws))
    x = windows.reshape(B, S // ws, H // ws, W // ws, ws, ws, ws, -1)
    x = jnp.transpose(x, (0, 1, 4, 2, 5, 3, 6, 7))
    return x.reshape(B, S, H, W, -1)


def _relative_position_index(ws):
    coords = np.stack(np.meshgrid(np.arange(ws), np.arange(ws), np.arange(ws), indexing="ij"))
    flat = coords.reshape(3, -1)
    rel = (flat[:, :, None] - flat[:, None, :]).transpose(1, 2, 0).astype(np.int64)
    rel[:, :, 0] += ws - 1
    rel[:, :, 1] += ws - 1
    rel[:, :, 2] += ws - 1
    rel[:, :, 0] *= 3 * ws - 1
    rel[:, :, 1] *= 2 * ws - 1
    return rel.sum(-1)  # (N, N)


def _shifted_window_mask(S, H, W, ws, shift):
    Sp = int(np.ceil(S / ws)) * ws
    Hp = int(np.ceil(H / ws)) * ws
    Wp = int(np.ceil(W / ws)) * ws
    img = np.zeros((1, Sp, Hp, Wp, 1), np.float32)
    sl = (slice(0, -ws), slice(-ws, -shift), slice(-shift, None))
    cnt = 0
    for s in sl:
        for h in sl:
            for w in sl:
                img[:, s, h, w, :] = cnt
                cnt += 1
    m = img.reshape(1, Sp // ws, ws, Hp // ws, ws, Wp // ws, ws, 1)
    m = m.transpose(0, 1, 3, 5, 2, 4, 6, 7).reshape(-1, ws * ws * ws)
    diff = m[:, None, :] - m[:, :, None]
    return np.where(diff != 0, -100.0, 0.0).astype(np.float32)  # (nW, N, N)


def _rel_pos_bias(table, ws, num_heads):
    N = ws ** 3
    idx = _relative_position_index(ws).reshape(-1)
    bias = jnp.take(table, jnp.asarray(idx), axis=0).reshape(N, N, num_heads)
    return jnp.transpose(bias, (2, 0, 1))  # (nH, N, N)


# ---------------------------------------------------------------------------
# module pieces
# ---------------------------------------------------------------------------
def patch_expanding(x, p, S, H, W):
    """nnFormer Patch_Expanding: LayerNorm(2*dim) + ConvTranspose3d(2*dim, dim, 2, 2)."""
    B, L, C2 = x.shape
    C = C2 // 2
    wb = jnp.tile(p["b"], 8)  # bias per (kd, kh, kw, out_channel) column
    y = ln_linear_pallas(x.reshape(B * L, C2), p["norm_g"], p["norm_b"], p["w"], wb)
    y = y.reshape(B, S, H, W, 2, 2, 2, C)
    y = jnp.transpose(y, (0, 1, 4, 2, 5, 3, 6, 7)).reshape(B, 2 * S, 2 * H, 2 * W, C)
    return y.reshape(B, 8 * L, C)


def swin_block_regular(x, p, resolution, num_heads, window_size, shift_size, attn_mask):
    B, L, C = x.shape
    S, H, W = resolution
    ws, shift = _adjust_window(window_size, shift_size, resolution)
    assert L == S * H * W
    assert S % ws == 0 and H % ws == 0 and W % ws == 0  # TODO(synk): pad path unimplemented
    N = ws ** 3
    nW = (S // ws) * (H // ws) * (W // ws)
    Dh = C // num_heads
    scale = Dh ** -0.5
    shortcut = x.reshape(B * L, C)

    xs = x.reshape(B, S, H, W, C)
    if shift > 0:
        xs = jnp.roll(xs, shift=(-shift, -shift, -shift), axis=(1, 2, 3))
    x_win = window_partition(xs, ws).reshape(-1, N, C)

    rel_bias = _rel_pos_bias(p["rel_table"], ws, num_heads)
    mask = attn_mask if shift > 0 else None
    attn = attn_qkv_pallas(x_win, p["norm1_g"], p["norm1_b"], p["qkv_w"], p["qkv_b"],
                           rel_bias, mask, num_heads, scale, nW)        # (B_, N, C) bf16
    xs = window_reverse(attn.reshape(-1, ws, ws, ws, C), ws, S, H, W)
    if shift > 0:
        xs = jnp.roll(xs, shift=(shift, shift, shift), axis=(1, 2, 3))
    tokens = xs.reshape(B * L, C)

    out = proj_mlp_pallas(tokens, p["proj_w"], p["proj_b"], [shortcut],
                          p["norm2_g"], p["norm2_b"],
                          p["fc1_w"], p["fc1_b"], p["fc2_w"], p["fc2_b"])
    return out.reshape(B, L, C)


def swin_block_kv(x_up, skip, p, resolution, num_heads, window_size):
    B, L, C = x_up.shape
    S, H, W = resolution
    ws, _ = _adjust_window(window_size, 0, resolution)   # block 0 is built with shift 0
    assert L == S * H * W
    assert S % ws == 0 and H % ws == 0 and W % ws == 0
    N = ws ** 3
    nW = (S // ws) * (H // ws) * (W // ws)
    Dh = C // num_heads
    scale = Dh ** -0.5

    skip_win = window_partition(skip.reshape(B, S, H, W, C), ws).reshape(-1, N, C)
    xup_win = window_partition(x_up.reshape(B, S, H, W, C), ws).reshape(-1, N, C)

    rel_bias = _rel_pos_bias(p["rel_table"], ws, num_heads)
    attn = attn_kv_pallas(skip_win, xup_win, p["norm1_g"], p["norm1_b"],
                          p["kv_w"], p["kv_b"], rel_bias, num_heads, scale, nW)
    xs = window_reverse(attn.reshape(-1, ws, ws, ws, C), ws, S, H, W)
    tokens = xs.reshape(B * L, C)

    # shortcut = x_up + skip is fused into the tail kernel as two residual inputs.
    out = proj_mlp_pallas(tokens, p["proj_w"], p["proj_b"],
                          [x_up.reshape(B * L, C), skip.reshape(B * L, C)],
                          p["norm2_g"], p["norm2_b"],
                          p["fc1_w"], p["fc1_b"], p["fc2_w"], p["fc2_b"])
    return out.reshape(B, L, C)


def basic_layer_up_forward(params, x, skip, *, S, H, W, window_size, num_heads, depth):
    shift_size = window_size // 2
    x_up = patch_expanding(x, params["upsample"], S, H, W)    # (B, 8L, dim)
    S, H, W = 2 * S, 2 * H, 2 * W
    resolution = (S, H, W)

    attn_mask = jnp.asarray(_shifted_window_mask(S, H, W, window_size, shift_size))

    x = swin_block_kv(x_up, skip, params["blocks"][0], resolution, num_heads, window_size)
    for i in range(1, depth):
        x = swin_block_regular(x, params["blocks"][i], resolution, num_heads,
                               window_size, shift_size, attn_mask)
    return x, S, H, W


# ---------------------------------------------------------------------------
# parameter init
# ---------------------------------------------------------------------------
def init_params(key, *, dim, num_heads, window_size, depth, block_resolution, mlp_ratio=4.0):
    C = dim
    C2 = 2 * dim
    Ch = int(C * mlp_ratio)
    ws, _ = _adjust_window(window_size, 0, block_resolution)
    table_size = (2 * ws - 1) ** 3
    keys = iter(jax.random.split(key, 8 + 16 * depth))

    def nrm(shape, std=0.02):
        return jax.random.normal(next(keys), shape, jnp.float32) * std

    def block_params(kv):
        d = {
            "norm1_g": jnp.ones((C,), jnp.float32), "norm1_b": jnp.zeros((C,), jnp.float32),
            "rel_table": nrm((table_size, num_heads)),
            "proj_w": nrm((C, C)), "proj_b": nrm((C,)),
            "norm2_g": jnp.ones((C,), jnp.float32), "norm2_b": jnp.zeros((C,), jnp.float32),
            "fc1_w": nrm((C, Ch)), "fc1_b": nrm((Ch,)),
            "fc2_w": nrm((Ch, C)), "fc2_b": nrm((C,)),
        }
        if kv:
            d["kv_w"] = nrm((C, 2 * C)); d["kv_b"] = nrm((2 * C,))
        else:
            d["qkv_w"] = nrm((C, 3 * C)); d["qkv_b"] = nrm((3 * C,))
        return d

    return {
        "upsample": {
            "norm_g": jnp.ones((C2,), jnp.float32), "norm_b": jnp.zeros((C2,), jnp.float32),
            # ConvTranspose3d(C2 -> C, k=2, s=2) weight laid out as (C2, kD*kH*kW*C)
            "w": nrm((C2, 8 * C)), "b": nrm((C,)),
        },
        "blocks": [block_params(kv=(i == 0)) for i in range(depth)],
    }


# ---------------------------------------------------------------------------
# demo
# ---------------------------------------------------------------------------
if __name__ == "__main__":
    key = jax.random.PRNGKey(0)
    B = 1
    dim = 32            # block / skip channel width (low-res input has 2*dim channels)
    num_heads = 2
    window_size = 2
    depth = 2
    S = H = W = 2       # low-resolution spatial extent of `x`
    L = S * H * W

    k_x, k_skip, k_par = jax.random.split(key, 3)
    x = jax.random.normal(k_x, (B, L, 2 * dim), jnp.float32)
    skip = jax.random.normal(k_skip, (B, 8 * L, dim), jnp.float32)
    params = init_params(k_par, dim=dim, num_heads=num_heads, window_size=window_size,
                         depth=depth, block_resolution=(2 * S, 2 * H, 2 * W))

    fwd = jax.jit(functools.partial(basic_layer_up_forward, S=S, H=H, W=W,
                                    window_size=window_size, num_heads=num_heads,
                                    depth=depth))
    out, S2, H2, W2 = fwd(params, x, skip)
    out = jax.block_until_ready(out)

    assert out.shape == (B, 8 * L, dim), out.shape
    assert int(S2) == 2 * S and int(H2) == 2 * H and int(W2) == 2 * W
    assert bool(jnp.all(jnp.isfinite(out))), "non-finite values in output"
    print("KERNEL_OK")
</pallas_src>

<mosaic_0001>
module attributes {stable_mosaic.version = 11 : i64} {
  func.func @_ln_linear_kernel(%arg0: i32, %arg1: memref<8x64xf32, #tpu.memory_space<vmem>>, %arg2: memref<1x64xf32, #tpu.memory_space<vmem>>, %arg3: memref<1x64xf32, #tpu.memory_space<vmem>>, %arg4: memref<64x256xbf16, #tpu.memory_space<vmem>>, %arg5: memref<1x256xf32, #tpu.memory_space<vmem>>, %arg6: memref<8x256xf32, #tpu.memory_space<vmem>>) attributes {dimension_semantics = [#tpu.dimension_semantics<parallel>], iteration_bounds = array<i64: 1>, scalar_prefetch = 0 : i64, scratch_operands = 0 : i64, tpu.core_type = #tpu.core_type<tc>, window_params = [{transform_indices = @transform_0, window_bounds = array<i64: 8, 64>}, {pipeline_mode = #tpu.pipeline_mode<synchronous>, transform_indices = @transform_1, window_bounds = array<i64: 1, 64>}, {pipeline_mode = #tpu.pipeline_mode<synchronous>, transform_indices = @transform_2, window_bounds = array<i64: 1, 64>}, {pipeline_mode = #tpu.pipeline_mode<synchronous>, transform_indices = @transform_3, window_bounds = array<i64: 64, 256>}, {pipeline_mode = #tpu.pipeline_mode<synchronous>, transform_indices = @transform_4, window_bounds = array<i64: 1, 256>}, {transform_indices = @transform_5, window_bounds = array<i64: 8, 256>}]} {
    %c0 = arith.constant 0 : index
    %c0_0 = arith.constant 0 : index
    %0 = vector.load %arg1[%c0, %c0_0] : memref<8x64xf32, #tpu.memory_space<vmem>>, vector<8x64xf32>
    %c0_1 = arith.constant 0 : index
    %c0_2 = arith.constant 0 : index
    %1 = vector.load %arg2[%c0_1, %c0_2] : memref<1x64xf32, #tpu.memory_space<vmem>>, vector<1x64xf32>
    %c0_3 = arith.constant 0 : index
    %c0_4 = arith.constant 0 : index
    %2 = vector.load %arg3[%c0_3, %c0_4] : memref<1x64xf32, #tpu.memory_space<vmem>>, vector<1x64xf32>
    %cst = arith.constant dense<0.000000e+00> : vector<8xf32>
    %3 = vector.multi_reduction <add>, %0, %cst [1] : vector<8x64xf32> to vector<8xf32>
    %4 = vector.shape_cast %3 : vector<8xf32> to vector<8x1xf32>
    %cst_5 = arith.constant 6.400000e+01 : f32
    %5 = vector.broadcast %cst_5 : f32 to vector<8x1xf32>
    %6 = arith.divf %4, %5 : vector<8x1xf32>
    %7 = vector.broadcast %6 : vector<8x1xf32> to vector<8x64xf32>
    %8 = arith.subf %0, %7 : vector<8x64xf32>
    %9 = arith.mulf %8, %8 : vector<8x64xf32>
    %cst_6 = arith.constant dense<0.000000e+00> : vector<8xf32>
    %10 = vector.multi_reduction <add>, %9, %cst_6 [1] : vector<8x64xf32> to vector<8xf32>
    %11 = vector.shape_cast %10 : vector<8xf32> to vector<8x1xf32>
    %cst_7 = arith.constant 6.400000e+01 : f32
    %12 = vector.broadcast %cst_7 : f32 to vector<8x1xf32>
    %13 = arith.divf %11, %12 : vector<8x1xf32>
    %14 = vector.broadcast %6 : vector<8x1xf32> to vector<8x64xf32>
    %15 = arith.subf %0, %14 : vector<8x64xf32>
    %cst_8 = arith.constant 9.99999974E-6 : f32
    %16 = vector.broadcast %cst_8 : f32 to vector<8x1xf32>
    %17 = arith.addf %13, %16 : vector<8x1xf32>
    %18 = math.rsqrt %17 : vector<8x1xf32>
    %19 = vector.broadcast %18 : vector<8x1xf32> to vector<8x64xf32>
    %20 = arith.mulf %15, %19 : vector<8x64xf32>
    %21 = vector.broadcast %1 : vector<1x64xf32> to vector<8x64xf32>
    %22 = arith.mulf %20, %21 : vector<8x64xf32>
    %23 = vector.broadcast %2 : vector<1x64xf32> to vector<8x64xf32>
    %24 = arith.addf %22, %23 : vector<8x64xf32>
    %25 = arith.truncf %24 : vector<8x64xf32> to vector<8x64xbf16>
    %c0_9 = arith.constant 0 : index
    %c0_10 = arith.constant 0 : index
    %26 = vector.load %arg4[%c0_9, %c0_10] : memref<64x256xbf16, #tpu.memory_space<vmem>>, vector<64x256xbf16>
    %cst_11 = arith.constant dense<0.000000e+00> : vector<8x256xf32>
    %27 = tpu.matmul %25, %26, %cst_11 {dimension_numbers = #tpu.dot_dimension_numbers<[1], [0], [0], [1], [0, 0, 1, 1], [], []>} : vector<8x64xbf16>, vector<64x256xbf16>, vector<8x256xf32> -> vector<8x256xf32>
    %c0_12 = arith.constant 0 : index
    %c0_13 = arith.constant 0 : index
    %28 = vector.load %arg5[%c0_12, %c0_13] : memref<1x256xf32, #tpu.memory_space<vmem>>, vector<1x256xf32>
    %29 = vector.broadcast %28 : vector<1x256xf32> to vector<8x256xf32>
    %30 = arith.addf %27, %29 : vector<8x256xf32>
    %c0_14 = arith.constant 0 : index
    %c0_15 = arith.constant 0 : index
    %31 = vector.load %arg6[%c0_14, %c0_15] : memref<8x256xf32, #tpu.memory_space<vmem>>, vector<8x256xf32>
    tpu.vector_store %arg6[%c0_14, %c0_15], %30 {strides = array<i32>} : memref<8x256xf32, #tpu.memory_space<vmem>>, vector<8x256xf32>,
    return
  }
  func.func @transform_0(%arg0: i32) -> (i32, i32) {
    %c0_i32 = arith.constant 0 : i32
    %c0_i32_0 = arith.constant 0 : i32
    return %arg0, %c0_i32 : i32, i32
  }
  func.func @transform_1(%arg0: i32) -> (i32, i32) {
    %c0_i32 = arith.constant 0 : i32
    %c0_i32_0 = arith.constant 0 : i32
    %c0_i32_1 = arith.constant 0 : i32
    return %c0_i32, %c0_i32_0 : i32, i32
  }
  func.func @transform_2(%arg0: i32) -> (i32, i32) {
    %c0_i32 = arith.constant 0 : i32
    %c0_i32_0 = arith.constant 0 : i32
    %c0_i32_1 = arith.constant 0 : i32
    return %c0_i32, %c0_i32_0 : i32, i32
  }
  func.func @transform_3(%arg0: i32) -> (i32, i32) {
    %c0_i32 = arith.constant 0 : i32
    %c0_i32_0 = arith.constant 0 : i32
    %c0_i32_1 = arith.constant 0 : i32
    return %c0_i32, %c0_i32_0 : i32, i32
  }
  func.func @transform_4(%arg0: i32) -> (i32, i32) {
    %c0_i32 = arith.constant 0 : i32
    %c0_i32_0 = arith.constant 0 : i32
    %c0_i32_1 = arith.constant 0 : i32
    return %c0_i32, %c0_i32_0 : i32, i32
  }
  func.func @transform_5(%arg0: i32) -> (i32, i32) {
    %c0_i32 = arith.constant 0 : i32
    %c0_i32_0 = arith.constant 0 : i32
    return %arg0, %c0_i32 : i32, i32
  }
}

module attributes {stable_mosaic.version = 11 : i64} {
  func.func @_attn_kv_kernel(%arg0: i32, %arg1: memref<4x8x32xf32, #tpu.memory_space<vmem>>, %arg2: memref<4x8x32xf32, #tpu.memory_space<vmem>>, %arg3: memref<1x32xf32, #tpu.memory_space<vmem>>, %arg4: memref<1x32xf32, #tpu.memory_space<vmem>>, %arg5: memref<32x64xbf16, #tpu.memory_space<vmem>>, %arg6: memref<1x64xf32, #tpu.memory_space<vmem>>, %arg7: memref<2x8x8xf32, #tpu.memory_space<vmem>>, %arg8: memref<4x8x32xbf16, #tpu.memory_space<vmem>>) attributes {dimension_semantics = [#tpu.dimension_semantics<parallel>], iteration_bounds = array<i64: 2>, scalar_prefetch = 0 : i64, scratch_operands = 0 : i64, tpu.core_type = #tpu.core_type<tc>, window_params = [{transform_indices = @transform_0, window_bounds = array<i64: 4, 8, 32>}, {transform_indices = @transform_1, window_bounds = array<i64: 4, 8, 32>}, {pipeline_mode = #tpu.pipeline_mode<synchronous>, transform_indices = @transform_2, window_bounds = array<i64: 1, 32>}, {pipeline_mode = #tpu.pipeline_mode<synchronous>, transform_indices = @transform_3, window_bounds = array<i64: 1, 32>}, {pipeline_mode = #tpu.pipeline_mode<synchronous>, transform_indices = @transform_4, window_bounds = array<i64: 32, 64>}, {pipeline_mode = #tpu.pipeline_mode<synchronous>, transform_indices = @transform_5, window_bounds = array<i64: 1, 64>}, {pipeline_mode = #tpu.pipeline_mode<synchronous>, transform_indices = @transform_6, window_bounds = array<i64: 2, 8, 8>}, {transform_indices = @transform_7, window_bounds = array<i64: 4, 8, 32>}]} {
    %c0 = arith.constant 0 : index
    %c0_0 = arith.constant 0 : index
    %c0_1 = arith.constant 0 : index
    %0 = vector.load %arg1[%c0, %c0_0, %c0_1] : memref<4x8x32xf32, #tpu.memory_space<vmem>>, vector<4x8x32xf32>
    %c0_2 = arith.constant 0 : index
    %c0_3 = arith.constant 0 : index
    %1 = vector.load %arg3[%c0_2, %c0_3] : memref<1x32xf32, #tpu.memory_space<vmem>>, vector<1x32xf32>
    %c0_4 = arith.constant 0 : index
    %c0_5 = arith.constant 0 : index
    %2 = vector.load %arg4[%c0_4, %c0_5] : memref<1x32xf32, #tpu.memory_space<vmem>>, vector<1x32xf32>
    %cst = arith.constant dense<0.000000e+00> : vector<4x8xf32>
    %3 = vector.multi_reduction <add>, %0, %cst [2] : vector<4x8x32xf32> to vector<4x8xf32>
    %4 = vector.shape_cast %3 : vector<4x8xf32> to vector<4x8x1xf32>
    %cst_6 = arith.constant 3.200000e+01 : f32
    %5 = vector.broadcast %cst_6 : f32 to vector<4x8x1xf32>
    %6 = arith.divf %4, %5 : vector<4x8x1xf32>
    %7 = vector.broadcast %6 : vector<4x8x1xf32> to vector<4x8x32xf32>
    %8 = arith.subf %0, %7 : vector<4x8x32xf32>
    %9 = arith.mulf %8, %8 : vector<4x8x32xf32>
    %cst_7 = arith.constant dense<0.000000e+00> : vector<4x8xf32>
    %10 = vector.multi_reduction <add>, %9, %cst_7 [2] : vector<4x8x32xf32> to vector<4x8xf32>
    %11 = vector.shape_cast %10 : vector<4x8xf32> to vector<4x8x1xf32>
    %cst_8 = arith.constant 3.200000e+01 : f32
    %12 = vector.broadcast %cst_8 : f32 to vector<4x8x1xf32>
    %13 = arith.divf %11, %12 : vector<4x8x1xf32>
    %14 = vector.broadcast %6 : vector<4x8x1xf32> to vector<4x8x32xf32>
    %15 = arith.subf %0, %14 : vector<4x8x32xf32>
    %cst_9 = arith.constant 9.99999974E-6 : f32
    %16 = vector.broadcast %cst_9 : f32 to vector<4x8x1xf32>
    %17 = arith.addf %13, %16 : vector<4x8x1xf32>
    %18 = math.rsqrt %17 : vector<4x8x1xf32>
    %19 = vector.broadcast %18 : vector<4x8x1xf32> to vector<4x8x32xf32>
    %20 = arith.mulf %15, %19 : vector<4x8x32xf32>
    %21 = vector.shape_cast %1 : vector<1x32xf32> to vector<1x1x32xf32>
    %22 = vector.broadcast %21 : vector<1x1x32xf32> to vector<4x8x32xf32>
    %23 = arith.mulf %20, %22 : vector<4x8x32xf32>
    %24 = vector.shape_cast %2 : vector<1x32xf32> to vector<1x1x32xf32>
    %25 = vector.broadcast %24 : vector<1x1x32xf32> to vector<4x8x32xf32>
    %26 = arith.addf %23, %25 : vector<4x8x32xf32>
    %c0_10 = arith.constant 0 : index
    %c0_11 = arith.constant 0 : index
    %c0_12 = arith.constant 0 : index
    %27 = vector.load %arg2[%c0_10, %c0_11, %c0_12] : memref<4x8x32xf32, #tpu.memory_space<vmem>>, vector<4x8x32xf32>
    %c0_13 = arith.constant 0 : index
    %c0_14 = arith.constant 0 : index
    %28 = vector.load %arg3[%c0_13, %c0_14] : memref<1x32xf32, #tpu.memory_space<vmem>>, vector<1x32xf32>
    %c0_15 = arith.constant 0 : index
    %c0_16 = arith.constant 0 : index
    %29 = vector.load %arg4[%c0_15, %c0_16] : memref<1x32xf32, #tpu.memory_space<vmem>>, vector<1x32xf32>
    %cst_17 = arith.constant dense<0.000000e+00> : vector<4x8xf32>
    %30 = vector.multi_reduction <add>, %27, %cst_17 [2] : vector<4x8x32xf32> to vector<4x8xf32>
    %31 = vector.shape_cast %30 : vector<4x8xf32> to vector<4x8x1xf32>
    %cst_18 = arith.constant 3.200000e+01 : f32
    %32 = vector.broadcast %cst_18 : f32 to vector<4x8x1xf32>
    %33 = arith.divf %31, %32 : vector<4x8x1xf32>
    %34 = vector.broadcast %33 : vector<4x8x1xf32> to vector<4x8x32xf32>
    %35 = arith.subf %27, %34 : vector<4x8x32xf32>
    %36 = arith.mulf %35, %35 : vector<4x8x32xf32>
    %cst_19 = arith.constant dense<0.000000e+00> : vector<4x8xf32>
    %37 = vector.multi_reduction <add>, %36, %cst_19 [2] : vector<4x8x32xf32> to vector<4x8xf32>
    %38 = vector.shape_cast %37 : vector<4x8xf32> to vector<4x8x1xf32>
    %cst_20 = arith.constant 3.200000e+01 : f32
    %39 = vector.broadcast %cst_20 : f32 to vector<4x8x1xf32>
    %40 = arith.divf %38, %39 : vector<4x8x1xf32>
    %41 = vector.broadcast %33 : vector<4x8x1xf32> to vector<4x8x32xf32>
    %42 = arith.subf %27, %41 : vector<4x8x32xf32>
    %cst_21 = arith.constant 9.99999974E-6 : f32
    %43 = vector.broadcast %cst_21 : f32 to vector<4x8x1xf32>
    %44 = arith.addf %40, %43 : vector<4x8x1xf32>
    %45 = math.rsqrt %44 : vector<4x8x1xf32>
    %46 = vector.broadcast %45 : vector<4x8x1xf32> to vector<4x8x32xf32>
    %47 = arith.mulf %42, %46 : vector<4x8x32xf32>
    %48 = vector.shape_cast %28 : vector<1x32xf32> to vector<1x1x32xf32>
    %49 = vector.broadcast %48 : vector<1x1x32xf32> to vector<4x8x32xf32>
    %50 = arith.mulf %47, %49 : vector<4x8x32xf32>
    %51 = vector.shape_cast %29 : vector<1x32xf32> to vector<1x1x32xf32>
    %52 = vector.broadcast %51 : vector<1x1x32xf32> to vector<4x8x32xf32>
    %53 = arith.addf %50, %52 : vector<4x8x32xf32>
    %54 = vector.shape_cast %26 : vector<4x8x32xf32> to vector<32x32xf32>
    %55 = arith.truncf %54 : vector<32x32xf32> to vector<32x32xbf16>
    %c0_22 = arith.constant 0 : index
    %c0_23 = arith.constant 0 : index
    %56 = vector.load %arg5[%c0_22, %c0_23] : memref<32x64xbf16, #tpu.memory_space<vmem>>, vector<32x64xbf16>
    %cst_24 = arith.constant dense<0.000000e+00> : vector<32x64xf32>
    %57 = tpu.matmul %55, %56, %cst_24 {dimension_numbers = #tpu.dot_dimension_numbers<[1], [0], [0], [1], [0, 0, 1, 1], [], []>} : vector<32x32xbf16>, vector<32x64xbf16>, vector<32x64xf32> -> vector<32x64xf32>
    %c0_25 = arith.constant 0 : index
    %c0_26 = arith.constant 0 : index
    %58 = vector.load %arg6[%c0_25, %c0_26] : memref<1x64xf32, #tpu.memory_space<vmem>>, vector<1x64xf32>
    %59 = vector.broadcast %58 : vector<1x64xf32> to vector<32x64xf32>
    %60 = arith.addf %57, %59 : vector<32x64xf32>
    %61 = vector.shape_cast %60 : vector<32x64xf32> to vector<4x8x64xf32>
    %c0_27 = arith.constant 0 : index
    %c0_28 = arith.constant 0 : index
    %c0_29 = arith.constant 0 : index
    %62 = vector.load %arg7[%c0_27, %c0_28, %c0_29] : memref<2x8x8xf32, #tpu.memory_space<vmem>>, vector<2x8x8xf32>
    %63 = vector.extract_strided_slice %53 {offsets = [0, 0, 0], sizes = [4, 8, 16], strides = [1, 1, 1]} : vector<4x8x32xf32> to vector<4x8x16xf32>
    %64 = vector.extract_strided_slice %61 {offsets = [0, 0, 0], sizes = [4, 8, 16], strides = [1, 1, 1]} : vector<4x8x64xf32> to vector<4x8x16xf32>
    %65 = vector.extract_strided_slice %61 {offsets = [0, 0, 32], sizes = [4, 8, 16], strides = [1, 1, 1]} : vector<4x8x64xf32> to vector<4x8x16xf32>
    %66 = vector.extract_strided_slice %62 {offsets = [0, 0, 0], sizes = [1, 8, 8], strides = [1, 1, 1]} : vector<2x8x8xf32> to vector<1x8x8xf32>
    %67 = vector.shape_cast %66 : vector<1x8x8xf32> to vector<8x8xf32>
    %68 = arith.truncf %63 : vector<4x8x16xf32> to vector<4x8x16xbf16>
    %69 = arith.truncf %64 : vector<4x8x16xf32> to vector<4x8x16xbf16>
    "tpu.trace_start"() <{level = 10 : i32, message = "bnd,bmd->bnm"}> : () -> ()
    %cst_30 = arith.constant dense<0.000000e+00> : vector<4x8x8xf32>
    %70 = tpu.matmul %68, %69, %cst_30 {dimension_numbers = #tpu.dot_dimension_numbers<[2], [2], [1], [1], [0, 0, 0, 1, 1, 1], [0], [0]>} : vector<4x8x16xbf16>, vector<4x8x16xbf16>, vector<4x8x8xf32> -> vector<4x8x8xf32>
    "tpu.trace_stop"() : () -> ()
    %cst_31 = arith.constant 2.500000e-01 : f32
    %71 = vector.broadcast %cst_31 : f32 to vector<4x8x8xf32>
    %72 = arith.mulf %70, %71 : vector<4x8x8xf32>
    %73 = vector.shape_cast %67 : vector<8x8xf32> to vector<1x8x8xf32>
    %74 = vector.broadcast %73 : vector<1x8x8xf32> to vector<4x8x8xf32>
    %75 = arith.addf %72, %74 : vector<4x8x8xf32>
    %cst_32 = arith.constant dense<0xFF800000> : vector<4x8xf32>
    %76 = vector.multi_reduction <maximumf>, %75, %cst_32 [2] : vector<4x8x8xf32> to vector<4x8xf32>
    %77 = vector.shape_cast %76 : vector<4x8xf32> to vector<4x8x1xf32>
    %78 = vector.broadcast %77 : vector<4x8x1xf32> to vector<4x8x8xf32>
    %79 = arith.subf %75, %78 : vector<4x8x8xf32>
    %80 = math.exp %79 : vector<4x8x8xf32>
    %cst_33 = arith.constant dense<0.000000e+00> : vector<4x8xf32>
    %81 = vector.multi_reduction <add>, %80, %cst_33 [2] : vector<4x8x8xf32> to vector<4x8xf32>
    %82 = vector.shape_cast %81 : vector<4x8xf32> to vector<4x8x1xf32>
    %83 = tpu.reciprocal %82 {approx = true} : vector<4x8x1xf32> -> vector<4x8x1xf32>
    %84 = vector.broadcast %83 : vector<4x8x1xf32> to vector<4x8x8xf32>
    %85 = arith.mulf %80, %84 : vector<4x8x8xf32>
    %86 = arith.truncf %85 : vector<4x8x8xf32> to vector<4x8x8xbf16>
    %87 = arith.truncf %65 : vector<4x8x16xf32> to vector<4x8x16xbf16>
    "tpu.trace_start"() <{level = 10 : i32, message = "bnm,bmd->bnd"}> : () -> ()
    %cst_34 = arith.constant dense<0.000000e+00> : vector<4x8x16xf32>
    %88 = tpu.matmul %86, %87, %cst_34 {dimension_numbers = #tpu.dot_dimension_numbers<[2], [1], [1], [2], [0, 0, 0, 1, 1, 2], [0], [0]>} : vector<4x8x8xbf16>, vector<4x8x16xbf16>, vector<4x8x16xf32> -> vector<4x8x16xf32>
    "tpu.trace_stop"() : () -> ()
    %89 = vector.extract_strided_slice %53 {offsets = [0, 0, 16], sizes = [4, 8, 16], strides = [1, 1, 1]} : vector<4x8x32xf32> to vector<4x8x16xf32>
    %90 = vector.extract_strided_slice %61 {offsets = [0, 0, 16], sizes = [4, 8, 16], strides = [1, 1, 1]} : vector<4x8x64xf32> to vector<4x8x16xf32>
    %91 = vector.extract_strided_slice %61 {offsets = [0, 0, 48], sizes = [4, 8, 16], strides = [1, 1, 1]} : vector<4x8x64xf32> to vector<4x8x16xf32>
    %92 = vector.extract_strided_slice %62 {offsets = [1, 0, 0], sizes = [1, 8, 8], strides = [1, 1, 1]} : vector<2x8x8xf32> to vector<1x8x8xf32>
    %93 = vector.shape_cast %92 : vector<1x8x8xf32> to vector<8x8xf32>
    %94 = arith.truncf %89 : vector<4x8x16xf32> to vector<4x8x16xbf16>
    %95 = arith.truncf %90 : vector<4x8x16xf32> to vector<4x8x16xbf16>
    "tpu.trace_start"() <{level = 10 : i32, message = "bnd,bmd->bnm"}> : () -> ()
    %cst_35 = arith.constant dense<0.000000e+00> : vector<4x8x8xf32>
    %96 = tpu.matmul %94, %95, %cst_35 {dimension_numbers = #tpu.dot_dimension_numbers<[2], [2], [1], [1], [0, 0, 0, 1, 1, 1], [0], [0]>} : vector<4x8x16xbf16>, vector<4x8x16xbf16>, vector<4x8x8xf32> -> vector<4x8x8xf32>
    "tpu.trace_stop"() : () -> ()
    %cst_36 = arith.constant 2.500000e-01 : f32
    %97 = vector.broadcast %cst_36 : f32 to vector<4x8x8xf32>
    %98 = arith.mulf %96, %97 : vector<4x8x8xf32>
    %99 = vector.shape_cast %93 : vector<8x8xf32> to vector<1x8x8xf32>
    %100 = vector.broadcast %99 : vector<1x8x8xf32> to vector<4x8x8xf32>
    %101 = arith.addf %98, %100 : vector<4x8x8xf32>
    %cst_37 = arith.constant dense<0xFF800000> : vector<4x8xf32>
    %102 = vector.multi_reduction <maximumf>, %101, %cst_37 [2] : vector<4x8x8xf32> to vector<4x8xf32>
    %103 = vector.shape_cast %102 : vector<4x8xf32> to vector<4x8x1xf32>
    %104 = vector.broadcast %103 : vector<4x8x1xf32> to vector<4x8x8xf32>
    %105 = arith.subf %101, %104 : vector<4x8x8xf32>
    %106 = math.exp %105 : vector<4x8x8xf32>
    %cst_38 = arith.constant dense<0.000000e+00> : vector<4x8xf32>
    %107 = vector.multi_reduction <add>, %106, %cst_38 [2] : vector<4x8x8xf32> to vector<4x8xf32>
    %108 = vector.shape_cast %107 : vector<4x8xf32> to vector<4x8x1xf32>
    %109 = tpu.reciprocal %108 {approx = true} : vector<4x8x1xf32> -> vector<4x8x1xf32>
    %110 = vector.broadcast %109 : vector<4x8x1xf32> to vector<4x8x8xf32>
    %111 = arith.mulf %106, %110 : vector<4x8x8xf32>
    %112 = arith.truncf %111 : vector<4x8x8xf32> to vector<4x8x8xbf16>
    %113 = arith.truncf %91 : vector<4x8x16xf32> to vector<4x8x16xbf16>
    "tpu.trace_start"() <{level = 10 : i32, message = "bnm,bmd->bnd"}> : () -> ()
    %cst_39 = arith.constant dense<0.000000e+00> : vector<4x8x16xf32>
    %114 = tpu.matmul %112, %113, %cst_39 {dimension_numbers = #tpu.dot_dimension_numbers<[2], [1], [1], [2], [0, 0, 0, 1, 1, 2], [0], [0]>} : vector<4x8x8xbf16>, vector<4x8x16xbf16>, vector<4x8x16xf32> -> vector<4x8x16xf32>
    "tpu.trace_stop"() : () -> ()
    %115 = tpu.concatenate %88, %114 in 2 : vector<4x8x16xf32>, vector<4x8x16xf32> -> vector<4x8x32xf32>
    %116 = arith.truncf %115 : vector<4x8x32xf32> to vector<4x8x32xbf16>
    %c0_40 = arith.constant 0 : index
    %c0_41 = arith.constant 0 : index
    %c0_42 = arith.constant 0 : index
    %117 = vector.load %arg8[%c0_40, %c0_41, %c0_42] : memref<4x8x32xbf16, #tpu.memory_space<vmem>>, vector<4x8x32xbf16>
    tpu.vector_store %arg8[%c0_40, %c0_41, %c0_42], %116 {strides = array<i32>} : memref<4x8x32xbf16, #tpu.memory_space<vmem>>, vector<4x8x32xbf16>,
    return
  }
  func.func @transform_0(%arg0: i32) -> (i32, i32, i32) {
    %c0_i32 = arith.constant 0 : i32
    %c0_i32_0 = arith.constant 0 : i32
    %c0_i32_1 = arith.constant 0 : i32
    return %arg0, %c0_i32, %c0_i32_0 : i32, i32, i32
  }
  func.func @transform_1(%arg0: i32) -> (i32, i32, i32) {
    %c0_i32 = arith.constant 0 : i32
    %c0_i32_0 = arith.constant 0 : i32
    %c0_i32_1 = arith.constant 0 : i32
    return %arg0, %c0_i32, %c0_i32_0 : i32, i32, i32
  }
  func.func @transform_2(%arg0: i32) -> (i32, i32) {
    %c0_i32 = arith.constant 0 : i32
    %c0_i32_0 = arith.constant 0 : i32
    %c0_i32_1 = arith.constant 0 : i32
    return %c0_i32, %c0_i32_0 : i32, i32
  }
  func.func @transform_3(%arg0: i32) -> (i32, i32) {
    %c0_i32 = arith.constant 0 : i32
    %c0_i32_0 = arith.constant 0 : i32
    %c0_i32_1 = arith.constant 0 : i32
    return %c0_i32, %c0_i32_0 : i32, i32
  }
  func.func @transform_4(%arg0: i32) -> (i32, i32) {
    %c0_i32 = arith.constant 0 : i32
    %c0_i32_0 = arith.constant 0 : i32
    %c0_i32_1 = arith.constant 0 : i32
    return %c0_i32, %c0_i32_0 : i32, i32
  }
  func.func @transform_5(%arg0: i32) -> (i32, i32) {
    %c0_i32 = arith.constant 0 : i32
    %c0_i32_0 = arith.constant 0 : i32
    %c0_i32_1 = arith.constant 0 : i32
    return %c0_i32, %c0_i32_0 : i32, i32
  }
  func.func @transform_6(%arg0: i32) -> (i32, i32, i32) {
    %c0_i32 = arith.constant 0 : i32
    %c0_i32_0 = arith.constant 0 : i32
    %c0_i32_1 = arith.constant 0 : i32
    %c0_i32_2 = arith.constant 0 : i32
    return %c0_i32, %c0_i32_0, %c0_i32_1 : i32, i32, i32
  }
  func.func @transform_7(%arg0: i32) -> (i32, i32, i32) {
    %c0_i32 = arith.constant 0 : i32
    %c0_i32_0 = arith.constant 0 : i32
    %c0_i32_1 = arith.constant 0 : i32
    return %arg0, %c0_i32, %c0_i32_0 : i32, i32, i32
  }
}

module attributes {stable_mosaic.version = 11 : i64} {
  func.func @_proj_mlp_res2_kernel(%arg0: i32, %arg1: memref<32x32xbf16, #tpu.memory_space<vmem>>, %arg2: memref<32x32xbf16, #tpu.memory_space<vmem>>, %arg3: memref<1x32xf32, #tpu.memory_space<vmem>>, %arg4: memref<32x32xf32, #tpu.memory_space<vmem>>, %arg5: memref<32x32xf32, #tpu.memory_space<vmem>>, %arg6: memref<1x32xf32, #tpu.memory_space<vmem>>, %arg7: memref<1x32xf32, #tpu.memory_space<vmem>>, %arg8: memref<32x128xbf16, #tpu.memory_space<vmem>>, %arg9: memref<1x128xf32, #tpu.memory_space<vmem>>, %arg10: memref<128x32xbf16, #tpu.memory_space<vmem>>, %arg11: memref<1x32xf32, #tpu.memory_space<vmem>>, %arg12: memref<32x32xf32, #tpu.memory_space<vmem>>) attributes {dimension_semantics = [#tpu.dimension_semantics<parallel>], iteration_bounds = array<i64: 2>, scalar_prefetch = 0 : i64, scratch_operands = 0 : i64, tpu.core_type = #tpu.core_type<tc>, window_params = [{transform_indices = @transform_0, window_bounds = array<i64: 32, 32>}, {pipeline_mode = #tpu.pipeline_mode<synchronous>, transform_indices = @transform_1, window_bounds = array<i64: 32, 32>}, {pipeline_mode = #tpu.pipeline_mode<synchronous>, transform_indices = @transform_2, window_bounds = array<i64: 1, 32>}, {transform_indices = @transform_3, window_bounds = array<i64: 32, 32>}, {transform_indices = @transform_4, window_bounds = array<i64: 32, 32>}, {pipeline_mode = #tpu.pipeline_mode<synchronous>, transform_indices = @transform_5, window_bounds = array<i64: 1, 32>}, {pipeline_mode = #tpu.pipeline_mode<synchronous>, transform_indices = @transform_6, window_bounds = array<i64: 1, 32>}, {pipeline_mode = #tpu.pipeline_mode<synchronous>, transform_indices = @transform_7, window_bounds = array<i64: 32, 128>}, {pipeline_mode = #tpu.pipeline_mode<synchronous>, transform_indices = @transform_8, window_bounds = array<i64: 1, 128>}, {pipeline_mode = #tpu.pipeline_mode<synchronous>, transform_indices = @transform_9, window_bounds = array<i64: 128, 32>}, {pipeline_mode = #tpu.pipeline_mode<synchronous>, transform_indices = @transform_10, window_bounds = array<i64: 1, 32>}, {transform_indices = @transform_11, window_bounds = array<i64: 32, 32>}]} {
    %c0 = arith.constant 0 : index
    %c0_0 = arith.constant 0 : index
    %0 = vector.load %arg4[%c0, %c0_0] : memref<32x32xf32, #tpu.memory_space<vmem>>, vector<32x32xf32>
    %c0_1 = arith.constant 0 : index
    %c0_2 = arith.constant 0 : index
    %1 = vector.load %arg5[%c0_1, %c0_2] : memref<32x32xf32, #tpu.memory_space<vmem>>, vector<32x32xf32>
    %2 = arith.addf %0, %1 : vector<32x32xf32>
    %c0_3 = arith.constant 0 : index
    %c0_4 = arith.constant 0 : index
    %3 = vector.load %arg1[%c0_3, %c0_4] : memref<32x32xbf16, #tpu.memory_space<vmem>>, vector<32x32xbf16>
    %c0_5 = arith.constant 0 : index
    %c0_6 = arith.constant 0 : index
    %4 = vector.load %arg2[%c0_5, %c0_6] : memref<32x32xbf16, #tpu.memory_space<vmem>>, vector<32x32xbf16>
    %cst = arith.constant dense<0.000000e+00> : vector<32x32xf32>
    %5 = tpu.matmul %3, %4, %cst {dimension_numbers = #tpu.dot_dimension_numbers<[1], [0], [0], [1], [0, 0, 1, 1], [], []>} : vector<32x32xbf16>, vector<32x32xbf16>, vector<32x32xf32> -> vector<32x32xf32>
    %c0_7 = arith.constant 0 : index
    %c0_8 = arith.constant 0 : index
    %6 = vector.load %arg3[%c0_7, %c0_8] : memref<1x32xf32, #tpu.memory_space<vmem>>, vector<1x32xf32>
    %7 = vector.broadcast %6 : vector<1x32xf32> to vector<32x32xf32>
    %8 = arith.addf %5, %7 : vector<32x32xf32>
    %9 = arith.addf %8, %2 : vector<32x32xf32>
    %c0_9 = arith.constant 0 : index
    %c0_10 = arith.constant 0 : index
    %10 = vector.load %arg6[%c0_9, %c0_10] : memref<1x32xf32, #tpu.memory_space<vmem>>, vector<1x32xf32>
    %c0_11 = arith.constant 0 : index
    %c0_12 = arith.constant 0 : index
    %11 = vector.load %arg7[%c0_11, %c0_12] : memref<1x32xf32, #tpu.memory_space<vmem>>, vector<1x32xf32>
    %cst_13 = arith.constant dense<0.000000e+00> : vector<32xf32>
    %12 = vector.multi_reduction <add>, %9, %cst_13 [1] : vector<32x32xf32> to vector<32xf32>
    %13 = vector.shape_cast %12 : vector<32xf32> to vector<32x1xf32>
    %cst_14 = arith.constant 3.200000e+01 : f32
    %14 = vector.broadcast %cst_14 : f32 to vector<32x1xf32>
    %15 = arith.divf %13, %14 : vector<32x1xf32>
    %16 = vector.broadcast %15 : vector<32x1xf32> to vector<32x32xf32>
    %17 = arith.subf %9, %16 : vector<32x32xf32>
    %18 = arith.mulf %17, %17 : vector<32x32xf32>
    %cst_15 = arith.constant dense<0.000000e+00> : vector<32xf32>
    %19 = vector.multi_reduction <add>, %18, %cst_15 [1] : vector<32x32xf32> to vector<32xf32>
    %20 = vector.shape_cast %19 : vector<32xf32> to vector<32x1xf32>
    %cst_16 = arith.constant 3.200000e+01 : f32
    %21 = vector.broadcast %cst_16 : f32 to vector<32x1xf32>
    %22 = arith.divf %20, %21 : vector<32x1xf32>
    %23 = vector.broadcast %15 : vector<32x1xf32> to vector<32x32xf32>
    %24 = arith.subf %9, %23 : vector<32x32xf32>
    %cst_17 = arith.constant 9.99999974E-6 : f32
    %25 = vector.broadcast %cst_17 : f32 to vector<32x1xf32>
    %26 = arith.addf %22, %25 : vector<32x1xf32>
    %27 = math.rsqrt %26 : vector<32x1xf32>
    %28 = vector.broadcast %27 : vector<32x1xf32> to vector<32x32xf32>
    %29 = arith.mulf %24, %28 : vector<32x32xf32>
    %30 = vector.broadcast %10 : vector<1x32xf32> to vector<32x32xf32>
    %31 = arith.mulf %29, %30 : vector<32x32xf32>
    %32 = vector.broadcast %11 : vector<1x32xf32> to vector<32x32xf32>
    %33 = arith.addf %31, %32 : vector<32x32xf32>
    %34 = arith.truncf %33 : vector<32x32xf32> to vector<32x32xbf16>
    %c0_18 = arith.constant 0 : index
    %c0_19 = arith.constant 0 : index
    %35 = vector.load %arg8[%c0_18, %c0_19] : memref<32x128xbf16, #tpu.memory_space<vmem>>, vector<32x128xbf16>
    %cst_20 = arith.constant dense<0.000000e+00> : vector<32x128xf32>
    %36 = tpu.matmul %34, %35, %cst_20 {dimension_numbers = #tpu.dot_dimension_numbers<[1], [0], [0], [1], [0, 0, 1, 1], [], []>} : vector<32x32xbf16>, vector<32x128xbf16>, vector<32x128xf32> -> vector<32x128xf32>
    %c0_21 = arith.constant 0 : index
    %c0_22 = arith.constant 0 : index
    %37 = vector.load %arg9[%c0_21, %c0_22] : memref<1x128xf32, #tpu.memory_space<vmem>>, vector<1x128xf32>
    %38 = vector.broadcast %37 : vector<1x128xf32> to vector<32x128xf32>
    %39 = arith.addf %36, %38 : vector<32x128xf32>
    %cst_23 = arith.constant 5.000000e-01 : f32
    %40 = vector.broadcast %cst_23 : f32 to vector<32x128xf32>
    %41 = arith.mulf %40, %39 : vector<32x128xf32>
    %cst_24 = arith.constant 4.471500e-02 : f32
    %42 = vector.broadcast %cst_24 : f32 to vector<32x128xf32>
    %43 = arith.mulf %42, %39 : vector<32x128xf32>
    %44 = arith.mulf %43, %39 : vector<32x128xf32>
    %45 = arith.mulf %44, %39 : vector<32x128xf32>
    %46 = arith.addf %39, %45 : vector<32x128xf32>
    %cst_25 = arith.constant 0.797884583 : f32
    %47 = vector.broadcast %cst_25 : f32 to vector<32x128xf32>
    %48 = arith.mulf %47, %46 : vector<32x128xf32>
    %49 = math.tanh %48 : vector<32x128xf32>
    %cst_26 = arith.constant 1.000000e+00 : f32
    %50 = vector.broadcast %cst_26 : f32 to vector<32x128xf32>
    %51 = arith.addf %50, %49 : vector<32x128xf32>
    %52 = arith.mulf %41, %51 : vector<32x128xf32>
    %53 = arith.truncf %52 : vector<32x128xf32> to vector<32x128xbf16>
    %c0_27 = arith.constant 0 : index
    %c0_28 = arith.constant 0 : index
    %54 = vector.load %arg10[%c0_27, %c0_28] : memref<128x32xbf16, #tpu.memory_space<vmem>>, vector<128x32xbf16>
    %cst_29 = arith.constant dense<0.000000e+00> : vector<32x32xf32>
    %55 = tpu.matmul %53, %54, %cst_29 {dimension_numbers = #tpu.dot_dimension_numbers<[1], [0], [0], [1], [0, 0, 1, 1], [], []>} : vector<32x128xbf16>, vector<128x32xbf16>, vector<32x32xf32> -> vector<32x32xf32>
    %c0_30 = arith.constant 0 : index
    %c0_31 = arith.constant 0 : index
    %56 = vector.load %arg11[%c0_30, %c0_31] : memref<1x32xf32, #tpu.memory_space<vmem>>, vector<1x32xf32>
    %57 = vector.broadcast %56 : vector<1x32xf32> to vector<32x32xf32>
    %58 = arith.addf %55, %57 : vector<32x32xf32>
    %59 = arith.addf %9, %58 : vector<32x32xf32>
    %c0_32 = arith.constant 0 : index
    %c0_33 = arith.constant 0 : index
    %60 = vector.load %arg12[%c0_32, %c0_33] : memref<32x32xf32, #tpu.memory_space<vmem>>, vector<32x32xf32>
    tpu.vector_store %arg12[%c0_32, %c0_33], %59 {strides = array<i32>} : memref<32x32xf32, #tpu.memory_space<vmem>>, vector<32x32xf32>,
    return
  }
  func.func @transform_0(%arg0: i32) -> (i32, i32) {
    %c0_i32 = arith.constant 0 : i32
    %c0_i32_0 = arith.constant 0 : i32
    return %arg0, %c0_i32 : i32, i32
  }
  func.func @transform_1(%arg0: i32) -> (i32, i32) {
    %c0_i32 = arith.constant 0 : i32
    %c0_i32_0 = arith.constant 0 : i32
    %c0_i32_1 = arith.constant 0 : i32
    return %c0_i32, %c0_i32_0 : i32, i32
  }
  func.func @transform_2(%arg0: i32) -> (i32, i32) {
    %c0_i32 = arith.constant 0 : i32
    %c0_i32_0 = arith.constant 0 : i32
    %c0_i32_1 = arith.constant 0 : i32
    return %c0_i32, %c0_i32_0 : i32, i32
  }
  func.func @transform_3(%arg0: i32) -> (i32, i32) {
    %c0_i32 = arith.constant 0 : i32
    %c0_i32_0 = arith.constant 0 : i32
    return %arg0, %c0_i32 : i32, i32
  }
  func.func @transform_4(%arg0: i32) -> (i32, i32) {
    %c0_i32 = arith.constant 0 : i32
    %c0_i32_0 = arith.constant 0 : i32
    return %arg0, %c0_i32 : i32, i32
  }
  func.func @transform_5(%arg0: i32) -> (i32, i32) {
    %c0_i32 = arith.constant 0 : i32
    %c0_i32_0 = arith.constant 0 : i32
    %c0_i32_1 = arith.constant 0 : i32
    return %c0_i32, %c0_i32_0 : i32, i32
  }
  func.func @transform_6(%arg0: i32) -> (i32, i32) {
    %c0_i32 = arith.constant 0 : i32
    %c0_i32_0 = arith.constant 0 : i32
    %c0_i32_1 = arith.constant 0 : i32
    return %c0_i32, %c0_i32_0 : i32, i32
  }
  func.func @transform_7(%arg0: i32) -> (i32, i32) {
    %c0_i32 = arith.constant 0 : i32
    %c0_i32_0 = arith.constant 0 : i32
    %c0_i32_1 = arith.constant 0 : i32
    return %c0_i32, %c0_i32_0 : i32, i32
  }
  func.func @transform_8(%arg0: i32) -> (i32, i32) {
    %c0_i32 = arith.constant 0 : i32
    %c0_i32_0 = arith.constant 0 : i32
    %c0_i32_1 = arith.constant 0 : i32
    return %c0_i32, %c0_i32_0 : i32, i32
  }
  func.func @transform_9(%arg0: i32) -> (i32, i32) {
    %c0_i32 = arith.constant 0 : i32
    %c0_i32_0 = arith.constant 0 : i32
    %c0_i32_1 = arith.constant 0 : i32
    return %c0_i32, %c0_i32_0 : i32, i32
  }
  func.func @transform_10(%arg0: i32) -> (i32, i32) {
    %c0_i32 = arith.constant 0 : i32
    %c0_i32_0 = arith.constant 0 : i32
    %c0_i32_1 = arith.constant 0 : i32
    return %c0_i32, %c0_i32_0 : i32, i32
  }
  func.func @transform_11(%arg0: i32) -> (i32, i32) {
    %c0_i32 = arith.constant 0 : i32
    %c0_i32_0 = arith.constant 0 : i32
    return %arg0, %c0_i32 : i32, i32
  }
}

module attributes {stable_mosaic.version = 11 : i64} {
  func.func @_attn_qkv_mask_kernel(%arg0: i32, %arg1: memref<4x8x32xf32, #tpu.memory_space<vmem>>, %arg2: memref<1x32xf32, #tpu.memory_space<vmem>>, %arg3: memref<1x32xf32, #tpu.memory_space<vmem>>, %arg4: memref<32x96xbf16, #tpu.memory_space<vmem>>, %arg5: memref<1x96xf32, #tpu.memory_space<vmem>>, %arg6: memref<2x8x8xf32, #tpu.memory_space<vmem>>, %arg7: memref<4x8x8xf32, #tpu.memory_space<vmem>>, %arg8: memref<4x8x32xbf16, #tpu.memory_space<vmem>>) attributes {dimension_semantics = [#tpu.dimension_semantics<parallel>], iteration_bounds = array<i64: 2>, scalar_prefetch = 0 : i64, scratch_operands = 0 : i64, tpu.core_type = #tpu.core_type<tc>, window_params = [{transform_indices = @transform_0, window_bounds = array<i64: 4, 8, 32>}, {pipeline_mode = #tpu.pipeline_mode<synchronous>, transform_indices = @transform_1, window_bounds = array<i64: 1, 32>}, {pipeline_mode = #tpu.pipeline_mode<synchronous>, transform_indices = @transform_2, window_bounds = array<i64: 1, 32>}, {pipeline_mode = #tpu.pipeline_mode<synchronous>, transform_indices = @transform_3, window_bounds = array<i64: 32, 96>}, {pipeline_mode = #tpu.pipeline_mode<synchronous>, transform_indices = @transform_4, window_bounds = array<i64: 1, 96>}, {pipeline_mode = #tpu.pipeline_mode<synchronous>, transform_indices = @transform_5, window_bounds = array<i64: 2, 8, 8>}, {transform_indices = @transform_6, window_bounds = array<i64: 4, 8, 8>}, {transform_indices = @transform_7, window_bounds = array<i64: 4, 8, 32>}]} {
    %c0 = arith.constant 0 : index
    %c0_0 = arith.constant 0 : index
    %c0_1 = arith.constant 0 : index
    %0 = vector.load %arg7[%c0, %c0_0, %c0_1] : memref<4x8x8xf32, #tpu.memory_space<vmem>>, vector<4x8x8xf32>
    %c0_2 = arith.constant 0 : index
    %c0_3 = arith.constant 0 : index
    %c0_4 = arith.constant 0 : index
    %1 = vector.load %arg1[%c0_2, %c0_3, %c0_4] : memref<4x8x32xf32, #tpu.memory_space<vmem>>, vector<4x8x32xf32>
    %c0_5 = arith.constant 0 : index
    %c0_6 = arith.constant 0 : index
    %2 = vector.load %arg2[%c0_5, %c0_6] : memref<1x32xf32, #tpu.memory_space<vmem>>, vector<1x32xf32>
    %c0_7 = arith.constant 0 : index
    %c0_8 = arith.constant 0 : index
    %3 = vector.load %arg3[%c0_7, %c0_8] : memref<1x32xf32, #tpu.memory_space<vmem>>, vector<1x32xf32>
    %cst = arith.constant dense<0.000000e+00> : vector<4x8xf32>
    %4 = vector.multi_reduction <add>, %1, %cst [2] : vector<4x8x32xf32> to vector<4x8xf32>
    %5 = vector.shape_cast %4 : vector<4x8xf32> to vector<4x8x1xf32>
    %cst_9 = arith.constant 3.200000e+01 : f32
    %6 = vector.broadcast %cst_9 : f32 to vector<4x8x1xf32>
    %7 = arith.divf %5, %6 : vector<4x8x1xf32>
    %8 = vector.broadcast %7 : vector<4x8x1xf32> to vector<4x8x32xf32>
    %9 = arith.subf %1, %8 : vector<4x8x32xf32>
    %10 = arith.mulf %9, %9 : vector<4x8x32xf32>
    %cst_10 = arith.constant dense<0.000000e+00> : vector<4x8xf32>
    %11 = vector.multi_reduction <add>, %10, %cst_10 [2] : vector<4x8x32xf32> to vector<4x8xf32>
    %12 = vector.shape_cast %11 : vector<4x8xf32> to vector<4x8x1xf32>
    %cst_11 = arith.constant 3.200000e+01 : f32
    %13 = vector.broadcast %cst_11 : f32 to vector<4x8x1xf32>
    %14 = arith.divf %12, %13 : vector<4x8x1xf32>
    %15 = vector.broadcast %7 : vector<4x8x1xf32> to vector<4x8x32xf32>
    %16 = arith.subf %1, %15 : vector<4x8x32xf32>
    %cst_12 = arith.constant 9.99999974E-6 : f32
    %17 = vector.broadcast %cst_12 : f32 to vector<4x8x1xf32>
    %18 = arith.addf %14, %17 : vector<4x8x1xf32>
    %19 = math.rsqrt %18 : vector<4x8x1xf32>
    %20 = vector.broadcast %19 : vector<4x8x1xf32> to vector<4x8x32xf32>
    %21 = arith.mulf %16, %20 : vector<4x8x32xf32>
    %22 = vector.shape_cast %2 : vector<1x32xf32> to vector<1x1x32xf32>
    %23 = vector.broadcast %22 : vector<1x1x32xf32> to vector<4x8x32xf32>
    %24 = arith.mulf %21, %23 : vector<4x8x32xf32>
    %25 = vector.shape_cast %3 : vector<1x32xf32> to vector<1x1x32xf32>
    %26 = vector.broadcast %25 : vector<1x1x32xf32> to vector<4x8x32xf32>
    %27 = arith.addf %24, %26 : vector<4x8x32xf32>
    %28 = vector.shape_cast %27 : vector<4x8x32xf32> to vector<32x32xf32>
    %29 = arith.truncf %28 : vector<32x32xf32> to vector<32x32xbf16>
    %c0_13 = arith.constant 0 : index
    %c0_14 = arith.constant 0 : index
    %30 = vector.load %arg4[%c0_13, %c0_14] : memref<32x96xbf16, #tpu.memory_space<vmem>>, vector<32x96xbf16>
    %cst_15 = arith.constant dense<0.000000e+00> : vector<32x96xf32>
    %31 = tpu.matmul %29, %30, %cst_15 {dimension_numbers = #tpu.dot_dimension_numbers<[1], [0], [0], [1], [0, 0, 1, 1], [], []>} : vector<32x32xbf16>, vector<32x96xbf16>, vector<32x96xf32> -> vector<32x96xf32>
    %c0_16 = arith.constant 0 : index
    %c0_17 = arith.constant 0 : index
    %32 = vector.load %arg5[%c0_16, %c0_17] : memref<1x96xf32, #tpu.memory_space<vmem>>, vector<1x96xf32>
    %33 = vector.broadcast %32 : vector<1x96xf32> to vector<32x96xf32>
    %34 = arith.addf %31, %33 : vector<32x96xf32>
    %35 = vector.shape_cast %34 : vector<32x96xf32> to vector<4x8x96xf32>
    %c0_18 = arith.constant 0 : index
    %c0_19 = arith.constant 0 : index
    %c0_20 = arith.constant 0 : index
    %36 = vector.load %arg6[%c0_18, %c0_19, %c0_20] : memref<2x8x8xf32, #tpu.memory_space<vmem>>, vector<2x8x8xf32>
    %37 = vector.extract_strided_slice %35 {offsets = [0, 0, 0], sizes = [4, 8, 16], strides = [1, 1, 1]} : vector<4x8x96xf32> to vector<4x8x16xf32>
    %38 = vector.extract_strided_slice %35 {offsets = [0, 0, 32], sizes = [4, 8, 16], strides = [1, 1, 1]} : vector<4x8x96xf32> to vector<4x8x16xf32>
    %39 = vector.extract_strided_slice %35 {offsets = [0, 0, 64], sizes = [4, 8, 16], strides = [1, 1, 1]} : vector<4x8x96xf32> to vector<4x8x16xf32>
    %40 = vector.extract_strided_slice %36 {offsets = [0, 0, 0], sizes = [1, 8, 8], strides = [1, 1, 1]} : vector<2x8x8xf32> to vector<1x8x8xf32>
    %41 = vector.shape_cast %40 : vector<1x8x8xf32> to vector<8x8xf32>
    %42 = arith.truncf %37 : vector<4x8x16xf32> to vector<4x8x16xbf16>
    %43 = arith.truncf %38 : vector<4x8x16xf32> to vector<4x8x16xbf16>
    "tpu.trace_start"() <{level = 10 : i32, message = "bnd,bmd->bnm"}> : () -> ()
    %cst_21 = arith.constant dense<0.000000e+00> : vector<4x8x8xf32>
    %44 = tpu.matmul %42, %43, %cst_21 {dimension_numbers = #tpu.dot_dimension_numbers<[2], [2], [1], [1], [0, 0, 0, 1, 1, 1], [0], [0]>} : vector<4x8x16xbf16>, vector<4x8x16xbf16>, vector<4x8x8xf32> -> vector<4x8x8xf32>
    "tpu.trace_stop"() : () -> ()
    %cst_22 = arith.constant 2.500000e-01 : f32
    %45 = vector.broadcast %cst_22 : f32 to vector<4x8x8xf32>
    %46 = arith.mulf %44, %45 : vector<4x8x8xf32>
    %47 = vector.shape_cast %41 : vector<8x8xf32> to vector<1x8x8xf32>
    %48 = vector.broadcast %47 : vector<1x8x8xf32> to vector<4x8x8xf32>
    %49 = arith.addf %46, %48 : vector<4x8x8xf32>
    %50 = arith.addf %49, %0 : vector<4x8x8xf32>
    %cst_23 = arith.constant dense<0xFF800000> : vector<4x8xf32>
    %51 = vector.multi_reduction <maximumf>, %50, %cst_23 [2] : vector<4x8x8xf32> to vector<4x8xf32>
    %52 = vector.shape_cast %51 : vector<4x8xf32> to vector<4x8x1xf32>
    %53 = vector.broadcast %52 : vector<4x8x1xf32> to vector<4x8x8xf32>
    %54 = arith.subf %50, %53 : vector<4x8x8xf32>
    %55 = math.exp %54 : vector<4x8x8xf32>
    %cst_24 = arith.constant dense<0.000000e+00> : vector<4x8xf32>
    %56 = vector.multi_reduction <add>, %55, %cst_24 [2] : vector<4x8x8xf32> to vector<4x8xf32>
    %57 = vector.shape_cast %56 : vector<4x8xf32> to vector<4x8x1xf32>
    %58 = tpu.reciprocal %57 {approx = true} : vector<4x8x1xf32> -> vector<4x8x1xf32>
    %59 = vector.broadcast %58 : vector<4x8x1xf32> to vector<4x8x8xf32>
    %60 = arith.mulf %55, %59 : vector<4x8x8xf32>
    %61 = arith.truncf %60 : vector<4x8x8xf32> to vector<4x8x8xbf16>
    %62 = arith.truncf %39 : vector<4x8x16xf32> to vector<4x8x16xbf16>
    "tpu.trace_start"() <{level = 10 : i32, message = "bnm,bmd->bnd"}> : () -> ()
    %cst_25 = arith.constant dense<0.000000e+00> : vector<4x8x16xf32>
    %63 = tpu.matmul %61, %62, %cst_25 {dimension_numbers = #tpu.dot_dimension_numbers<[2], [1], [1], [2], [0, 0, 0, 1, 1, 2], [0], [0]>} : vector<4x8x8xbf16>, vector<4x8x16xbf16>, vector<4x8x16xf32> -> vector<4x8x16xf32>
    "tpu.trace_stop"() : () -> ()
    %64 = vector.extract_strided_slice %35 {offsets = [0, 0, 16], sizes = [4, 8, 16], strides = [1, 1, 1]} : vector<4x8x96xf32> to vector<4x8x16xf32>
    %65 = vector.extract_strided_slice %35 {offsets = [0, 0, 48], sizes = [4, 8, 16], strides = [1, 1, 1]} : vector<4x8x96xf32> to vector<4x8x16xf32>
    %66 = vector.extract_strided_slice %35 {offsets = [0, 0, 80], sizes = [4, 8, 16], strides = [1, 1, 1]} : vector<4x8x96xf32> to vector<4x8x16xf32>
    %67 = vector.extract_strided_slice %36 {offsets = [1, 0, 0], sizes = [1, 8, 8], strides = [1, 1, 1]} : vector<2x8x8xf32> to vector<1x8x8xf32>
    %68 = vector.shape_cast %67 : vector<1x8x8xf32> to vector<8x8xf32>
    %69 = arith.truncf %64 : vector<4x8x16xf32> to vector<4x8x16xbf16>
    %70 = arith.truncf %65 : vector<4x8x16xf32> to vector<4x8x16xbf16>
    "tpu.trace_start"() <{level = 10 : i32, message = "bnd,bmd->bnm"}> : () -> ()
    %cst_26 = arith.constant dense<0.000000e+00> : vector<4x8x8xf32>
    %71 = tpu.matmul %69, %70, %cst_26 {dimension_numbers = #tpu.dot_dimension_numbers<[2], [2], [1], [1], [0, 0, 0, 1, 1, 1], [0], [0]>} : vector<4x8x16xbf16>, vector<4x8x16xbf16>, vector<4x8x8xf32> -> vector<4x8x8xf32>
    "tpu.trace_stop"() : () -> ()
    %cst_27 = arith.constant 2.500000e-01 : f32
    %72 = vector.broadcast %cst_27 : f32 to vector<4x8x8xf32>
    %73 = arith.mulf %71, %72 : vector<4x8x8xf32>
    %74 = vector.shape_cast %68 : vector<8x8xf32> to vector<1x8x8xf32>
    %75 = vector.broadcast %74 : vector<1x8x8xf32> to vector<4x8x8xf32>
    %76 = arith.addf %73, %75 : vector<4x8x8xf32>
    %77 = arith.addf %76, %0 : vector<4x8x8xf32>
    %cst_28 = arith.constant dense<0xFF800000> : vector<4x8xf32>
    %78 = vector.multi_reduction <maximumf>, %77, %cst_28 [2] : vector<4x8x8xf32> to vector<4x8xf32>
    %79 = vector.shape_cast %78 : vector<4x8xf32> to vector<4x8x1xf32>
    %80 = vector.broadcast %79 : vector<4x8x1xf32> to vector<4x8x8xf32>
    %81 = arith.subf %77, %80 : vector<4x8x8xf32>
    %82 = math.exp %81 : vector<4x8x8xf32>
    %cst_29 = arith.constant dense<0.000000e+00> : vector<4x8xf32>
    %83 = vector.multi_reduction <add>, %82, %cst_29 [2] : vector<4x8x8xf32> to vector<4x8xf32>
    %84 = vector.shape_cast %83 : vector<4x8xf32> to vector<4x8x1xf32>
    %85 = tpu.reciprocal %84 {approx = true} : vector<4x8x1xf32> -> vector<4x8x1xf32>
    %86 = vector.broadcast %85 : vector<4x8x1xf32> to vector<4x8x8xf32>
    %87 = arith.mulf %82, %86 : vector<4x8x8xf32>
    %88 = arith.truncf %87 : vector<4x8x8xf32> to vector<4x8x8xbf16>
    %89 = arith.truncf %66 : vector<4x8x16xf32> to vector<4x8x16xbf16>
    "tpu.trace_start"() <{level = 10 : i32, message = "bnm,bmd->bnd"}> : () -> ()
    %cst_30 = arith.constant dense<0.000000e+00> : vector<4x8x16xf32>
    %90 = tpu.matmul %88, %89, %cst_30 {dimension_numbers = #tpu.dot_dimension_numbers<[2], [1], [1], [2], [0, 0, 0, 1, 1, 2], [0], [0]>} : vector<4x8x8xbf16>, vector<4x8x16xbf16>, vector<4x8x16xf32> -> vector<4x8x16xf32>
    "tpu.trace_stop"() : () -> ()
    %91 = tpu.concatenate %63, %90 in 2 : vector<4x8x16xf32>, vector<4x8x16xf32> -> vector<4x8x32xf32>
    %92 = arith.truncf %91 : vector<4x8x32xf32> to vector<4x8x32xbf16>
    %c0_31 = arith.constant 0 : index
    %c0_32 = arith.constant 0 : index
    %c0_33 = arith.constant 0 : index
    %93 = vector.load %arg8[%c0_31, %c0_32, %c0_33] : memref<4x8x32xbf16, #tpu.memory_space<vmem>>, vector<4x8x32xbf16>
    tpu.vector_store %arg8[%c0_31, %c0_32, %c0_33], %92 {strides = array<i32>} : memref<4x8x32xbf16, #tpu.memory_space<vmem>>, vector<4x8x32xbf16>,
    return
  }
  func.func @transform_0(%arg0: i32) -> (i32, i32, i32) {
    %c0_i32 = arith.constant 0 : i32
    %c0_i32_0 = arith.constant 0 : i32
    %c0_i32_1 = arith.constant 0 : i32
    return %arg0, %c0_i32, %c0_i32_0 : i32, i32, i32
  }
  func.func @transform_1(%arg0: i32) -> (i32, i32) {
    %c0_i32 = arith.constant 0 : i32
    %c0_i32_0 = arith.constant 0 : i32
    %c0_i32_1 = arith.constant 0 : i32
    return %c0_i32, %c0_i32_0 : i32, i32
  }
  func.func @transform_2(%arg0: i32) -> (i32, i32) {
    %c0_i32 = arith.constant 0 : i32
    %c0_i32_0 = arith.constant 0 : i32
    %c0_i32_1 = arith.constant 0 : i32
    return %c0_i32, %c0_i32_0 : i32, i32
  }
  func.func @transform_3(%arg0: i32) -> (i32, i32) {
    %c0_i32 = arith.constant 0 : i32
    %c0_i32_0 = arith.constant 0 : i32
    %c0_i32_1 = arith.constant 0 : i32
    return %c0_i32, %c0_i32_0 : i32, i32
  }
  func.func @transform_4(%arg0: i32) -> (i32, i32) {
    %c0_i32 = arith.constant 0 : i32
    %c0_i32_0 = arith.constant 0 : i32
    %c0_i32_1 = arith.constant 0 : i32
    return %c0_i32, %c0_i32_0 : i32, i32
  }
  func.func @transform_5(%arg0: i32) -> (i32, i32, i32) {
    %c0_i32 = arith.constant 0 : i32
    %c0_i32_0 = arith.constant 0 : i32
    %c0_i32_1 = arith.constant 0 : i32
    %c0_i32_2 = arith.constant 0 : i32
    return %c0_i32, %c0_i32_0, %c0_i32_1 : i32, i32, i32
  }
  func.func @transform_6(%arg0: i32) -> (i32, i32, i32) {
    %c2_i32 = arith.constant 2 : i32
    %c0_i32 = arith.constant 0 : i32
    %0 = arith.cmpi eq, %c2_i32, %c0_i32 : i32
    %c1_i32 = arith.constant 1 : i32
    %1 = arith.select %0, %c1_i32, %c2_i32 : i32
    %2 = arith.remsi %arg0, %1 : i32
    %c0_i32_0 = arith.constant 0 : i32
    %3 = arith.cmpi ne, %2, %c0_i32_0 : i32
    %c0_i32_1 = arith.constant 0 : i32
    %4 = arith.cmpi slt, %2, %c0_i32_1 : i32
    %c0_i32_2 = arith.constant 0 : i32
    %5 = arith.cmpi slt, %1, %c0_i32_2 : i32
    %6 = arith.xori %4, %5 : i1
    %7 = arith.andi %6, %3 : i1
    %8 = arith.addi %2, %1 : i32
    %9 = arith.select %7, %8, %2 : i32
    %c0_i32_3 = arith.constant 0 : i32
    %c0_i32_4 = arith.constant 0 : i32
    %c0_i32_5 = arith.constant 0 : i32
    return %9, %c0_i32_3, %c0_i32_4 : i32, i32, i32
  }
  func.func @transform_7(%arg0: i32) -> (i32, i32, i32) {
    %c0_i32 = arith.constant 0 : i32
    %c0_i32_0 = arith.constant 0 : i32
    %c0_i32_1 = arith.constant 0 : i32
    return %arg0, %c0_i32, %c0_i32_0 : i32, i32, i32
  }
}

module attributes {stable_mosaic.version = 11 : i64} {
  func.func @_proj_mlp_res1_kernel(%arg0: i32, %arg1: memref<32x32xbf16, #tpu.memory_space<vmem>>, %arg2: memref<32x32xbf16, #tpu.memory_space<vmem>>, %arg3: memref<1x32xf32, #tpu.memory_space<vmem>>, %arg4: memref<32x32xf32, #tpu.memory_space<vmem>>, %arg5: memref<1x32xf32, #tpu.memory_space<vmem>>, %arg6: memref<1x32xf32, #tpu.memory_space<vmem>>, %arg7: memref<32x128xbf16, #tpu.memory_space<vmem>>, %arg8: memref<1x128xf32, #tpu.memory_space<vmem>>, %arg9: memref<128x32xbf16, #tpu.memory_space<vmem>>, %arg10: memref<1x32xf32, #tpu.memory_space<vmem>>, %arg11: memref<32x32xf32, #tpu.memory_space<vmem>>) attributes {dimension_semantics = [#tpu.dimension_semantics<parallel>], iteration_bounds = array<i64: 2>, scalar_prefetch = 0 : i64, scratch_operands = 0 : i64, tpu.core_type = #tpu.core_type<tc>, window_params = [{transform_indices = @transform_0, window_bounds = array<i64: 32, 32>}, {pipeline_mode = #tpu.pipeline_mode<synchronous>, transform_indices = @transform_1, window_bounds = array<i64: 32, 32>}, {pipeline_mode = #tpu.pipeline_mode<synchronous>, transform_indices = @transform_2, window_bounds = array<i64: 1, 32>}, {transform_indices = @transform_3, window_bounds = array<i64: 32, 32>}, {pipeline_mode = #tpu.pipeline_mode<synchronous>, transform_indices = @transform_4, window_bounds = array<i64: 1, 32>}, {pipeline_mode = #tpu.pipeline_mode<synchronous>, transform_indices = @transform_5, window_bounds = array<i64: 1, 32>}, {pipeline_mode = #tpu.pipeline_mode<synchronous>, transform_indices = @transform_6, window_bounds = array<i64: 32, 128>}, {pipeline_mode = #tpu.pipeline_mode<synchronous>, transform_indices = @transform_7, window_bounds = array<i64: 1, 128>}, {pipeline_mode = #tpu.pipeline_mode<synchronous>, transform_indices = @transform_8, window_bounds = array<i64: 128, 32>}, {pipeline_mode = #tpu.pipeline_mode<synchronous>, transform_indices = @transform_9, window_bounds = array<i64: 1, 32>}, {transform_indices = @transform_10, window_bounds = array<i64: 32, 32>}]} {
    %c0 = arith.constant 0 : index
    %c0_0 = arith.constant 0 : index
    %0 = vector.load %arg4[%c0, %c0_0] : memref<32x32xf32, #tpu.memory_space<vmem>>, vector<32x32xf32>
    %c0_1 = arith.constant 0 : index
    %c0_2 = arith.constant 0 : index
    %1 = vector.load %arg1[%c0_1, %c0_2] : memref<32x32xbf16, #tpu.memory_space<vmem>>, vector<32x32xbf16>
    %c0_3 = arith.constant 0 : index
    %c0_4 = arith.constant 0 : index
    %2 = vector.load %arg2[%c0_3, %c0_4] : memref<32x32xbf16, #tpu.memory_space<vmem>>, vector<32x32xbf16>
    %cst = arith.constant dense<0.000000e+00> : vector<32x32xf32>
    %3 = tpu.matmul %1, %2, %cst {dimension_numbers = #tpu.dot_dimension_numbers<[1], [0], [0], [1], [0, 0, 1, 1], [], []>} : vector<32x32xbf16>, vector<32x32xbf16>, vector<32x32xf32> -> vector<32x32xf32>
    %c0_5 = arith.constant 0 : index
    %c0_6 = arith.constant 0 : index
    %4 = vector.load %arg3[%c0_5, %c0_6] : memref<1x32xf32, #tpu.memory_space<vmem>>, vector<1x32xf32>
    %5 = vector.broadcast %4 : vector<1x32xf32> to vector<32x32xf32>
    %6 = arith.addf %3, %5 : vector<32x32xf32>
    %7 = arith.addf %6, %0 : vector<32x32xf32>
    %c0_7 = arith.constant 0 : index
    %c0_8 = arith.constant 0 : index
    %8 = vector.load %arg5[%c0_7, %c0_8] : memref<1x32xf32, #tpu.memory_space<vmem>>, vector<1x32xf32>
    %c0_9 = arith.constant 0 : index
    %c0_10 = arith.constant 0 : index
    %9 = vector.load %arg6[%c0_9, %c0_10] : memref<1x32xf32, #tpu.memory_space<vmem>>, vector<1x32xf32>
    %cst_11 = arith.constant dense<0.000000e+00> : vector<32xf32>
    %10 = vector.multi_reduction <add>, %7, %cst_11 [1] : vector<32x32xf32> to vector<32xf32>
    %11 = vector.shape_cast %10 : vector<32xf32> to vector<32x1xf32>
    %cst_12 = arith.constant 3.200000e+01 : f32
    %12 = vector.broadcast %cst_12 : f32 to vector<32x1xf32>
    %13 = arith.divf %11, %12 : vector<32x1xf32>
    %14 = vector.broadcast %13 : vector<32x1xf32> to vector<32x32xf32>
    %15 = arith.subf %7, %14 : vector<32x32xf32>
    %16 = arith.mulf %15, %15 : vector<32x32xf32>
    %cst_13 = arith.constant dense<0.000000e+00> : vector<32xf32>
    %17 = vector.multi_reduction <add>, %16, %cst_13 [1] : vector<32x32xf32> to vector<32xf32>
    %18 = vector.shape_cast %17 : vector<32xf32> to vector<32x1xf32>
    %cst_14 = arith.constant 3.200000e+01 : f32
    %19 = vector.broadcast %cst_14 : f32 to vector<32x1xf32>
    %20 = arith.divf %18, %19 : vector<32x1xf32>
    %21 = vector.broadcast %13 : vector<32x1xf32> to vector<32x32xf32>
    %22 = arith.subf %7, %21 : vector<32x32xf32>
    %cst_15 = arith.constant 9.99999974E-6 : f32
    %23 = vector.broadcast %cst_15 : f32 to vector<32x1xf32>
    %24 = arith.addf %20, %23 : vector<32x1xf32>
    %25 = math.rsqrt %24 : vector<32x1xf32>
    %26 = vector.broadcast %25 : vector<32x1xf32> to vector<32x32xf32>
    %27 = arith.mulf %22, %26 : vector<32x32xf32>
    %28 = vector.broadcast %8 : vector<1x32xf32> to vector<32x32xf32>
    %29 = arith.mulf %27, %28 : vector<32x32xf32>
    %30 = vector.broadcast %9 : vector<1x32xf32> to vector<32x32xf32>
    %31 = arith.addf %29, %30 : vector<32x32xf32>
    %32 = arith.truncf %31 : vector<32x32xf32> to vector<32x32xbf16>
    %c0_16 = arith.constant 0 : index
    %c0_17 = arith.constant 0 : index
    %33 = vector.load %arg7[%c0_16, %c0_17] : memref<32x128xbf16, #tpu.memory_space<vmem>>, vector<32x128xbf16>
    %cst_18 = arith.constant dense<0.000000e+00> : vector<32x128xf32>
    %34 = tpu.matmul %32, %33, %cst_18 {dimension_numbers = #tpu.dot_dimension_numbers<[1], [0], [0], [1], [0, 0, 1, 1], [], []>} : vector<32x32xbf16>, vector<32x128xbf16>, vector<32x128xf32> -> vector<32x128xf32>
    %c0_19 = arith.constant 0 : index
    %c0_20 = arith.constant 0 : index
    %35 = vector.load %arg8[%c0_19, %c0_20] : memref<1x128xf32, #tpu.memory_space<vmem>>, vector<1x128xf32>
    %36 = vector.broadcast %35 : vector<1x128xf32> to vector<32x128xf32>
    %37 = arith.addf %34, %36 : vector<32x128xf32>
    %cst_21 = arith.constant 5.000000e-01 : f32
    %38 = vector.broadcast %cst_21 : f32 to vector<32x128xf32>
    %39 = arith.mulf %38, %37 : vector<32x128xf32>
    %cst_22 = arith.constant 4.471500e-02 : f32
    %40 = vector.broadcast %cst_22 : f32 to vector<32x128xf32>
    %41 = arith.mulf %40, %37 : vector<32x128xf32>
    %42 = arith.mulf %41, %37 : vector<32x128xf32>
    %43 = arith.mulf %42, %37 : vector<32x128xf32>
    %44 = arith.addf %37, %43 : vector<32x128xf32>
    %cst_23 = arith.constant 0.797884583 : f32
    %45 = vector.broadcast %cst_23 : f32 to vector<32x128xf32>
    %46 = arith.mulf %45, %44 : vector<32x128xf32>
    %47 = math.tanh %46 : vector<32x128xf32>
    %cst_24 = arith.constant 1.000000e+00 : f32
    %48 = vector.broadcast %cst_24 : f32 to vector<32x128xf32>
    %49 = arith.addf %48, %47 : vector<32x128xf32>
    %50 = arith.mulf %39, %49 : vector<32x128xf32>
    %51 = arith.truncf %50 : vector<32x128xf32> to vector<32x128xbf16>
    %c0_25 = arith.constant 0 : index
    %c0_26 = arith.constant 0 : index
    %52 = vector.load %arg9[%c0_25, %c0_26] : memref<128x32xbf16, #tpu.memory_space<vmem>>, vector<128x32xbf16>
    %cst_27 = arith.constant dense<0.000000e+00> : vector<32x32xf32>
    %53 = tpu.matmul %51, %52, %cst_27 {dimension_numbers = #tpu.dot_dimension_numbers<[1], [0], [0], [1], [0, 0, 1, 1], [], []>} : vector<32x128xbf16>, vector<128x32xbf16>, vector<32x32xf32> -> vector<32x32xf32>
    %c0_28 = arith.constant 0 : index
    %c0_29 = arith.constant 0 : index
    %54 = vector.load %arg10[%c0_28, %c0_29] : memref<1x32xf32, #tpu.memory_space<vmem>>, vector<1x32xf32>
    %55 = vector.broadcast %54 : vector<1x32xf32> to vector<32x32xf32>
    %56 = arith.addf %53, %55 : vector<32x32xf32>
    %57 = arith.addf %7, %56 : vector<32x32xf32>
    %c0_30 = arith.constant 0 : index
    %c0_31 = arith.constant 0 : index
    %58 = vector.load %arg11[%c0_30, %c0_31] : memref<32x32xf32, #tpu.memory_space<vmem>>, vector<32x32xf32>
    tpu.vector_store %arg11[%c0_30, %c0_31], %57 {strides = array<i32>} : memref<32x32xf32, #tpu.memory_space<vmem>>, vector<32x32xf32>,
    return
  }
  func.func @transform_0(%arg0: i32) -> (i32, i32) {
    %c0_i32 = arith.constant 0 : i32
    %c0_i32_0 = arith.constant 0 : i32
    return %arg0, %c0_i32 : i32, i32
  }
  func.func @transform_1(%arg0: i32) -> (i32, i32) {
    %c0_i32 = arith.constant 0 : i32
    %c0_i32_0 = arith.constant 0 : i32
    %c0_i32_1 = arith.constant 0 : i32
    return %c0_i32, %c0_i32_0 : i32, i32
  }
  func.func @transform_2(%arg0: i32) -> (i32, i32) {
    %c0_i32 = arith.constant 0 : i32
    %c0_i32_0 = arith.constant 0 : i32
    %c0_i32_1 = arith.constant 0 : i32
    return %c0_i32, %c0_i32_0 : i32, i32
  }
  func.func @transform_3(%arg0: i32) -> (i32, i32) {
    %c0_i32 = arith.constant 0 : i32
    %c0_i32_0 = arith.constant 0 : i32
    return %arg0, %c0_i32 : i32, i32
  }
  func.func @transform_4(%arg0: i32) -> (i32, i32) {
    %c0_i32 = arith.constant 0 : i32
    %c0_i32_0 = arith.constant 0 : i32
    %c0_i32_1 = arith.constant 0 : i32
    return %c0_i32, %c0_i32_0 : i32, i32
  }
  func.func @transform_5(%arg0: i32) -> (i32, i32) {
    %c0_i32 = arith.constant 0 : i32
    %c0_i32_0 = arith.constant 0 : i32
    %c0_i32_1 = arith.constant 0 : i32
    return %c0_i32, %c0_i32_0 : i32, i32
  }
  func.func @transform_6(%arg0: i32) -> (i32, i32) {
    %c0_i32 = arith.constant 0 : i32
    %c0_i32_0 = arith.constant 0 : i32
    %c0_i32_1 = arith.constant 0 : i32
    return %c0_i32, %c0_i32_0 : i32, i32
  }
  func.func @transform_7(%arg0: i32) -> (i32, i32) {
    %c0_i32 = arith.constant 0 : i32
    %c0_i32_0 = arith.constant 0 : i32
    %c0_i32_1 = arith.constant 0 : i32
    return %c0_i32, %c0_i32_0 : i32, i32
  }
  func.func @transform_8(%arg0: i32) -> (i32, i32) {
    %c0_i32 = arith.constant 0 : i32
    %c0_i32_0 = arith.constant 0 : i32
    %c0_i32_1 = arith.constant 0 : i32
    return %c0_i32, %c0_i32_0 : i32, i32
  }
  func.func @transform_9(%arg0: i32) -> (i32, i32) {
    %c0_i32 = arith.constant 0 : i32
    %c0_i32_0 = arith.constant 0 : i32
    %c0_i32_1 = arith.constant 0 : i32
    return %c0_i32, %c0_i32_0 : i32, i32
  }
  func.func @transform_10(%arg0: i32) -> (i32, i32) {
    %c0_i32 = arith.constant 0 : i32
    %c0_i32_0 = arith.constant 0 : i32
    return %arg0, %c0_i32 : i32, i32
  }
}

</mosaic_0001>

<llo_original>
// kernel: tile.8
$region0: #{tile.8}
  #allocation0 [shape = 's32[1]{0}', space=sflag, size = 0x4, scoped, tag = 'scoped memory for tile.8']
  %s0 = inlined_call_operand.vmem [shape: f32[32], index: 0, kind: input, shape index: {}]
  %s1 = inlined_call_operand.vmem [shape: f32[8,32], index: 1, kind: output, shape index: {}]
  // Predicated region
  $region2: #{tile.8} parent=0 // pred_check
    _
  $region3: #{tile.8} parent=0 // pred_check_branch
    %3 = sbr.rel (0) target = $region5
  $region4: #{tile.8} parent=0 // pred_region
    _
  $region5: #{tile.8} parent=0 // pred_fallthru
    _
  %v4 = vld [vmem:[%s0] ss:$0 sm:$0xff]
  %5 = vst [vmem:[%s1] sm:$0xff] %v4

// kernel: tile.9
$region0: #{tile.9}
  %s0 = inlined_call_operand.vmem [shape: f32[8,32], index: 0, kind: input, shape index: {}]
  %s1 = inlined_call_operand.vmem [shape: f32[1,256], index: 1, kind: output, shape index: {}]
  $region1: #{tile.9} parent=0
    #allocation0 [shape = 'u8[8192]{0}', space=vmem, size = 0x2000, scoped, tag = 'scoped mem for output reshape']
    %s2 = smov 3
    %v3 = vld [vmem:[%s0] ss:$4 sm:%s2]
    %vm4 = vcmask 261120
    %5 = vst.msk [vmem:[#allocation0] ss:$8 sm:$0x3] %vm4, %v3
    %s6 = scalar_lea.vmem %s0, 3
    %s7 = smov 3
    %v8 = vld [vmem:[%s6] ss:$4 sm:%s7]
    %9 = vrot.lane.b32.xlu0 %v8, 96
    %v10 = vpop.permute.xlu0 %9
    %vm11 = vcmask 1048320
    %12 = vst.msk [vmem:[#allocation0] ss:$8 sm:$0x3] %vm11, %v10
    %s13 = scalar_lea.vmem %s0, 2
    %s14 = smov 3
    %v15 = vld [vmem:[%s13] ss:$4 sm:%s14]
    %16 = vrot.lane.b32.xlu0 %v15, 64
    %v17 = vpop.permute.xlu0 %16
    %vm18 = vcmask 785920
    %19 = vst.msk [vmem:[#allocation0] ss:$8 sm:$0x3] %vm18, %v17
    %s20 = scalar_lea.vmem %s0, 1
    %s21 = smov 3
    %v22 = vld [vmem:[%s20] ss:$4 sm:%s21]
    %23 = vrot.lane.b32.xlu0 %v22, 32
    %v24 = vpop.permute.xlu0 %23
    %vm25 = vcmask 523520
    %26 = vst.msk [vmem:[#allocation0] ss:$8 sm:$0x3] %vm25, %v24
    %s28 = ssub.s32 2, 1
    %v29 = vld [vmem:[#allocation0] sm:%s28]
    %s31 = ssub.s32 2, 1
    %32 = vst [vmem:[%s1] sm:%s31] %v29
    %s33 = scalar_lea.vmem [#allocation0], 8
    %v34 = vld [vmem:[%s33] sm:%s28]
    %s36 = ssub.s32 2, 1
    %s37 = scalar_lea.vmem %s1, 1
    %38 = vst [vmem:[%s37] sm:%s36] %v34

// kernel: basic_layer_up_forward.5
$region0: #{basic_layer_up_forward.5}
  #allocation0 [shape = 'u32[]', space=smem, size = 0x4, offset = 0x4, fixed_abs, tag = 'smem constant byte address 0x4 - core index']
  #allocation1 [shape = 'u32[72,128]{1,0:T(1,128)}', space=vmem, size = 0x9000, scoped, tag = 'internal scratch']
  %s0 = inlined_call_operand.vmem [shape: f32[8,64], index: 0, kind: input, shape index: {}]
  %s1 = inlined_call_operand.vmem [shape: f32[1,64], index: 1, kind: input, shape index: {}]
  %s2 = inlined_call_operand.vmem [shape: f32[1,64], index: 2, kind: input, shape index: {}]
  %s3 = inlined_call_operand.vmem [shape: bf16[64,256], index: 3, kind: input, shape index: {}]
  %s4 = inlined_call_operand.vmem [shape: f32[1,256], index: 4, kind: input, shape index: {}]
  %s5 = inlined_call_operand.vmem [shape: f32[8,256], index: 5, kind: output, shape index: {}]
  %s6 = sld [smem:[#allocation0]]
  $region30: #{basic_layer_up_forward.5} parent=0
    _
  %s8 = ssub.s32 1, %s6
  %s9 = scalar_select 0, %s8, %s6
  // Predicated region
  $region2: #{basic_layer_up_forward.5} parent=0 // pred_check
    _
  $region3: #{basic_layer_up_forward.5} parent=0 // pred_check_branch
    %11 = sbr.rel (0) target = $region5
  $region4: #{basic_layer_up_forward.5} parent=0 // pred_region
    _
  $region5: #{basic_layer_up_forward.5} parent=0 // pred_fallthru
    _
  // Predicated region
  $region6: #{basic_layer_up_forward.5} parent=0 // pred_check
    _
  $region7: #{basic_layer_up_forward.5} parent=0 // pred_check_branch
    %13 = sbr.rel (0) target = $region9
  $region8: #{basic_layer_up_forward.5} parent=0 // pred_region
    _
  $region9: #{basic_layer_up_forward.5} parent=0 // pred_fallthru
    _
  // Predicated region
  $region10: #{basic_layer_up_forward.5} parent=0 // pred_check
    _
  $region11: #{basic_layer_up_forward.5} parent=0 // pred_check_branch
    %15 = sbr.rel (0) target = $region13
  $region12: #{basic_layer_up_forward.5} parent=0 // pred_region
    _
  $region13: #{basic_layer_up_forward.5} parent=0 // pred_fallthru
    _
  // Predicated region
  $region14: #{basic_layer_up_forward.5} parent=0 // pred_check
    _
  $region15: #{basic_layer_up_forward.5} parent=0 // pred_check_branch
    %17 = sbr.rel (0) target = $region17
  $region16: #{basic_layer_up_forward.5} parent=0 // pred_region
    _
  $region17: #{basic_layer_up_forward.5} parent=0 // pred_fallthru
    _
  // Predicated region
  $region18: #{basic_layer_up_forward.5} parent=0 // pred_check
    _
  $region19: #{basic_layer_up_forward.5} parent=0 // pred_check_branch
    %19 = sbr.rel (0) target = $region21
  $region20: #{basic_layer_up_forward.5} parent=0 // pred_region
    _
  $region21: #{basic_layer_up_forward.5} parent=0 // pred_fallthru
    _
  %v21 = vld [vmem:[%s0] sm:$0xff]
  %v22 = vld [vmem:[%s1] sm:$0x1]
  %v23 = vld [vmem:[%s2] sm:$0x1]
  %vm24 = vcmask 523264
  %v25 = vsel %vm24, %v21, 0.0
  %26 = vadd.xlane.f32.xlu0 %v25
  %v27 = vpop.xlane.xlu0 %26
  %v28 = vrcp.pop 64.0
  %v29 = vmul.f32 64.0, %v28
  %v30 = vsub.f32 1.0, %v29
  %v31 = vmul.f32 %v28, %v30
  %v32 = vadd.f32 %v28, %v31
  %vm33 = vweird.f32 %v28
  %v34 = vsel %vm33, %v28, %v32
  %v35 = vmul.f32 %v27, %v34
  %v36 = vsub.f32 %v21, %v35
  %v37 = vmul.f32 %v36, %v36
  %v38 = vsel %vm24, %v37, 0.0
  %39 = vadd.xlane.f32.xlu0 %v38
  %v40 = vpop.xlane.xlu0 %39
  %v41 = vmul.f32 %v40, %v34
  %v42 = vadd.f32 %v41, 1e-05
  %v43 = vrsqrt.pop %v42
  %v44 = vmul.f32 %v43, %v42
  %v45 = vmul.f32 %v44, %v43
  %v46 = vmul.f32 0.5, %v45
  %v47 = vsub.f32 1.5, %v46
  %v48 = vmul.f32 %v43, %v47
  %vm49 = vweird.f32 %v42
  %vm50 = vweird.f32 %v43
  %vm51 = vmor %vm49, %vm50
  %v52 = vsel %vm51, %v43, %v48
  %v53 = vmul.f32 %v36, %v52
  %v55 = vperm.slane %v22, 0
  %v57 = vmul.f32 %v53, %v55
  %v59 = vperm.slane %v23, 0
  %v61 = vadd.f32 %v57, %v59
  %v62 = vpack.c.bf16 %v61, %v61
  %v63 = vld [vmem:[%s3] sm:$0xff]
  %v64 = vld [vmem:[%s3 + $0x8] sm:$0xff]
  %v65 = vld [vmem:[%s3 + $0x10] sm:$0xff]
  %v66 = vld [vmem:[%s3 + $0x18] sm:$0xff]
  %v67 = vld [vmem:[%s3 + $0x20] sm:$0xff]
  %v68 = vld [vmem:[%s3 + $0x28] sm:$0xff]
  %v69 = vld [vmem:[%s3 + $0x30] sm:$0xff]
  %v70 = vld [vmem:[%s3 + $0x38] sm:$0xff]
  %v71 = vld [vmem:[%s4] sm:$0x3]
  %v73 = vperm.slane %v71, 0
  %v74 = vperm.slane %v71, 1
  %v85 = vunpack.c.l.b16 %v63
  %v86 = vunpack.c.h.b16 %v63
  %v87 = vunpack.c.l.b16 %v64
  %v88 = vunpack.c.h.b16 %v64
  %v89 = vunpack.c.l.b16 %v65
  %v90 = vunpack.c.h.b16 %v65
  %v91 = vunpack.c.l.b16 %v66
  %v92 = vunpack.c.h.b16 %v66
  %v93 = vunpack.c.l.b16 %v67
  %v94 = vunpack.c.h.b16 %v67
  %v95 = vunpack.c.l.b16 %v68
  %v96 = vunpack.c.h.b16 %v68
  %v97 = vunpack.c.l.b16 %v69
  %v98 = vunpack.c.h.b16 %v69
  %v99 = vunpack.c.l.b16 %v70
  %v100 = vunpack.c.h.b16 %v70
  %v101 = vpack.c.b16 %v87, %v85
  %v102 = vpack.c.b16 %v88, %v86
  %v103 = vpack.c.b16 %v91, %v89
  %v104 = vpack.c.b16 %v92, %v90
  %v105 = vpack.c.b16 %v95, %v93
  %v106 = vpack.c.b16 %v96, %v94
  %v107 = vpack.c.b16 %v99, %v97
  %v108 = vpack.c.b16 %v100, %v98
  %v118 = vsel %vm24, %v62, 0
  %120 = vmatpush.bf16.msra.mxu0 0
  %121 = vmatpush.bf16.msra.mxu0 0
  %122 = vmatpush.bf16.msra.mxu0 0
  %123 = vmatpush.bf16.msra.mxu0 0
  %124 = vmatpush.bf16.msra.mxu0 %v107
  %125 = vmatpush.bf16.msra.mxu0 %v105
  %126 = vmatpush.bf16.msra.mxu0 %v103
  %127 = vmatpush.bf16.msra.mxu0 %v101
  %128 = vmatmul.bf16.gmra.mxu0 %v118
  %v129 = vpop.f32.mrf.mxu0
  %v130 = vadd.f32 %v73, %v129
  %v131 = vpop.f32.mrf.mxu0
  %132 = vdwg.mxu0
  %133 = vmatpush.bf16.msra.mxu0 0
  %134 = vmatpush.bf16.msra.mxu0 0
  %135 = vmatpush.bf16.msra.mxu0 0
  %136 = vmatpush.bf16.msra.mxu0 0
  %137 = vmatpush.bf16.msra.mxu0 %v108
  %138 = vmatpush.bf16.msra.mxu0 %v106
  %139 = vmatpush.bf16.msra.mxu0 %v104
  %140 = vmatpush.bf16.msra.mxu0 %v102
  %141 = vmatmul.bf16.gmra.mxu0 %v118
  %v142 = vpop.f32.mrf.mxu0
  %v143 = vadd.f32 %v74, %v142
  %v144 = vpop.f32.mrf.mxu0
  %145 = vdwg.mxu0
  %146 = vst [vmem:[%s5] sm:$0xff] %v130
  %147 = vst [vmem:[%s5 + $0x8] sm:$0xff] %v143
  // Predicated region
  $region22: #{basic_layer_up_forward.5} parent=0 // pred_check
    _
  $region23: #{basic_layer_up_forward.5} parent=0 // pred_check_branch
    %149 = sbr.rel (0) target = $region25
  $region24: #{basic_layer_up_forward.5} parent=0 // pred_region
    _
  $region25: #{basic_layer_up_forward.5} parent=0 // pred_fallthru
    _
  // Predicated region
  $region26: #{basic_layer_up_forward.5} parent=0 // pred_check
    _
  $region27: #{basic_layer_up_forward.5} parent=0 // pred_check_branch
    %151 = sbr.rel (0) target = $region29
  $region28: #{basic_layer_up_forward.5} parent=0 // pred_region
    _
  $region29: #{basic_layer_up_forward.5} parent=0 // pred_fallthru
    _

// kernel: basic_layer_up_forward.6
$region0: #{basic_layer_up_forward.6}
  #allocation0 [shape = 'u32[]', space=smem, size = 0x4, offset = 0x4, fixed_abs, tag = 'smem constant byte address 0x4 - core index']
  #allocation1 [shape = 'u32[72,128]{1,0:T(1,128)}', space=vmem, size = 0x9000, scoped, tag = 'internal scratch']
  %s0 = inlined_call_operand.vmem [shape: f32[8,8,32], index: 0, kind: input, shape index: {}]
  %s1 = inlined_call_operand.vmem [shape: f32[8,8,32], index: 1, kind: input, shape index: {}]
  %s2 = inlined_call_operand.vmem [shape: f32[1,32], index: 2, kind: input, shape index: {}]
  %s3 = inlined_call_operand.vmem [shape: f32[1,32], index: 3, kind: input, shape index: {}]
  %s4 = inlined_call_operand.vmem [shape: bf16[32,64], index: 4, kind: input, shape index: {}]
  %s5 = inlined_call_operand.vmem [shape: f32[1,64], index: 5, kind: input, shape index: {}]
  %s6 = inlined_call_operand.vmem [shape: f32[2,8,8], index: 6, kind: input, shape index: {}]
  %s7 = inlined_call_operand.vmem [shape: bf16[8,8,32], index: 7, kind: output, shape index: {}]
  %s8 = sld [smem:[#allocation0]]
  $region61: #{basic_layer_up_forward.6} parent=0
    _
  %s10 = ssub.s32 1, %s8
  %s11 = scalar_select 0, %s10, %s8
  loop: start=0, step=1, limit=4
  $region2: #{basic_layer_up_forward.6} parent=0 // loop_pre_header
    _
  $region3: #{basic_layer_up_forward.6} parent=0 // loop_header
    %s13 = sphi 0, %s17
    %p14 = scmp.ge.s32.totalorder %s13, 4
    %s23 = sphi 0, %s25
    %s26 = sphi 0, %s23
    %s27 = sphi 0, %s26
    %s43 = sphi 0, %s27
    %s49 = sphi 0, %s51
    %s52 = sphi 0, %s49
    %s53 = sphi 0, %s52
    %s69 = sphi 0, %s53
    %s73 = sphi 0, %s73
    %s75 = sphi 0, %s73
    %s76 = sphi 0, %s75
    %s90 = sphi 0, %s76
    %s94 = sphi 0, %s94
    %s96 = sphi 0, %s94
    %s97 = sphi 0, %s96
    %s111 = sphi 0, %s97
    %s115 = sphi 0, %s115
    %s117 = sphi 0, %s115
    %s118 = sphi 0, %s117
    %s132 = sphi 0, %s118
    %s136 = sphi 0, %s136
    %s138 = sphi 0, %s136
    %s139 = sphi 0, %s138
    %s153 = sphi 0, %s139
    %s157 = sphi 0, %s157
    %s159 = sphi 0, %s157
    %s160 = sphi 0, %s159
    %s174 = sphi 0, %s160
    %s180 = sphi 0, %s182
    %s183 = sphi 0, %s180
    %s184 = sphi 0, %s183
    %s200 = sphi 0, %s184
  $region4: #{basic_layer_up_forward.6} parent=0 // loop_header_branch
    %16 = sbr.rel (%p14) target = $region8
  $region5: #{basic_layer_up_forward.6} parent=0 // loop_body
    %s18 = ssub.s32 %s13, 1
    %s19 = ssub.s32 %s13, 2
    %s20 = sadd.s32 %s13, 1
    %s21 = ssub.s32 %s13, %s20
    %p22 = scmp.eq.s32.totalorder %s21, 0
    %s24 = sadd.s32 %s23, 1
    %s25 = scalar_select %p22, %s23, %s24
    %p28 = pneg %p22
    %p29 = scmp.eq.s32.totalorder %s13, 1
    %p30 = por %p28, %p29
    %p31 = scmp.ne.s32.totalorder %s23, %s26
    %p32 = scmp.eq.s32.totalorder %s13, 0
    %p33 = por %p31, %p32
    %p34 = scmp.ne.s32.totalorder %s23, %s26
    %p35 = scmp.eq.s32.totalorder %s18, 1
    %p36 = por %p34, %p35
    %p37 = scmp.ne.s32.totalorder %s26, %s27
    %p38 = scmp.eq.s32.totalorder %s18, 0
    %p39 = por %p37, %p38
    %p40 = scmp.ne.s32.totalorder %s26, %s27
    %p41 = scmp.eq.s32.totalorder %s19, 1
    %p42 = por %p40, %p41
    %p44 = scmp.ne.s32.totalorder %s27, %s43
    %p45 = scmp.eq.s32.totalorder %s19, 0
    %p46 = por %p44, %p45
    %s47 = ssub.s32 %s13, %s20
    %p48 = scmp.eq.s32.totalorder %s47, 0
    %s50 = sadd.s32 %s49, 1
    %s51 = scalar_select %p48, %s49, %s50
    %p54 = pneg %p48
    %p55 = scmp.eq.s32.totalorder %s13, 1
    %p56 = por %p54, %p55
    %p57 = scmp.ne.s32.totalorder %s49, %s52
    %p58 = scmp.eq.s32.totalorder %s13, 0
    %p59 = por %p57, %p58
    %p60 = scmp.ne.s32.totalorder %s49, %s52
    %p61 = scmp.eq.s32.totalorder %s18, 1
    %p62 = por %p60, %p61
    %p63 = scmp.ne.s32.totalorder %s52, %s53
    %p64 = scmp.eq.s32.totalorder %s18, 0
    %p65 = por %p63, %p64
    %p66 = scmp.ne.s32.totalorder %s52, %s53
    %p67 = scmp.eq.s32.totalorder %s19, 1
    %p68 = por %p66, %p67
    %p70 = scmp.ne.s32.totalorder %s53, %s69
    %p71 = scmp.eq.s32.totalorder %s19, 0
    %p72 = por %p70, %p71
    %s74 = sadd.s32 %s73, 1
    %p77 = scmp.eq.s32.totalorder %s13, 1
    %p78 = scmp.ne.s32.totalorder %s73, %s75
    %p79 = scmp.eq.s32.totalorder %s13, 0
    %p80 = por %p78, %p79
    %p81 = scmp.ne.s32.totalorder %s73, %s75
    %p82 = scmp.eq.s32.totalorder %s18, 1
    %p83 = por %p81, %p82
    %p84 = scmp.ne.s32.totalorder %s75, %s76
    %p85 = scmp.eq.s32.totalorder %s18, 0
    %p86 = por %p84, %p85
    %p87 = scmp.ne.s32.totalorder %s75, %s76
    %p88 = scmp.eq.s32.totalorder %s19, 1
    %p89 = por %p87, %p88
    %p91 = scmp.ne.s32.totalorder %s76, %s90
    %p92 = scmp.eq.s32.totalorder %s19, 0
    %p93 = por %p91, %p92
    %s95 = sadd.s32 %s94, 1
    %p98 = scmp.eq.s32.totalorder %s13, 1
    %p99 = scmp.ne.s32.totalorder %s94, %s96
    %p100 = scmp.eq.s32.totalorder %s13, 0
    %p101 = por %p99, %p100
    %p102 = scmp.ne.s32.totalorder %s94, %s96
    %p103 = scmp.eq.s32.totalorder %s18, 1
    %p104 = por %p102, %p103
    %p105 = scmp.ne.s32.totalorder %s96, %s97
    %p106 = scmp.eq.s32.totalorder %s18, 0
    %p107 = por %p105, %p106
    %p108 = scmp.ne.s32.totalorder %s96, %s97
    %p109 = scmp.eq.s32.totalorder %s19, 1
    %p110 = por %p108, %p109
    %p112 = scmp.ne.s32.totalorder %s97, %s111
    %p113 = scmp.eq.s32.totalorder %s19, 0
    %p114 = por %p112, %p113
    %s116 = sadd.s32 %s115, 1
    %p119 = scmp.eq.s32.totalorder %s13, 1
    %p120 = scmp.ne.s32.totalorder %s115, %s117
    %p121 = scmp.eq.s32.totalorder %s13, 0
    %p122 = por %p120, %p121
    %p123 = scmp.ne.s32.totalorder %s115, %s117
    %p124 = scmp.eq.s32.totalorder %s18, 1
    %p125 = por %p123, %p124
    %p126 = scmp.ne.s32.totalorder %s117, %s118
    %p127 = scmp.eq.s32.totalorder %s18, 0
    %p128 = por %p126, %p127
    %p129 = scmp.ne.s32.totalorder %s117, %s118
    %p130 = scmp.eq.s32.totalorder %s19, 1
    %p131 = por %p129, %p130
    %p133 = scmp.ne.s32.totalorder %s118, %s132
    %p134 = scmp.eq.s32.totalorder %s19, 0
    %p135 = por %p133, %p134
    %s137 = sadd.s32 %s136, 1
    %p140 = scmp.eq.s32.totalorder %s13, 1
    %p141 = scmp.ne.s32.totalorder %s136, %s138
    %p142 = scmp.eq.s32.totalorder %s13, 0
    %p143 = por %p141, %p142
    %p144 = scmp.ne.s32.totalorder %s136, %s138
    %p145 = scmp.eq.s32.totalorder %s18, 1
    %p146 = por %p144, %p145
    %p147 = scmp.ne.s32.totalorder %s138, %s139
    %p148 = scmp.eq.s32.totalorder %s18, 0
    %p149 = por %p147, %p148
    %p150 = scmp.ne.s32.totalorder %s138, %s139
    %p151 = scmp.eq.s32.totalorder %s19, 1
    %p152 = por %p150, %p151
    %p154 = scmp.ne.s32.totalorder %s139, %s153
    %p155 = scmp.eq.s32.totalorder %s19, 0
    %p156 = por %p154, %p155
    %s158 = sadd.s32 %s157, 1
    %p161 = scmp.eq.s32.totalorder %s13, 1
    %p162 = scmp.ne.s32.totalorder %s157, %s159
    %p163 = scmp.eq.s32.totalorder %s13, 0
    %p164 = por %p162, %p163
    %p165 = scmp.ne.s32.totalorder %s157, %s159
    %p166 = scmp.eq.s32.totalorder %s18, 1
    %p167 = por %p165, %p166
    %p168 = scmp.ne.s32.totalorder %s159, %s160
    %p169 = scmp.eq.s32.totalorder %s18, 0
    %p170 = por %p168, %p169
    %p171 = scmp.ne.s32.totalorder %s159, %s160
    %p172 = scmp.eq.s32.totalorder %s19, 1
    %p173 = por %p171, %p172
    %p175 = scmp.ne.s32.totalorder %s160, %s174
    %p176 = scmp.eq.s32.totalorder %s19, 0
    %p177 = por %p175, %p176
    %s178 = ssub.s32 %s13, %s20
    %p179 = scmp.eq.s32.totalorder %s178, 0
    %s181 = sadd.s32 %s180, 1
    %s182 = scalar_select %p179, %s180, %s181
    %p185 = pneg %p179
    %p186 = scmp.eq.s32.totalorder %s13, 1
    %p187 = por %p185, %p186
    %p188 = scmp.ne.s32.totalorder %s180, %s183
    %p189 = scmp.eq.s32.totalorder %s13, 0
    %p190 = por %p188, %p189
    %p191 = scmp.ne.s32.totalorder %s180, %s183
    %p192 = scmp.eq.s32.totalorder %s18, 1
    %p193 = por %p191, %p192
    %p194 = scmp.ne.s32.totalorder %s183, %s184
    %p195 = scmp.eq.s32.totalorder %s18, 0
    %p196 = por %p194, %p195
    %p197 = scmp.ne.s32.totalorder %s183, %s184
    %p198 = scmp.eq.s32.totalorder %s19, 1
    %p199 = por %p197, %p198
    %p201 = scmp.ne.s32.totalorder %s184, %s200
    %p202 = scmp.eq.s32.totalorder %s19, 0
    %p203 = por %p201, %p202
    %p204 = scmp.le.s32.totalorder 1, %s13
    %p205 = scmp.lt.s32.totalorder %s13, 3
    %p206 = pnand %p204, %p205
    %p207 = pneg %p206
    // Predicated region
    $region9: #{basic_layer_up_forward.6} parent=5 // pred_check
      _
    $region10: #{basic_layer_up_forward.6} parent=5 // pred_check_branch
      %209 = sbr.rel (%p206) target = $region12
    $region11: #{basic_layer_up_forward.6} parent=5 // pred_region
      %s210 = ssub.s32 %s13, 1
      // Predicated region
      $region13: #{basic_layer_up_forward.6} parent=11 // pred_check
        %p211 = pneg %p86
      $region14: #{basic_layer_up_forward.6} parent=11 // pred_check_branch
        %213 = sbr.rel (%p211) target = $region16
      $region15: #{basic_layer_up_forward.6} parent=11 // pred_region
        _
      $region16: #{basic_layer_up_forward.6} parent=11 // pred_fallthru
        _
      // Predicated region
      $region17: #{basic_layer_up_forward.6} parent=11 // pred_check
        %p214 = pneg %p107
      $region18: #{basic_layer_up_forward.6} parent=11 // pred_check_branch
        %216 = sbr.rel (%p214) target = $region20
      $region19: #{basic_layer_up_forward.6} parent=11 // pred_region
        _
      $region20: #{basic_layer_up_forward.6} parent=11 // pred_fallthru
        _
      // Predicated region
      $region21: #{basic_layer_up_forward.6} parent=11 // pred_check
        %p217 = pneg %p128
      $region22: #{basic_layer_up_forward.6} parent=11 // pred_check_branch
        %219 = sbr.rel (%p217) target = $region24
      $region23: #{basic_layer_up_forward.6} parent=11 // pred_region
        _
      $region24: #{basic_layer_up_forward.6} parent=11 // pred_fallthru
        _
      // Predicated region
      $region25: #{basic_layer_up_forward.6} parent=11 // pred_check
        %p220 = pneg %p149
      $region26: #{basic_layer_up_forward.6} parent=11 // pred_check_branch
        %222 = sbr.rel (%p220) target = $region28
      $region27: #{basic_layer_up_forward.6} parent=11 // pred_region
        _
      $region28: #{basic_layer_up_forward.6} parent=11 // pred_fallthru
        _
      // Predicated region
      $region29: #{basic_layer_up_forward.6} parent=11 // pred_check
        %p223 = pneg %p170
      $region30: #{basic_layer_up_forward.6} parent=11 // pred_check_branch
        %225 = sbr.rel (%p223) target = $region32
      $region31: #{basic_layer_up_forward.6} parent=11 // pred_region
        _
      $region32: #{basic_layer_up_forward.6} parent=11 // pred_fallthru
        _
    $region12: #{basic_layer_up_forward.6} parent=5 // pred_fallthru
      _
    %p226 = scmp.lt.s32.totalorder %s13, 2
    // Predicated region
    $region33: #{basic_layer_up_forward.6} parent=5 // pred_check
      %p227 = pneg %p226
    $region34: #{basic_layer_up_forward.6} parent=5 // pred_check_branch
      %229 = sbr.rel (%p227) target = $region36
    $region35: #{basic_layer_up_forward.6} parent=5 // pred_region
      // Predicated region
      $region37: #{basic_layer_up_forward.6} parent=35 // pred_check
        %p230 = pneg %p33
      $region38: #{basic_layer_up_forward.6} parent=35 // pred_check_branch
        %232 = sbr.rel (%p230) target = $region40
      $region39: #{basic_layer_up_forward.6} parent=35 // pred_region
        %s233 = smul.u32 4, %s13
        %p234 = scmp.lt.s32.totalorder %s233, 7
        %s235 = scalar_select %p234, %s233, 7
        %s236 = smul.addr %s235, 8
        %s237 = scalar_lea.vmem %s0, %s236
        %s238 = smul.u32 4, %s13
      $region40: #{basic_layer_up_forward.6} parent=35 // pred_fallthru
        _
      // Predicated region
      $region41: #{basic_layer_up_forward.6} parent=35 // pred_check
        %p239 = pneg %p59
      $region42: #{basic_layer_up_forward.6} parent=35 // pred_check_branch
        %241 = sbr.rel (%p239) target = $region44
      $region43: #{basic_layer_up_forward.6} parent=35 // pred_region
        %s242 = smul.u32 4, %s13
        %p243 = scmp.lt.s32.totalorder %s242, 7
        %s244 = scalar_select %p243, %s242, 7
        %s245 = smul.addr %s244, 8
        %s246 = scalar_lea.vmem %s1, %s245
        %s247 = smul.u32 4, %s13
      $region44: #{basic_layer_up_forward.6} parent=35 // pred_fallthru
        _
    $region36: #{basic_layer_up_forward.6} parent=5 // pred_fallthru
      _
    %p248 = scmp.le.s32.totalorder 1, %s13
    %p249 = scmp.lt.s32.totalorder %s13, 3
    %p250 = pnand %p248, %p249
    %p251 = pneg %p250
    // Predicated region
    $region45: #{basic_layer_up_forward.6} parent=5 // pred_check
      _
    $region46: #{basic_layer_up_forward.6} parent=5 // pred_check_branch
      %253 = sbr.rel (%p250) target = $region48
    $region47: #{basic_layer_up_forward.6} parent=5 // pred_region
      %s254 = ssub.s32 %s13, 1
      %s255 = smul.u32 4, %s18
      %p256 = scmp.lt.s32.totalorder %s255, 7
      %s257 = scalar_select %p256, %s255, 7
      %s258 = smul.addr %s257, 8
      %s259 = scalar_lea.vmem %s0, %s258
      %p260 = pneg %p39
      %p261 = pneg %p36
      %s262 = smul.u32 4, %s18
      %p263 = scmp.lt.s32.totalorder %s262, 7
      %s264 = scalar_select %p263, %s262, 7
      %s265 = smul.addr %s264, 8
      %s266 = scalar_lea.vmem %s1, %s265
      %p267 = pneg %p65
      %p268 = pneg %p62
      %p269 = pneg %p86
      %p270 = pneg %p83
      %p271 = pneg %p107
      %p272 = pneg %p104
      %p273 = pneg %p128
      %p274 = pneg %p125
      %p275 = pneg %p149
      %p276 = pneg %p146
      %p277 = pneg %p170
      %p278 = pneg %p167
      %p279 = pneg %p196
      %p280 = pneg %p193
      %s281 = smul.u32 4, %s18
      %p282 = scmp.lt.s32.totalorder %s281, 7
      %s283 = scalar_select %p282, %s281, 7
      %s284 = smul.addr %s283, 4
      %s285 = scalar_lea.vmem %s7, %s284
      %s286 = smul.u32 4, %s18
      %p287 = scmp.lt.s32.totalorder %s286, 7
      %s288 = scalar_select %p287, %s286, 7
      %s289 = smul.addr %s288, 8
      %s290 = scalar_lea.vmem %s0, %s289
      %s291 = smul.u32 4, %s18
      %s292 = smul.u32 4, %s18
      %p293 = scmp.lt.s32.totalorder %s292, 7
      %s294 = scalar_select %p293, %s292, 7
      %s295 = smul.addr %s294, 8
      %s296 = scalar_lea.vmem %s1, %s295
      %s297 = smul.u32 4, %s18
      %s298 = smul.u32 4, %s18
      %p299 = scmp.lt.s32.totalorder %s298, 7
      %s300 = scalar_select %p299, %s298, 7
      %s301 = smul.addr %s300, 4
      %s302 = scalar_lea.vmem %s7, %s301
      %s303 = smul.u32 4, %s18
      %v305 = vld [vmem:[%s290] sm:$0xff]
      %v306 = vld [vmem:[%s290 + $0x8] sm:$0xff]
      %v307 = vld [vmem:[%s290 + $0x10] sm:$0xff]
      %v308 = vld [vmem:[%s290 + $0x18] sm:$0xff]
      %v309 = vld [vmem:[%s2] sm:$0x1]
      %v310 = vld [vmem:[%s3] sm:$0x1]
      %vm311 = vcmask 261120
      %v312 = vsel %vm311, %v305, 0.0
      %313 = vadd.xlane.f32.xlu0 %v312
      %v314 = vpop.xlane.xlu0 %313
      %v315 = vsel %vm311, %v306, 0.0
      %316 = vadd.xlane.f32.xlu0 %v315
      %v317 = vpop.xlane.xlu0 %316
      %v318 = vsel %vm311, %v307, 0.0
      %319 = vadd.xlane.f32.xlu0 %v318
      %v320 = vpop.xlane.xlu0 %319
      %v321 = vsel %vm311, %v308, 0.0
      %322 = vadd.xlane.f32.xlu0 %v321
      %v323 = vpop.xlane.xlu0 %322
      %v324 = vrcp.pop 32.0
      %v325 = vmul.f32 32.0, %v324
      %v326 = vsub.f32 1.0, %v325
      %v327 = vmul.f32 %v324, %v326
      %v328 = vadd.f32 %v324, %v327
      %vm329 = vweird.f32 %v324
      %v330 = vsel %vm329, %v324, %v328
      %v331 = vmul.f32 %v314, %v330
      %v332 = vmul.f32 %v317, %v330
      %v333 = vmul.f32 %v320, %v330
      %v334 = vmul.f32 %v323, %v330
      %v335 = vsub.f32 %v305, %v331
      %v336 = vsub.f32 %v306, %v332
      %v337 = vsub.f32 %v307, %v333
      %v338 = vsub.f32 %v308, %v334
      %v339 = vmul.f32 %v335, %v335
      %v340 = vmul.f32 %v336, %v336
      %v341 = vmul.f32 %v337, %v337
      %v342 = vmul.f32 %v338, %v338
      %v343 = vsel %vm311, %v339, 0.0
      %344 = vadd.xlane.f32.xlu0 %v343
      %v345 = vpop.xlane.xlu0 %344
      %v346 = vsel %vm311, %v340, 0.0
      %347 = vadd.xlane.f32.xlu0 %v346
      %v348 = vpop.xlane.xlu0 %347
      %v349 = vsel %vm311, %v341, 0.0
      %350 = vadd.xlane.f32.xlu0 %v349
      %v351 = vpop.xlane.xlu0 %350
      %v352 = vsel %vm311, %v342, 0.0
      %353 = vadd.xlane.f32.xlu0 %v352
      %v354 = vpop.xlane.xlu0 %353
      %v355 = vmul.f32 %v345, %v330
      %v356 = vmul.f32 %v348, %v330
      %v357 = vmul.f32 %v351, %v330
      %v358 = vmul.f32 %v354, %v330
      %v359 = vadd.f32 %v355, 1e-05
      %v360 = vadd.f32 %v356, 1e-05
      %v361 = vadd.f32 %v357, 1e-05
      %v362 = vadd.f32 %v358, 1e-05
      %v363 = vrsqrt.pop %v359
      %v364 = vmul.f32 %v363, %v359
      %v365 = vmul.f32 %v364, %v363
      %v366 = vmul.f32 0.5, %v365
      %v367 = vsub.f32 1.5, %v366
      %v368 = vmul.f32 %v363, %v367
      %vm369 = vweird.f32 %v359
      %vm370 = vweird.f32 %v363
      %vm371 = vmor %vm369, %vm370
      %v372 = vsel %vm371, %v363, %v368
      %v373 = vrsqrt.pop %v360
      %v374 = vmul.f32 %v373, %v360
      %v375 = vmul.f32 %v374, %v373
      %v376 = vmul.f32 0.5, %v375
      %v377 = vsub.f32 1.5, %v376
      %v378 = vmul.f32 %v373, %v377
      %vm379 = vweird.f32 %v360
      %vm380 = vweird.f32 %v373
      %vm381 = vmor %vm379, %vm380
      %v382 = vsel %vm381, %v373, %v378
      %v383 = vrsqrt.pop %v361
      %v384 = vmul.f32 %v383, %v361
      %v385 = vmul.f32 %v384, %v383
      %v386 = vmul.f32 0.5, %v385
      %v387 = vsub.f32 1.5, %v386
      %v388 = vmul.f32 %v383, %v387
      %vm389 = vweird.f32 %v361
      %vm390 = vweird.f32 %v383
      %vm391 = vmor %vm389, %vm390
      %v392 = vsel %vm391, %v383, %v388
      %v393 = vrsqrt.pop %v362
      %v394 = vmul.f32 %v393, %v362
      %v395 = vmul.f32 %v394, %v393
      %v396 = vmul.f32 0.5, %v395
      %v397 = vsub.f32 1.5, %v396
      %v398 = vmul.f32 %v393, %v397
      %vm399 = vweird.f32 %v362
      %vm400 = vweird.f32 %v393
      %vm401 = vmor %vm399, %vm400
      %v402 = vsel %vm401, %v393, %v398
      %v403 = vmul.f32 %v335, %v372
      %v404 = vmul.f32 %v336, %v382
      %v405 = vmul.f32 %v337, %v392
      %v406 = vmul.f32 %v338, %v402
      %v408 = vperm.slane %v309, 0
      %v410 = vmul.f32 %v403, %v408
      %v411 = vmul.f32 %v404, %v408
      %v412 = vmul.f32 %v405, %v408
      %v413 = vmul.f32 %v406, %v408
      %v415 = vperm.slane %v310, 0
      %v417 = vadd.f32 %v410, %v415
      %v418 = vadd.f32 %v411, %v415
      %v419 = vadd.f32 %v412, %v415
      %v420 = vadd.f32 %v413, %v415
      %v421 = vld [vmem:[%s296] sm:$0xff]
      %v422 = vld [vmem:[%s296 + $0x8] sm:$0xff]
      %v423 = vld [vmem:[%s296 + $0x10] sm:$0xff]
      %v424 = vld [vmem:[%s296 + $0x18] sm:$0xff]
      %v425 = vsel %vm311, %v421, 0.0
      %426 = vadd.xlane.f32.xlu0 %v425
      %v427 = vpop.xlane.xlu0 %426
      %v428 = vsel %vm311, %v422, 0.0
      %429 = vadd.xlane.f32.xlu0 %v428
      %v430 = vpop.xlane.xlu0 %429
      %v431 = vsel %vm311, %v423, 0.0
      %432 = vadd.xlane.f32.xlu0 %v431
      %v433 = vpop.xlane.xlu0 %432
      %v434 = vsel %vm311, %v424, 0.0
      %435 = vadd.xlane.f32.xlu0 %v434
      %v436 = vpop.xlane.xlu0 %435
      %v437 = vmul.f32 %v427, %v330
      %v438 = vmul.f32 %v430, %v330
      %v439 = vmul.f32 %v433, %v330
      %v440 = vmul.f32 %v436, %v330
      %v441 = vsub.f32 %v421, %v437
      %v442 = vsub.f32 %v422, %v438
      %v443 = vsub.f32 %v423, %v439
      %v444 = vsub.f32 %v424, %v440
      %v445 = vmul.f32 %v441, %v441
      %v446 = vmul.f32 %v442, %v442
      %v447 = vmul.f32 %v443, %v443
      %v448 = vmul.f32 %v444, %v444
      %v449 = vsel %vm311, %v445, 0.0
      %450 = vadd.xlane.f32.xlu0 %v449
      %v451 = vpop.xlane.xlu0 %450
      %v452 = vsel %vm311, %v446, 0.0
      %453 = vadd.xlane.f32.xlu0 %v452
      %v454 = vpop.xlane.xlu0 %453
      %v455 = vsel %vm311, %v447, 0.0
      %456 = vadd.xlane.f32.xlu0 %v455
      %v457 = vpop.xlane.xlu0 %456
      %v458 = vsel %vm311, %v448, 0.0
      %459 = vadd.xlane.f32.xlu0 %v458
      %v460 = vpop.xlane.xlu0 %459
      %v461 = vmul.f32 %v451, %v330
      %v462 = vmul.f32 %v454, %v330
      %v463 = vmul.f32 %v457, %v330
      %v464 = vmul.f32 %v460, %v330
      %v465 = vadd.f32 %v461, 1e-05
      %v466 = vadd.f32 %v462, 1e-05
      %v467 = vadd.f32 %v463, 1e-05
      %v468 = vadd.f32 %v464, 1e-05
      %v469 = vrsqrt.pop %v465
      %v470 = vmul.f32 %v469, %v465
      %v471 = vmul.f32 %v470, %v469
      %v472 = vmul.f32 0.5, %v471
      %v473 = vsub.f32 1.5, %v472
      %v474 = vmul.f32 %v469, %v473
      %vm475 = vweird.f32 %v465
      %vm476 = vweird.f32 %v469
      %vm477 = vmor %vm475, %vm476
      %v478 = vsel %vm477, %v469, %v474
      %v479 = vrsqrt.pop %v466
      %v480 = vmul.f32 %v479, %v466
      %v481 = vmul.f32 %v480, %v479
      %v482 = vmul.f32 0.5, %v481
      %v483 = vsub.f32 1.5, %v482
      %v484 = vmul.f32 %v479, %v483
      %vm485 = vweird.f32 %v466
      %vm486 = vweird.f32 %v479
      %vm487 = vmor %vm485, %vm486
      %v488 = vsel %vm487, %v479, %v484
      %v489 = vrsqrt.pop %v467
      %v490 = vmul.f32 %v489, %v467
      %v491 = vmul.f32 %v490, %v489
      %v492 = vmul.f32 0.5, %v491
      %v493 = vsub.f32 1.5, %v492
      %v494 = vmul.f32 %v489, %v493
      %vm495 = vweird.f32 %v467
      %vm496 = vweird.f32 %v489
      %vm497 = vmor %vm495, %vm496
      %v498 = vsel %vm497, %v489, %v494
      %v499 = vrsqrt.pop %v468
      %v500 = vmul.f32 %v499, %v468
      %v501 = vmul.f32 %v500, %v499
      %v502 = vmul.f32 0.5, %v501
      %v503 = vsub.f32 1.5, %v502
      %v504 = vmul.f32 %v499, %v503
      %vm505 = vweird.f32 %v468
      %vm506 = vweird.f32 %v499
      %vm507 = vmor %vm505, %vm506
      %v508 = vsel %vm507, %v499, %v504
      %v509 = vmul.f32 %v441, %v478
      %v510 = vmul.f32 %v442, %v488
      %v511 = vmul.f32 %v443, %v498
      %v512 = vmul.f32 %v444, %v508
      %v513 = vmul.f32 %v509, %v408
      %v514 = vmul.f32 %v510, %v408
      %v515 = vmul.f32 %v511, %v408
      %v516 = vmul.f32 %v512, %v408
      %v517 = vadd.f32 %v513, %v415
      %v518 = vadd.f32 %v514, %v415
      %v519 = vadd.f32 %v515, %v415
      %v520 = vadd.f32 %v516, %v415
      %v521 = vpack.c.bf16 %v418, %v417
      %v522 = vpack.c.bf16 %v420, %v419
      %v523 = vld [vmem:[%s4] sm:$0xf]
      %v524 = vld [vmem:[%s4 + $0x4] sm:$0xf]
      %v525 = vld [vmem:[%s4 + $0x8] sm:$0xf]
      %v526 = vld [vmem:[%s4 + $0xc] sm:$0xf]
      %v527 = vld [vmem:[%s5] sm:$0x1]
      %v529 = vperm.slane %v527, 0
      %v535 = vunpack.c.l.b16 %v523
      %v536 = vunpack.c.l.b16 %v524
      %v537 = vunpack.c.l.b16 %v525
      %v538 = vunpack.c.l.b16 %v526
      %v539 = vpack.c.b16 %v536, %v535
      %v540 = vpack.c.b16 %v538, %v537
      %v544 = vsel %vm311, %v521, 0
      %v547 = vsel %vm311, %v522, 0
      %549 = vmatpush.bf16.msra.mxu0 0
      %550 = vmatpush.bf16.msra.mxu0 0
      %551 = vmatpush.bf16.msra.mxu0 0
      %552 = vmatpush.bf16.msra.mxu0 0
      %553 = vmatpush.bf16.msra.mxu0 0
      %554 = vmatpush.bf16.msra.mxu0 0
      %555 = vmatpush.bf16.msra.mxu0 %v540
      %556 = vmatpush.bf16.msra.mxu0 %v539
      %557 = vmatmul.bf16.gmra.mxu0 %v544
      %v558 = vpop.f32.mrf.mxu0
      %v559 = vadd.f32 %v529, %v558
      %v560 = vpop.f32.mrf.mxu0
      %v561 = vadd.f32 %v529, %v560
      %562 = vmatmul.bf16.gmra.mxu0 %v547
      %v563 = vpop.f32.mrf.mxu0
      %v564 = vadd.f32 %v529, %v563
      %v565 = vpop.f32.mrf.mxu0
      %v566 = vadd.f32 %v529, %v565
      %567 = vdwg.mxu0
      %v568 = vld [vmem:[%s6] sm:$0xff]
      %v569 = vld [vmem:[%s6 + $0x8] sm:$0xff]
      %v570 = vpack.c.bf16 %v517, %v517
      %v571 = vpack.c.bf16 %v518, %v518
      %v572 = vpack.c.bf16 %v519, %v519
      %v573 = vpack.c.bf16 %v520, %v520
      %v574 = vpack.c.bf16 %v559, %v559
      %v575 = vpack.c.bf16 %v561, %v561
      %v576 = vpack.c.bf16 %v564, %v564
      %v577 = vpack.c.bf16 %v566, %v566
      %vm578 = vcmask 130048
      %v580 = vsel %vm578, %v570, 0
      %v583 = vsel %vm578, %v574, 0
      %585 = vmatpush.bf16.xpose.msra.mxu0 0
      %586 = vmatpush.bf16.xpose.msra.mxu0 0
      %587 = vmatpush.bf16.xpose.msra.mxu0 0
      %588 = vmatpush.bf16.xpose.msra.mxu0 0
      %589 = vmatpush.bf16.xpose.msra.mxu0 0
      %590 = vmatpush.bf16.xpose.msra.mxu0 0
      %591 = vmatpush.bf16.xpose.msra.mxu0 0
      %592 = vmatpush.bf16.xpose.msra.mxu0 %v583
      %593 = vmatmul.bf16.gmra.mxu0 %v580
      %v594 = vpop.f32.mrf.mxu0
      %v595 = vadd.f32 0.0, %v594
      %v596 = vpop.f32.mrf.mxu0
      %597 = vdwg.mxu0
      %v599 = vsel %vm578, %v571, 0
      %v602 = vsel %vm578, %v575, 0
      %604 = vmatpush.bf16.xpose.msra.mxu0 0
      %605 = vmatpush.bf16.xpose.msra.mxu0 0
      %606 = vmatpush.bf16.xpose.msra.mxu0 0
      %607 = vmatpush.bf16.xpose.msra.mxu0 0
      %608 = vmatpush.bf16.xpose.msra.mxu0 0
      %609 = vmatpush.bf16.xpose.msra.mxu0 0
      %610 = vmatpush.bf16.xpose.msra.mxu0 0
      %611 = vmatpush.bf16.xpose.msra.mxu0 %v602
      %612 = vmatmul.bf16.gmra.mxu0 %v599
      %v613 = vpop.f32.mrf.mxu0
      %v614 = vadd.f32 0.0, %v613
      %v615 = vpop.f32.mrf.mxu0
      %616 = vdwg.mxu0
      %v618 = vsel %vm578, %v572, 0
      %v621 = vsel %vm578, %v576, 0
      %623 = vmatpush.bf16.xpose.msra.mxu0 0
      %624 = vmatpush.bf16.xpose.msra.mxu0 0
      %625 = vmatpush.bf16.xpose.msra.mxu0 0
      %626 = vmatpush.bf16.xpose.msra.mxu0 0
      %627 = vmatpush.bf16.xpose.msra.mxu0 0
      %628 = vmatpush.bf16.xpose.msra.mxu0 0
      %629 = vmatpush.bf16.xpose.msra.mxu0 0
      %630 = vmatpush.bf16.xpose.msra.mxu0 %v621
      %631 = vmatmul.bf16.gmra.mxu0 %v618
      %v632 = vpop.f32.mrf.mxu0
      %v633 = vadd.f32 0.0, %v632
      %v634 = vpop.f32.mrf.mxu0
      %635 = vdwg.mxu0
      %v637 = vsel %vm578, %v573, 0
      %v640 = vsel %vm578, %v577, 0
      %642 = vmatpush.bf16.xpose.msra.mxu0 0
      %643 = vmatpush.bf16.xpose.msra.mxu0 0
      %644 = vmatpush.bf16.xpose.msra.mxu0 0
      %645 = vmatpush.bf16.xpose.msra.mxu0 0
      %646 = vmatpush.bf16.xpose.msra.mxu0 0
      %647 = vmatpush.bf16.xpose.msra.mxu0 0
      %648 = vmatpush.bf16.xpose.msra.mxu0 0
      %649 = vmatpush.bf16.xpose.msra.mxu0 %v640
      %650 = vmatmul.bf16.gmra.mxu0 %v637
      %v651 = vpop.f32.mrf.mxu0
      %v652 = vadd.f32 0.0, %v651
      %v653 = vpop.f32.mrf.mxu0
      %654 = vdwg.mxu0
      %v655 = vmul.f32 %v595, 0.25
      %v656 = vmul.f32 %v614, 0.25
      %v657 = vmul.f32 %v633, 0.25
      %v658 = vmul.f32 %v652, 0.25
      %v659 = vadd.f32 %v655, %v568
      %v660 = vadd.f32 %v656, %v568
      %v661 = vadd.f32 %v657, %v568
      %v662 = vadd.f32 %v658, %v568
      %vm663 = vcmask 64512
      %v664 = vsel %vm663, %v659, -inf
      %665 = vmax.xlane.f32.xlu0 %v664
      %v666 = vpop.xlane.xlu0 %665
      %v667 = vsel %vm663, %v660, -inf
      %668 = vmax.xlane.f32.xlu0 %v667
      %v669 = vpop.xlane.xlu0 %668
      %v670 = vsel %vm663, %v661, -inf
      %671 = vmax.xlane.f32.xlu0 %v670
      %v672 = vpop.xlane.xlu0 %671
      %v673 = vsel %vm663, %v662, -inf
      %674 = vmax.xlane.f32.xlu0 %v673
      %v675 = vpop.xlane.xlu0 %674
      %v676 = vsub.f32 %v659, %v666
      %v677 = vsub.f32 %v660, %v669
      %v678 = vsub.f32 %v661, %v672
      %v679 = vsub.f32 %v662, %v675
      %v680 = vmul.f32 %v676, 1.442695
      %v681 = vpow.pop %v680
      %v682 = vmul.f32 %v677, 1.442695
      %v683 = vpow.pop %v682
      %v684 = vmul.f32 %v678, 1.442695
      %v685 = vpow.pop %v684
      %v686 = vmul.f32 %v679, 1.442695
      %v687 = vpow.pop %v686
      %v688 = vsel %vm663, %v681, 0.0
      %689 = vadd.xlane.f32.xlu0 %v688
      %v690 = vpop.xlane.xlu0 %689
      %v691 = vsel %vm663, %v683, 0.0
      %692 = vadd.xlane.f32.xlu0 %v691
      %v693 = vpop.xlane.xlu0 %692
      %v694 = vsel %vm663, %v685, 0.0
      %695 = vadd.xlane.f32.xlu0 %v694
      %v696 = vpop.xlane.xlu0 %695
      %v697 = vsel %vm663, %v687, 0.0
      %698 = vadd.xlane.f32.xlu0 %v697
      %v699 = vpop.xlane.xlu0 %698
      %v700 = vrcp.pop %v690
      %v701 = vrcp.pop %v693
      %v702 = vrcp.pop %v696
      %v703 = vrcp.pop %v699
      %v704 = vmul.f32 %v681, %v700
      %v705 = vmul.f32 %v683, %v701
      %v706 = vmul.f32 %v685, %v702
      %v707 = vmul.f32 %v687, %v703
      %v708 = vpack.c.bf16 %v704, %v704
      %v709 = vpack.c.bf16 %v705, %v705
      %v710 = vpack.c.bf16 %v706, %v706
      %v711 = vpack.c.bf16 %v707, %v707
      %v713 = vunpack.c.l.b16 %v574
      %v714 = vpack.c.b16 %v713, %v713
      %715 = vrot.lane.b32.xlu0 %v714, 96
      %v716 = vpop.permute.xlu0 %715
      %v718 = vsel %vm663, %v708, 0
      %vm720 = vcmask 1043456
      %v722 = vsel %vm720, %v716, 0
      %724 = vmatpush.bf16.msra.mxu0 0
      %725 = vmatpush.bf16.msra.mxu0 0
      %726 = vmatpush.bf16.msra.mxu0 0
      %727 = vmatpush.bf16.msra.mxu0 0
      %728 = vmatpush.bf16.msra.mxu0 0
      %729 = vmatpush.bf16.msra.mxu0 0
      %730 = vmatpush.bf16.msra.mxu0 0
      %731 = vmatpush.bf16.msra.mxu0 %v722
      %732 = vmatmul.bf16.gmra.mxu0 %v718
      %v733 = vpop.f32.mrf.mxu0
      %v734 = vadd.f32 0.0, %v733
      %v735 = vpop.f32.mrf.mxu0
      %736 = vdwg.mxu0
      %v738 = vunpack.c.l.b16 %v575
      %v739 = vpack.c.b16 %v738, %v738
      %740 = vrot.lane.b32.xlu0 %v739, 96
      %v741 = vpop.permute.xlu0 %740
      %v743 = vsel %vm663, %v709, 0
      %v746 = vsel %vm720, %v741, 0
      %748 = vmatpush.bf16.msra.mxu0 0
      %749 = vmatpush.bf16.msra.mxu0 0
      %750 = vmatpush.bf16.msra.mxu0 0
      %751 = vmatpush.bf16.msra.mxu0 0
      %752 = vmatpush.bf16.msra.mxu0 0
      %753 = vmatpush.bf16.msra.mxu0 0
      %754 = vmatpush.bf16.msra.mxu0 0
      %755 = vmatpush.bf16.msra.mxu0 %v746
      %756 = vmatmul.bf16.gmra.mxu0 %v743
      %v757 = vpop.f32.mrf.mxu0
      %v758 = vadd.f32 0.0, %v757
      %v759 = vpop.f32.mrf.mxu0
      %760 = vdwg.mxu0
      %v762 = vunpack.c.l.b16 %v576
      %v763 = vpack.c.b16 %v762, %v762
      %764 = vrot.lane.b32.xlu0 %v763, 96
      %v765 = vpop.permute.xlu0 %764
      %v767 = vsel %vm663, %v710, 0
      %v770 = vsel %vm720, %v765, 0
      %772 = vmatpush.bf16.msra.mxu0 0
      %773 = vmatpush.bf16.msra.mxu0 0
      %774 = vmatpush.bf16.msra.mxu0 0
      %775 = vmatpush.bf16.msra.mxu0 0
      %776 = vmatpush.bf16.msra.mxu0 0
      %777 = vmatpush.bf16.msra.mxu0 0
      %778 = vmatpush.bf16.msra.mxu0 0
      %779 = vmatpush.bf16.msra.mxu0 %v770
      %780 = vmatmul.bf16.gmra.mxu0 %v767
      %v781 = vpop.f32.mrf.mxu0
      %v782 = vadd.f32 0.0, %v781
      %v783 = vpop.f32.mrf.mxu0
      %784 = vdwg.mxu0
      %v786 = vunpack.c.l.b16 %v577
      %v787 = vpack.c.b16 %v786, %v786
      %788 = vrot.lane.b32.xlu0 %v787, 96
      %v789 = vpop.permute.xlu0 %788
      %v791 = vsel %vm663, %v711, 0
      %v794 = vsel %vm720, %v789, 0
      %796 = vmatpush.bf16.msra.mxu0 0
      %797 = vmatpush.bf16.msra.mxu0 0
      %798 = vmatpush.bf16.msra.mxu0 0
      %799 = vmatpush.bf16.msra.mxu0 0
      %800 = vmatpush.bf16.msra.mxu0 0
      %801 = vmatpush.bf16.msra.mxu0 0
      %802 = vmatpush.bf16.msra.mxu0 0
      %803 = vmatpush.bf16.msra.mxu0 %v794
      %804 = vmatmul.bf16.gmra.mxu0 %v791
      %v805 = vpop.f32.mrf.mxu0
      %v806 = vadd.f32 0.0, %v805
      %v807 = vpop.f32.mrf.mxu0
      %808 = vdwg.mxu0
      %v810 = vunpack.c.l.b16 %v570
      %v811 = vpack.c.b16 %v810, %v810
      %812 = vrot.lane.b32.xlu0 %v811, 112
      %v813 = vpop.permute.xlu0 %812
      %814 = vrot.lane.b32.xlu0 %v714, 112
      %v815 = vpop.permute.xlu0 %814
      %v817 = vsel %vm578, %v813, 0
      %v820 = vsel %vm578, %v815, 0
      %822 = vmatpush.bf16.xpose.msra.mxu0 0
      %823 = vmatpush.bf16.xpose.msra.mxu0 0
      %824 = vmatpush.bf16.xpose.msra.mxu0 0
      %825 = vmatpush.bf16.xpose.msra.mxu0 0
      %826 = vmatpush.bf16.xpose.msra.mxu0 0
      %827 = vmatpush.bf16.xpose.msra.mxu0 0
      %828 = vmatpush.bf16.xpose.msra.mxu0 0
      %829 = vmatpush.bf16.xpose.msra.mxu0 %v820
      %830 = vmatmul.bf16.gmra.mxu0 %v817
      %v831 = vpop.f32.mrf.mxu0
      %v832 = vadd.f32 0.0, %v831
      %v833 = vpop.f32.mrf.mxu0
      %834 = vdwg.mxu0
      %v836 = vunpack.c.l.b16 %v571
      %v837 = vpack.c.b16 %v836, %v836
      %838 = vrot.lane.b32.xlu0 %v837, 112
      %v839 = vpop.permute.xlu0 %838
      %840 = vrot.lane.b32.xlu0 %v739, 112
      %v841 = vpop.permute.xlu0 %840
      %v843 = vsel %vm578, %v839, 0
      %v846 = vsel %vm578, %v841, 0
      %848 = vmatpush.bf16.xpose.msra.mxu0 0
      %849 = vmatpush.bf16.xpose.msra.mxu0 0
      %850 = vmatpush.bf16.xpose.msra.mxu0 0
      %851 = vmatpush.bf16.xpose.msra.mxu0 0
      %852 = vmatpush.bf16.xpose.msra.mxu0 0
      %853 = vmatpush.bf16.xpose.msra.mxu0 0
      %854 = vmatpush.bf16.xpose.msra.mxu0 0
      %855 = vmatpush.bf16.xpose.msra.mxu0 %v846
      %856 = vmatmul.bf16.gmra.mxu0 %v843
      %v857 = vpop.f32.mrf.mxu0
      %v858 = vadd.f32 0.0, %v857
      %v859 = vpop.f32.mrf.mxu0
      %860 = vdwg.mxu0
      %v862 = vunpack.c.l.b16 %v572
      %v863 = vpack.c.b16 %v862, %v862
      %864 = vrot.lane.b32.xlu0 %v863, 112
      %v865 = vpop.permute.xlu0 %864
      %866 = vrot.lane.b32.xlu0 %v763, 112
      %v867 = vpop.permute.xlu0 %866
      %v869 = vsel %vm578, %v865, 0
      %v872 = vsel %vm578, %v867, 0
      %874 = vmatpush.bf16.xpose.msra.mxu0 0
      %875 = vmatpush.bf16.xpose.msra.mxu0 0
      %876 = vmatpush.bf16.xpose.msra.mxu0 0
      %877 = vmatpush.bf16.xpose.msra.mxu0 0
      %878 = vmatpush.bf16.xpose.msra.mxu0 0
      %879 = vmatpush.bf16.xpose.msra.mxu0 0
      %880 = vmatpush.bf16.xpose.msra.mxu0 0
      %881 = vmatpush.bf16.xpose.msra.mxu0 %v872
      %882 = vmatmul.bf16.gmra.mxu0 %v869
      %v883 = vpop.f32.mrf.mxu0
      %v884 = vadd.f32 0.0, %v883
      %v885 = vpop.f32.mrf.mxu0
      %886 = vdwg.mxu0
      %v888 = vunpack.c.l.b16 %v573
      %v889 = vpack.c.b16 %v888, %v888
      %890 = vrot.lane.b32.xlu0 %v889, 112
      %v891 = vpop.permute.xlu0 %890
      %892 = vrot.lane.b32.xlu0 %v787, 112
      %v893 = vpop.permute.xlu0 %892
      %v895 = vsel %vm578, %v891, 0
      %v898 = vsel %vm578, %v893, 0
      %900 = vmatpush.bf16.xpose.msra.mxu0 0
      %901 = vmatpush.bf16.xpose.msra.mxu0 0
      %902 = vmatpush.bf16.xpose.msra.mxu0 0
      %903 = vmatpush.bf16.xpose.msra.mxu0 0
      %904 = vmatpush.bf16.xpose.msra.mxu0 0
      %905 = vmatpush.bf16.xpose.msra.mxu0 0
      %906 = vmatpush.bf16.xpose.msra.mxu0 0
      %907 = vmatpush.bf16.xpose.msra.mxu0 %v898
      %908 = vmatmul.bf16.gmra.mxu0 %v895
      %v909 = vpop.f32.mrf.mxu0
      %v910 = vadd.f32 0.0, %v909
      %v911 = vpop.f32.mrf.mxu0
      %912 = vdwg.mxu0
      %v913 = vmul.f32 %v832, 0.25
      %v914 = vmul.f32 %v858, 0.25
      %v915 = vmul.f32 %v884, 0.25
      %v916 = vmul.f32 %v910, 0.25
      %v917 = vadd.f32 %v913, %v569
      %v918 = vadd.f32 %v914, %v569
      %v919 = vadd.f32 %v915, %v569
      %v920 = vadd.f32 %v916, %v569
      %v921 = vsel %vm663, %v917, -inf
      %922 = vmax.xlane.f32.xlu0 %v921
      %v923 = vpop.xlane.xlu0 %922
      %v924 = vsel %vm663, %v918, -inf
      %925 = vmax.xlane.f32.xlu0 %v924
      %v926 = vpop.xlane.xlu0 %925
      %v927 = vsel %vm663, %v919, -inf
      %928 = vmax.xlane.f32.xlu0 %v927
      %v929 = vpop.xlane.xlu0 %928
      %v930 = vsel %vm663, %v920, -inf
      %931 = vmax.xlane.f32.xlu0 %v930
      %v932 = vpop.xlane.xlu0 %931
      %v933 = vsub.f32 %v917, %v923
      %v934 = vsub.f32 %v918, %v926
      %v935 = vsub.f32 %v919, %v929
      %v936 = vsub.f32 %v920, %v932
      %v937 = vmul.f32 %v933, 1.442695
      %v938 = vpow.pop %v937
      %v939 = vmul.f32 %v934, 1.442695
      %v940 = vpow.pop %v939
      %v941 = vmul.f32 %v935, 1.442695
      %v942 = vpow.pop %v941
      %v943 = vmul.f32 %v936, 1.442695
      %v944 = vpow.pop %v943
      %v945 = vsel %vm663, %v938, 0.0
      %946 = vadd.xlane.f32.xlu0 %v945
      %v947 = vpop.xlane.xlu0 %946
      %v948 = vsel %vm663, %v940, 0.0
      %949 = vadd.xlane.f32.xlu0 %v948
      %v950 = vpop.xlane.xlu0 %949
      %v951 = vsel %vm663, %v942, 0.0
      %952 = vadd.xlane.f32.xlu0 %v951
      %v953 = vpop.xlane.xlu0 %952
      %v954 = vsel %vm663, %v944, 0.0
      %955 = vadd.xlane.f32.xlu0 %v954
      %v956 = vpop.xlane.xlu0 %955
      %v957 = vrcp.pop %v947
      %v958 = vrcp.pop %v950
      %v959 = vrcp.pop %v953
      %v960 = vrcp.pop %v956
      %v961 = vmul.f32 %v938, %v957
      %v962 = vmul.f32 %v940, %v958
      %v963 = vmul.f32 %v942, %v959
      %v964 = vmul.f32 %v944, %v960
      %v965 = vpack.c.bf16 %v961, %v961
      %v966 = vpack.c.bf16 %v962, %v962
      %v967 = vpack.c.bf16 %v963, %v963
      %v968 = vpack.c.bf16 %v964, %v964
      %969 = vrot.lane.b32.xlu0 %v714, 80
      %v970 = vpop.permute.xlu0 %969
      %v972 = vsel %vm663, %v965, 0
      %v975 = vsel %vm720, %v970, 0
      %977 = vmatpush.bf16.msra.mxu0 0
      %978 = vmatpush.bf16.msra.mxu0 0
      %979 = vmatpush.bf16.msra.mxu0 0
      %980 = vmatpush.bf16.msra.mxu0 0
      %981 = vmatpush.bf16.msra.mxu0 0
      %982 = vmatpush.bf16.msra.mxu0 0
      %983 = vmatpush.bf16.msra.mxu0 0
      %984 = vmatpush.bf16.msra.mxu0 %v975
      %985 = vmatmul.bf16.gmra.mxu0 %v972
      %v986 = vpop.f32.mrf.mxu0
      %v987 = vadd.f32 0.0, %v986
      %v988 = vpop.f32.mrf.mxu0
      %989 = vdwg.mxu0
      %990 = vrot.lane.b32.xlu0 %v739, 80
      %v991 = vpop.permute.xlu0 %990
      %v993 = vsel %vm663, %v966, 0
      %v996 = vsel %vm720, %v991, 0
      %998 = vmatpush.bf16.msra.mxu0 0
      %999 = vmatpush.bf16.msra.mxu0 0
      %1000 = vmatpush.bf16.msra.mxu0 0
      %1001 = vmatpush.bf16.msra.mxu0 0
      %1002 = vmatpush.bf16.msra.mxu0 0
      %1003 = vmatpush.bf16.msra.mxu0 0
      %1004 = vmatpush.bf16.msra.mxu0 0
      %1005 = vmatpush.bf16.msra.mxu0 %v996
      %1006 = vmatmul.bf16.gmra.mxu0 %v993
      %v1007 = vpop.f32.mrf.mxu0
      %v1008 = vadd.f32 0.0, %v1007
      %v1009 = vpop.f32.mrf.mxu0
      %1010 = vdwg.mxu0
      %1011 = vrot.lane.b32.xlu0 %v763, 80
      %v1012 = vpop.permute.xlu0 %1011
      %v1014 = vsel %vm663, %v967, 0
      %v1017 = vsel %vm720, %v1012, 0
      %1019 = vmatpush.bf16.msra.mxu0 0
      %1020 = vmatpush.bf16.msra.mxu0 0
      %1021 = vmatpush.bf16.msra.mxu0 0
      %1022 = vmatpush.bf16.msra.mxu0 0
      %1023 = vmatpush.bf16.msra.mxu0 0
      %1024 = vmatpush.bf16.msra.mxu0 0
      %1025 = vmatpush.bf16.msra.mxu0 0
      %1026 = vmatpush.bf16.msra.mxu0 %v1017
      %1027 = vmatmul.bf16.gmra.mxu0 %v1014
      %v1028 = vpop.f32.mrf.mxu0
      %v1029 = vadd.f32 0.0, %v1028
      %v1030 = vpop.f32.mrf.mxu0
      %1031 = vdwg.mxu0
      %1032 = vrot.lane.b32.xlu0 %v787, 80
      %v1033 = vpop.permute.xlu0 %1032
      %v1035 = vsel %vm663, %v968, 0
      %v1038 = vsel %vm720, %v1033, 0
      %1040 = vmatpush.bf16.msra.mxu0 0
      %1041 = vmatpush.bf16.msra.mxu0 0
      %1042 = vmatpush.bf16.msra.mxu0 0
      %1043 = vmatpush.bf16.msra.mxu0 0
      %1044 = vmatpush.bf16.msra.mxu0 0
      %1045 = vmatpush.bf16.msra.mxu0 0
      %1046 = vmatpush.bf16.msra.mxu0 0
      %1047 = vmatpush.bf16.msra.mxu0 %v1038
      %1048 = vmatmul.bf16.gmra.mxu0 %v1035
      %v1049 = vpop.f32.mrf.mxu0
      %v1050 = vadd.f32 0.0, %v1049
      %v1051 = vpop.f32.mrf.mxu0
      %1052 = vdwg.mxu0
      %1057 = vrot.lane.b32.xlu0 %v987, 16
      %v1058 = vpop.permute.xlu0 %1057
      %1059 = vrot.lane.b32.xlu0 %v1008, 16
      %v1060 = vpop.permute.xlu0 %1059
      %1061 = vrot.lane.b32.xlu0 %v1029, 16
      %v1062 = vpop.permute.xlu0 %1061
      %1063 = vrot.lane.b32.xlu0 %v1050, 16
      %v1064 = vpop.permute.xlu0 %1063
      %v1069 = vsel %vm578, %v734, %v1058
      %v1070 = vsel %vm578, %v758, %v1060
      %v1071 = vsel %vm578, %v782, %v1062
      %v1072 = vsel %vm578, %v806, %v1064
      %v1073 = vpack.c.bf16 %v1069, %v1069
      %v1074 = vpack.c.bf16 %v1070, %v1070
      %v1075 = vpack.c.bf16 %v1071, %v1071
      %v1076 = vpack.c.bf16 %v1072, %v1072
      %vm1077 = vcmask 257024
      %1078 = vst.msk [vmem:[%s302] sm:$0xf] %vm1077, %v1073
      %1079 = vst.msk [vmem:[%s302 + $0x4] sm:$0xf] %vm1077, %v1074
      %1080 = vst.msk [vmem:[%s302 + $0x8] sm:$0xf] %vm1077, %v1075
      %1081 = vst.msk [vmem:[%s302 + $0xc] sm:$0xf] %vm1077, %v1076
      %s1082 = smul.u32 4, %s18
      %p1083 = scmp.lt.s32.totalorder %s1082, 7
      %s1084 = scalar_select %p1083, %s1082, 7
      %s1085 = smul.addr %s1084, 4
      %s1086 = scalar_lea.vmem %s7, %s1085
      // Predicated region
      $region49: #{basic_layer_up_forward.6} parent=47 // pred_check
        %p1087 = pneg %p193
      $region50: #{basic_layer_up_forward.6} parent=47 // pred_check_branch
        %1089 = sbr.rel (%p1087) target = $region52
      $region51: #{basic_layer_up_forward.6} parent=47 // pred_region
        %s1090 = smul.u32 4, %s18
      $region52: #{basic_layer_up_forward.6} parent=47 // pred_fallthru
        _
    $region48: #{basic_layer_up_forward.6} parent=5 // pred_fallthru
      _
    %p1091 = scmp.le.s32.totalorder 2, %s13
    // Predicated region
    $region53: #{basic_layer_up_forward.6} parent=5 // pred_check
      %p1092 = pneg %p1091
    $region54: #{basic_layer_up_forward.6} parent=5 // pred_check_branch
      %1094 = sbr.rel (%p1092) target = $region56
    $region55: #{basic_layer_up_forward.6} parent=5 // pred_region
      %s1095 = ssub.s32 %s13, 2
      // Predicated region
      $region57: #{basic_layer_up_forward.6} parent=55 // pred_check
        %p1096 = pneg %p199
      $region58: #{basic_layer_up_forward.6} parent=55 // pred_check_branch
        %1098 = sbr.rel (%p1096) target = $region60
      $region59: #{basic_layer_up_forward.6} parent=55 // pred_region
        %s1099 = smul.u32 4, %s19
        %p1100 = scmp.lt.s32.totalorder %s1099, 7
        %s1101 = scalar_select %p1100, %s1099, 7
        %s1102 = smul.addr %s1101, 4
        %s1103 = scalar_lea.vmem %s7, %s1102
      $region60: #{basic_layer_up_forward.6} parent=55 // pred_fallthru
        _
    $region56: #{basic_layer_up_forward.6} parent=5 // pred_fallthru
      _
  $region6: #{basic_layer_up_forward.6} parent=0 // loop_footer
    %s17 = sadd.s32 1, %s13
  $region7: #{basic_layer_up_forward.6} parent=0 // loop_footer_branch
    %12 = sbr.rel target = $region3
  $region8: #{basic_layer_up_forward.6} parent=0 // loop_exit
    _

// kernel: basic_layer_up_forward.7
$region0: #{basic_layer_up_forward.7}
  #allocation0 [shape = 'u32[]', space=smem, size = 0x4, offset = 0x4, fixed_abs, tag = 'smem constant byte address 0x4 - core index']
  #allocation1 [shape = 'u32[72,128]{1,0:T(1,128)}', space=vmem, size = 0x9000, scoped, tag = 'internal scratch']
  %s0 = inlined_call_operand.vmem [shape: bf16[64,32], index: 0, kind: input, shape index: {}]
  %s1 = inlined_call_operand.vmem [shape: bf16[32,32], index: 1, kind: input, shape index: {}]
  %s2 = inlined_call_operand.vmem [shape: f32[1,32], index: 2, kind: input, shape index: {}]
  %s3 = inlined_call_operand.vmem [shape: f32[64,32], index: 3, kind: input, shape index: {}]
  %s4 = inlined_call_operand.vmem [shape: f32[64,32], index: 4, kind: input, shape index: {}]
  %s5 = inlined_call_operand.vmem [shape: f32[1,32], index: 5, kind: input, shape index: {}]
  %s6 = inlined_call_operand.vmem [shape: f32[1,32], index: 6, kind: input, shape index: {}]
  %s7 = inlined_call_operand.vmem [shape: bf16[32,128], index: 7, kind: input, shape index: {}]
  %s8 = inlined_call_operand.vmem [shape: f32[1,128], index: 8, kind: input, shape index: {}]
  %s9 = inlined_call_operand.vmem [shape: bf16[128,32], index: 9, kind: input, shape index: {}]
  %s10 = inlined_call_operand.vmem [shape: f32[1,32], index: 10, kind: input, shape index: {}]
  %s11 = inlined_call_operand.vmem [shape: f32[64,32], index: 11, kind: output, shape index: {}]
  %s12 = sld [smem:[#allocation0]]
  $region77: #{basic_layer_up_forward.7} parent=0
    _
  %s14 = ssub.s32 1, %s12
  %s15 = scalar_select 0, %s14, %s12
  loop: start=0, step=1, limit=4
  $region2: #{basic_layer_up_forward.7} parent=0 // loop_pre_header
    _
  $region3: #{basic_layer_up_forward.7} parent=0 // loop_header
    %s17 = sphi 0, %s21
    %p18 = scmp.ge.s32.totalorder %s17, 4
    %s27 = sphi 0, %s29
    %s30 = sphi 0, %s27
    %s31 = sphi 0, %s30
    %s47 = sphi 0, %s31
    %s51 = sphi 0, %s51
    %s53 = sphi 0, %s51
    %s54 = sphi 0, %s53
    %s68 = sphi 0, %s54
    %s72 = sphi 0, %s72
    %s74 = sphi 0, %s72
    %s75 = sphi 0, %s74
    %s89 = sphi 0, %s75
    %s95 = sphi 0, %s97
    %s98 = sphi 0, %s95
    %s99 = sphi 0, %s98
    %s115 = sphi 0, %s99
    %s121 = sphi 0, %s123
    %s124 = sphi 0, %s121
    %s125 = sphi 0, %s124
    %s141 = sphi 0, %s125
    %s145 = sphi 0, %s145
    %s147 = sphi 0, %s145
    %s148 = sphi 0, %s147
    %s162 = sphi 0, %s148
    %s166 = sphi 0, %s166
    %s168 = sphi 0, %s166
    %s169 = sphi 0, %s168
    %s183 = sphi 0, %s169
    %s187 = sphi 0, %s187
    %s189 = sphi 0, %s187
    %s190 = sphi 0, %s189
    %s204 = sphi 0, %s190
    %s208 = sphi 0, %s208
    %s210 = sphi 0, %s208
    %s211 = sphi 0, %s210
    %s225 = sphi 0, %s211
    %s229 = sphi 0, %s229
    %s231 = sphi 0, %s229
    %s232 = sphi 0, %s231
    %s246 = sphi 0, %s232
    %s250 = sphi 0, %s250
    %s252 = sphi 0, %s250
    %s253 = sphi 0, %s252
    %s267 = sphi 0, %s253
    %s273 = sphi 0, %s275
    %s276 = sphi 0, %s273
    %s277 = sphi 0, %s276
    %s293 = sphi 0, %s277
  $region4: #{basic_layer_up_forward.7} parent=0 // loop_header_branch
    %20 = sbr.rel (%p18) target = $region8
  $region5: #{basic_layer_up_forward.7} parent=0 // loop_body
    %s22 = ssub.s32 %s17, 1
    %s23 = ssub.s32 %s17, 2
    %s24 = sadd.s32 %s17, 1
    %s25 = ssub.s32 %s17, %s24
    %p26 = scmp.eq.s32.totalorder %s25, 0
    %s28 = sadd.s32 %s27, 1
    %s29 = scalar_select %p26, %s27, %s28
    %p32 = pneg %p26
    %p33 = scmp.eq.s32.totalorder %s17, 1
    %p34 = por %p32, %p33
    %p35 = scmp.ne.s32.totalorder %s27, %s30
    %p36 = scmp.eq.s32.totalorder %s17, 0
    %p37 = por %p35, %p36
    %p38 = scmp.ne.s32.totalorder %s27, %s30
    %p39 = scmp.eq.s32.totalorder %s22, 1
    %p40 = por %p38, %p39
    %p41 = scmp.ne.s32.totalorder %s30, %s31
    %p42 = scmp.eq.s32.totalorder %s22, 0
    %p43 = por %p41, %p42
    %p44 = scmp.ne.s32.totalorder %s30, %s31
    %p45 = scmp.eq.s32.totalorder %s23, 1
    %p46 = por %p44, %p45
    %p48 = scmp.ne.s32.totalorder %s31, %s47
    %p49 = scmp.eq.s32.totalorder %s23, 0
    %p50 = por %p48, %p49
    %s52 = sadd.s32 %s51, 1
    %p55 = scmp.eq.s32.totalorder %s17, 1
    %p56 = scmp.ne.s32.totalorder %s51, %s53
    %p57 = scmp.eq.s32.totalorder %s17, 0
    %p58 = por %p56, %p57
    %p59 = scmp.ne.s32.totalorder %s51, %s53
    %p60 = scmp.eq.s32.totalorder %s22, 1
    %p61 = por %p59, %p60
    %p62 = scmp.ne.s32.totalorder %s53, %s54
    %p63 = scmp.eq.s32.totalorder %s22, 0
    %p64 = por %p62, %p63
    %p65 = scmp.ne.s32.totalorder %s53, %s54
    %p66 = scmp.eq.s32.totalorder %s23, 1
    %p67 = por %p65, %p66
    %p69 = scmp.ne.s32.totalorder %s54, %s68
    %p70 = scmp.eq.s32.totalorder %s23, 0
    %p71 = por %p69, %p70
    %s73 = sadd.s32 %s72, 1
    %p76 = scmp.eq.s32.totalorder %s17, 1
    %p77 = scmp.ne.s32.totalorder %s72, %s74
    %p78 = scmp.eq.s32.totalorder %s17, 0
    %p79 = por %p77, %p78
    %p80 = scmp.ne.s32.totalorder %s72, %s74
    %p81 = scmp.eq.s32.totalorder %s22, 1
    %p82 = por %p80, %p81
    %p83 = scmp.ne.s32.totalorder %s74, %s75
    %p84 = scmp.eq.s32.totalorder %s22, 0
    %p85 = por %p83, %p84
    %p86 = scmp.ne.s32.totalorder %s74, %s75
    %p87 = scmp.eq.s32.totalorder %s23, 1
    %p88 = por %p86, %p87
    %p90 = scmp.ne.s32.totalorder %s75, %s89
    %p91 = scmp.eq.s32.totalorder %s23, 0
    %p92 = por %p90, %p91
    %s93 = ssub.s32 %s17, %s24
    %p94 = scmp.eq.s32.totalorder %s93, 0
    %s96 = sadd.s32 %s95, 1
    %s97 = scalar_select %p94, %s95, %s96
    %p100 = pneg %p94
    %p101 = scmp.eq.s32.totalorder %s17, 1
    %p102 = por %p100, %p101
    %p103 = scmp.ne.s32.totalorder %s95, %s98
    %p104 = scmp.eq.s32.totalorder %s17, 0
    %p105 = por %p103, %p104
    %p106 = scmp.ne.s32.totalorder %s95, %s98
    %p107 = scmp.eq.s32.totalorder %s22, 1
    %p108 = por %p106, %p107
    %p109 = scmp.ne.s32.totalorder %s98, %s99
    %p110 = scmp.eq.s32.totalorder %s22, 0
    %p111 = por %p109, %p110
    %p112 = scmp.ne.s32.totalorder %s98, %s99
    %p113 = scmp.eq.s32.totalorder %s23, 1
    %p114 = por %p112, %p113
    %p116 = scmp.ne.s32.totalorder %s99, %s115
    %p117 = scmp.eq.s32.totalorder %s23, 0
    %p118 = por %p116, %p117
    %s119 = ssub.s32 %s17, %s24
    %p120 = scmp.eq.s32.totalorder %s119, 0
    %s122 = sadd.s32 %s121, 1
    %s123 = scalar_select %p120, %s121, %s122
    %p126 = pneg %p120
    %p127 = scmp.eq.s32.totalorder %s17, 1
    %p128 = por %p126, %p127
    %p129 = scmp.ne.s32.totalorder %s121, %s124
    %p130 = scmp.eq.s32.totalorder %s17, 0
    %p131 = por %p129, %p130
    %p132 = scmp.ne.s32.totalorder %s121, %s124
    %p133 = scmp.eq.s32.totalorder %s22, 1
    %p134 = por %p132, %p133
    %p135 = scmp.ne.s32.totalorder %s124, %s125
    %p136 = scmp.eq.s32.totalorder %s22, 0
    %p137 = por %p135, %p136
    %p138 = scmp.ne.s32.totalorder %s124, %s125
    %p139 = scmp.eq.s32.totalorder %s23, 1
    %p140 = por %p138, %p139
    %p142 = scmp.ne.s32.totalorder %s125, %s141
    %p143 = scmp.eq.s32.totalorder %s23, 0
    %p144 = por %p142, %p143
    %s146 = sadd.s32 %s145, 1
    %p149 = scmp.eq.s32.totalorder %s17, 1
    %p150 = scmp.ne.s32.totalorder %s145, %s147
    %p151 = scmp.eq.s32.totalorder %s17, 0
    %p152 = por %p150, %p151
    %p153 = scmp.ne.s32.totalorder %s145, %s147
    %p154 = scmp.eq.s32.totalorder %s22, 1
    %p155 = por %p153, %p154
    %p156 = scmp.ne.s32.totalorder %s147, %s148
    %p157 = scmp.eq.s32.totalorder %s22, 0
    %p158 = por %p156, %p157
    %p159 = scmp.ne.s32.totalorder %s147, %s148
    %p160 = scmp.eq.s32.totalorder %s23, 1
    %p161 = por %p159, %p160
    %p163 = scmp.ne.s32.totalorder %s148, %s162
    %p164 = scmp.eq.s32.totalorder %s23, 0
    %p165 = por %p163, %p164
    %s167 = sadd.s32 %s166, 1
    %p170 = scmp.eq.s32.totalorder %s17, 1
    %p171 = scmp.ne.s32.totalorder %s166, %s168
    %p172 = scmp.eq.s32.totalorder %s17, 0
    %p173 = por %p171, %p172
    %p174 = scmp.ne.s32.totalorder %s166, %s168
    %p175 = scmp.eq.s32.totalorder %s22, 1
    %p176 = por %p174, %p175
    %p177 = scmp.ne.s32.totalorder %s168, %s169
    %p178 = scmp.eq.s32.totalorder %s22, 0
    %p179 = por %p177, %p178
    %p180 = scmp.ne.s32.totalorder %s168, %s169
    %p181 = scmp.eq.s32.totalorder %s23, 1
    %p182 = por %p180, %p181
    %p184 = scmp.ne.s32.totalorder %s169, %s183
    %p185 = scmp.eq.s32.totalorder %s23, 0
    %p186 = por %p184, %p185
    %s188 = sadd.s32 %s187, 1
    %p191 = scmp.eq.s32.totalorder %s17, 1
    %p192 = scmp.ne.s32.totalorder %s187, %s189
    %p193 = scmp.eq.s32.totalorder %s17, 0
    %p194 = por %p192, %p193
    %p195 = scmp.ne.s32.totalorder %s187, %s189
    %p196 = scmp.eq.s32.totalorder %s22, 1
    %p197 = por %p195, %p196
    %p198 = scmp.ne.s32.totalorder %s189, %s190
    %p199 = scmp.eq.s32.totalorder %s22, 0
    %p200 = por %p198, %p199
    %p201 = scmp.ne.s32.totalorder %s189, %s190
    %p202 = scmp.eq.s32.totalorder %s23, 1
    %p203 = por %p201, %p202
    %p205 = scmp.ne.s32.totalorder %s190, %s204
    %p206 = scmp.eq.s32.totalorder %s23, 0
    %p207 = por %p205, %p206
    %s209 = sadd.s32 %s208, 1
    %p212 = scmp.eq.s32.totalorder %s17, 1
    %p213 = scmp.ne.s32.totalorder %s208, %s210
    %p214 = scmp.eq.s32.totalorder %s17, 0
    %p215 = por %p213, %p214
    %p216 = scmp.ne.s32.totalorder %s208, %s210
    %p217 = scmp.eq.s32.totalorder %s22, 1
    %p218 = por %p216, %p217
    %p219 = scmp.ne.s32.totalorder %s210, %s211
    %p220 = scmp.eq.s32.totalorder %s22, 0
    %p221 = por %p219, %p220
    %p222 = scmp.ne.s32.totalorder %s210, %s211
    %p223 = scmp.eq.s32.totalorder %s23, 1
    %p224 = por %p222, %p223
    %p226 = scmp.ne.s32.totalorder %s211, %s225
    %p227 = scmp.eq.s32.totalorder %s23, 0
    %p228 = por %p226, %p227
    %s230 = sadd.s32 %s229, 1
    %p233 = scmp.eq.s32.totalorder %s17, 1
    %p234 = scmp.ne.s32.totalorder %s229, %s231
    %p235 = scmp.eq.s32.totalorder %s17, 0
    %p236 = por %p234, %p235
    %p237 = scmp.ne.s32.totalorder %s229, %s231
    %p238 = scmp.eq.s32.totalorder %s22, 1
    %p239 = por %p237, %p238
    %p240 = scmp.ne.s32.totalorder %s231, %s232
    %p241 = scmp.eq.s32.totalorder %s22, 0
    %p242 = por %p240, %p241
    %p243 = scmp.ne.s32.totalorder %s231, %s232
    %p244 = scmp.eq.s32.totalorder %s23, 1
    %p245 = por %p243, %p244
    %p247 = scmp.ne.s32.totalorder %s232, %s246
    %p248 = scmp.eq.s32.totalorder %s23, 0
    %p249 = por %p247, %p248
    %s251 = sadd.s32 %s250, 1
    %p254 = scmp.eq.s32.totalorder %s17, 1
    %p255 = scmp.ne.s32.totalorder %s250, %s252
    %p256 = scmp.eq.s32.totalorder %s17, 0
    %p257 = por %p255, %p256
    %p258 = scmp.ne.s32.totalorder %s250, %s252
    %p259 = scmp.eq.s32.totalorder %s22, 1
    %p260 = por %p258, %p259
    %p261 = scmp.ne.s32.totalorder %s252, %s253
    %p262 = scmp.eq.s32.totalorder %s22, 0
    %p263 = por %p261, %p262
    %p264 = scmp.ne.s32.totalorder %s252, %s253
    %p265 = scmp.eq.s32.totalorder %s23, 1
    %p266 = por %p264, %p265
    %p268 = scmp.ne.s32.totalorder %s253, %s267
    %p269 = scmp.eq.s32.totalorder %s23, 0
    %p270 = por %p268, %p269
    %s271 = ssub.s32 %s17, %s24
    %p272 = scmp.eq.s32.totalorder %s271, 0
    %s274 = sadd.s32 %s273, 1
    %s275 = scalar_select %p272, %s273, %s274
    %p278 = pneg %p272
    %p279 = scmp.eq.s32.totalorder %s17, 1
    %p280 = por %p278, %p279
    %p281 = scmp.ne.s32.totalorder %s273, %s276
    %p282 = scmp.eq.s32.totalorder %s17, 0
    %p283 = por %p281, %p282
    %p284 = scmp.ne.s32.totalorder %s273, %s276
    %p285 = scmp.eq.s32.totalorder %s22, 1
    %p286 = por %p284, %p285
    %p287 = scmp.ne.s32.totalorder %s276, %s277
    %p288 = scmp.eq.s32.totalorder %s22, 0
    %p289 = por %p287, %p288
    %p290 = scmp.ne.s32.totalorder %s276, %s277
    %p291 = scmp.eq.s32.totalorder %s23, 1
    %p292 = por %p290, %p291
    %p294 = scmp.ne.s32.totalorder %s277, %s293
    %p295 = scmp.eq.s32.totalorder %s23, 0
    %p296 = por %p294, %p295
    %p297 = scmp.le.s32.totalorder 1, %s17
    %p298 = scmp.lt.s32.totalorder %s17, 3
    %p299 = pnand %p297, %p298
    %p300 = pneg %p299
    // Predicated region
    $region9: #{basic_layer_up_forward.7} parent=5 // pred_check
      _
    $region10: #{basic_layer_up_forward.7} parent=5 // pred_check_branch
      %302 = sbr.rel (%p299) target = $region12
    $region11: #{basic_layer_up_forward.7} parent=5 // pred_region
      %s303 = ssub.s32 %s17, 1
      // Predicated region
      $region13: #{basic_layer_up_forward.7} parent=11 // pred_check
        %p304 = pneg %p64
      $region14: #{basic_layer_up_forward.7} parent=11 // pred_check_branch
        %306 = sbr.rel (%p304) target = $region16
      $region15: #{basic_layer_up_forward.7} parent=11 // pred_region
        _
      $region16: #{basic_layer_up_forward.7} parent=11 // pred_fallthru
        _
      // Predicated region
      $region17: #{basic_layer_up_forward.7} parent=11 // pred_check
        %p307 = pneg %p85
      $region18: #{basic_layer_up_forward.7} parent=11 // pred_check_branch
        %309 = sbr.rel (%p307) target = $region20
      $region19: #{basic_layer_up_forward.7} parent=11 // pred_region
        _
      $region20: #{basic_layer_up_forward.7} parent=11 // pred_fallthru
        _
      // Predicated region
      $region21: #{basic_layer_up_forward.7} parent=11 // pred_check
        %p310 = pneg %p158
      $region22: #{basic_layer_up_forward.7} parent=11 // pred_check_branch
        %312 = sbr.rel (%p310) target = $region24
      $region23: #{basic_layer_up_forward.7} parent=11 // pred_region
        _
      $region24: #{basic_layer_up_forward.7} parent=11 // pred_fallthru
        _
      // Predicated region
      $region25: #{basic_layer_up_forward.7} parent=11 // pred_check
        %p313 = pneg %p179
      $region26: #{basic_layer_up_forward.7} parent=11 // pred_check_branch
        %315 = sbr.rel (%p313) target = $region28
      $region27: #{basic_layer_up_forward.7} parent=11 // pred_region
        _
      $region28: #{basic_layer_up_forward.7} parent=11 // pred_fallthru
        _
      // Predicated region
      $region29: #{basic_layer_up_forward.7} parent=11 // pred_check
        %p316 = pneg %p200
      $region30: #{basic_layer_up_forward.7} parent=11 // pred_check_branch
        %318 = sbr.rel (%p316) target = $region32
      $region31: #{basic_layer_up_forward.7} parent=11 // pred_region
        _
      $region32: #{basic_layer_up_forward.7} parent=11 // pred_fallthru
        _
      // Predicated region
      $region33: #{basic_layer_up_forward.7} parent=11 // pred_check
        %p319 = pneg %p221
      $region34: #{basic_layer_up_forward.7} parent=11 // pred_check_branch
        %321 = sbr.rel (%p319) target = $region36
      $region35: #{basic_layer_up_forward.7} parent=11 // pred_region
        _
      $region36: #{basic_layer_up_forward.7} parent=11 // pred_fallthru
        _
      // Predicated region
      $region37: #{basic_layer_up_forward.7} parent=11 // pred_check
        %p322 = pneg %p242
      $region38: #{basic_layer_up_forward.7} parent=11 // pred_check_branch
        %324 = sbr.rel (%p322) target = $region40
      $region39: #{basic_layer_up_forward.7} parent=11 // pred_region
        _
      $region40: #{basic_layer_up_forward.7} parent=11 // pred_fallthru
        _
      // Predicated region
      $region41: #{basic_layer_up_forward.7} parent=11 // pred_check
        %p325 = pneg %p263
      $region42: #{basic_layer_up_forward.7} parent=11 // pred_check_branch
        %327 = sbr.rel (%p325) target = $region44
      $region43: #{basic_layer_up_forward.7} parent=11 // pred_region
        _
      $region44: #{basic_layer_up_forward.7} parent=11 // pred_fallthru
        _
    $region12: #{basic_layer_up_forward.7} parent=5 // pred_fallthru
      _
    %p328 = scmp.lt.s32.totalorder %s17, 2
    // Predicated region
    $region45: #{basic_layer_up_forward.7} parent=5 // pred_check
      %p329 = pneg %p328
    $region46: #{basic_layer_up_forward.7} parent=5 // pred_check_branch
      %331 = sbr.rel (%p329) target = $region48
    $region47: #{basic_layer_up_forward.7} parent=5 // pred_region
      // Predicated region
      $region49: #{basic_layer_up_forward.7} parent=47 // pred_check
        %p332 = pneg %p37
      $region50: #{basic_layer_up_forward.7} parent=47 // pred_check_branch
        %334 = sbr.rel (%p332) target = $region52
      $region51: #{basic_layer_up_forward.7} parent=47 // pred_region
        %s335 = smul.u32 4, %s17
        %p336 = scmp.lt.s32.totalorder %s335, 7
        %s337 = scalar_select %p336, %s335, 7
        %s338 = smul.addr %s337, 4
        %s339 = scalar_lea.vmem %s0, %s338
        %s340 = smul.u32 4, %s17
      $region52: #{basic_layer_up_forward.7} parent=47 // pred_fallthru
        _
      // Predicated region
      $region53: #{basic_layer_up_forward.7} parent=47 // pred_check
        %p341 = pneg %p105
      $region54: #{basic_layer_up_forward.7} parent=47 // pred_check_branch
        %343 = sbr.rel (%p341) target = $region56
      $region55: #{basic_layer_up_forward.7} parent=47 // pred_region
        %s344 = smul.u32 4, %s17
        %p345 = scmp.lt.s32.totalorder %s344, 7
        %s346 = scalar_select %p345, %s344, 7
        %s347 = smul.addr %s346, 8
        %s348 = scalar_lea.vmem %s3, %s347
        %s349 = smul.u32 4, %s17
      $region56: #{basic_layer_up_forward.7} parent=47 // pred_fallthru
        _
      // Predicated region
      $region57: #{basic_layer_up_forward.7} parent=47 // pred_check
        %p350 = pneg %p131
      $region58: #{basic_layer_up_forward.7} parent=47 // pred_check_branch
        %352 = sbr.rel (%p350) target = $region60
      $region59: #{basic_layer_up_forward.7} parent=47 // pred_region
        %s353 = smul.u32 4, %s17
        %p354 = scmp.lt.s32.totalorder %s353, 7
        %s355 = scalar_select %p354, %s353, 7
        %s356 = smul.addr %s355, 8
        %s357 = scalar_lea.vmem %s4, %s356
        %s358 = smul.u32 4, %s17
      $region60: #{basic_layer_up_forward.7} parent=47 // pred_fallthru
        _
    $region48: #{basic_layer_up_forward.7} parent=5 // pred_fallthru
      _
    %p359 = scmp.le.s32.totalorder 1, %s17
    %p360 = scmp.lt.s32.totalorder %s17, 3
    %p361 = pnand %p359, %p360
    %p362 = pneg %p361
    // Predicated region
    $region61: #{basic_layer_up_forward.7} parent=5 // pred_check
      _
    $region62: #{basic_layer_up_forward.7} parent=5 // pred_check_branch
      %364 = sbr.rel (%p361) target = $region64
    $region63: #{basic_layer_up_forward.7} parent=5 // pred_region
      %s365 = ssub.s32 %s17, 1
      %s366 = smul.u32 4, %s22
      %p367 = scmp.lt.s32.totalorder %s366, 7
      %s368 = scalar_select %p367, %s366, 7
      %s369 = smul.addr %s368, 4
      %s370 = scalar_lea.vmem %s0, %s369
      %p371 = pneg %p43
      %p372 = pneg %p40
      %p373 = pneg %p64
      %p374 = pneg %p61
      %p375 = pneg %p85
      %p376 = pneg %p82
      %s377 = smul.u32 4, %s22
      %p378 = scmp.lt.s32.totalorder %s377, 7
      %s379 = scalar_select %p378, %s377, 7
      %s380 = smul.addr %s379, 8
      %s381 = scalar_lea.vmem %s3, %s380
      %p382 = pneg %p111
      %p383 = pneg %p108
      %s384 = smul.u32 4, %s22
      %p385 = scmp.lt.s32.totalorder %s384, 7
      %s386 = scalar_select %p385, %s384, 7
      %s387 = smul.addr %s386, 8
      %s388 = scalar_lea.vmem %s4, %s387
      %p389 = pneg %p137
      %p390 = pneg %p134
      %p391 = pneg %p158
      %p392 = pneg %p155
      %p393 = pneg %p179
      %p394 = pneg %p176
      %p395 = pneg %p200
      %p396 = pneg %p197
      %p397 = pneg %p221
      %p398 = pneg %p218
      %p399 = pneg %p242
      %p400 = pneg %p239
      %p401 = pneg %p263
      %p402 = pneg %p260
      %p403 = pneg %p289
      %p404 = pneg %p286
      %s405 = smul.u32 4, %s22
      %p406 = scmp.lt.s32.totalorder %s405, 7
      %s407 = scalar_select %p406, %s405, 7
      %s408 = smul.addr %s407, 8
      %s409 = scalar_lea.vmem %s11, %s408
      %s410 = smul.u32 4, %s22
      %p411 = scmp.lt.s32.totalorder %s410, 7
      %s412 = scalar_select %p411, %s410, 7
      %s413 = smul.addr %s412, 4
      %s414 = scalar_lea.vmem %s0, %s413
      %s415 = smul.u32 4, %s22
      %s416 = smul.u32 4, %s22
      %p417 = scmp.lt.s32.totalorder %s416, 7
      %s418 = scalar_select %p417, %s416, 7
      %s419 = smul.addr %s418, 8
      %s420 = scalar_lea.vmem %s3, %s419
      %s421 = smul.u32 4, %s22
      %s422 = smul.u32 4, %s22
      %p423 = scmp.lt.s32.totalorder %s422, 7
      %s424 = scalar_select %p423, %s422, 7
      %s425 = smul.addr %s424, 8
      %s426 = scalar_lea.vmem %s4, %s425
      %s427 = smul.u32 4, %s22
      %s428 = smul.u32 4, %s22
      %p429 = scmp.lt.s32.totalorder %s428, 7
      %s430 = scalar_select %p429, %s428, 7
      %s431 = smul.addr %s430, 8
      %s432 = scalar_lea.vmem %s11, %s431
      %s433 = smul.u32 4, %s22
      %v435 = vld [vmem:[%s420] sm:$0xff]
      %v436 = vld [vmem:[%s420 + $0x8] sm:$0xff]
      %v437 = vld [vmem:[%s420 + $0x10] sm:$0xff]
      %v438 = vld [vmem:[%s420 + $0x18] sm:$0xff]
      %v439 = vld [vmem:[%s426] sm:$0xff]
      %v440 = vld [vmem:[%s426 + $0x8] sm:$0xff]
      %v441 = vld [vmem:[%s426 + $0x10] sm:$0xff]
      %v442 = vld [vmem:[%s426 + $0x18] sm:$0xff]
      %v443 = vadd.f32 %v435, %v439
      %v444 = vadd.f32 %v436, %v440
      %v445 = vadd.f32 %v437, %v441
      %v446 = vadd.f32 %v438, %v442
      %v447 = vld [vmem:[%s414] sm:$0xf]
      %v448 = vld [vmem:[%s414 + $0x4] sm:$0xf]
      %v449 = vld [vmem:[%s414 + $0x8] sm:$0xf]
      %v450 = vld [vmem:[%s414 + $0xc] sm:$0xf]
      %v451 = vld [vmem:[%s1] sm:$0xf]
      %v452 = vld [vmem:[%s1 + $0x4] sm:$0xf]
      %v453 = vld [vmem:[%s1 + $0x8] sm:$0xf]
      %v454 = vld [vmem:[%s1 + $0xc] sm:$0xf]
      %v455 = vld [vmem:[%s2] sm:$0x1]
      %v457 = vperm.slane %v455, 0
      %v463 = vunpack.c.l.b16 %v447
      %v464 = vunpack.c.l.b16 %v448
      %v465 = vunpack.c.l.b16 %v449
      %v466 = vunpack.c.l.b16 %v450
      %v467 = vpack.c.b16 %v464, %v463
      %v468 = vpack.c.b16 %v466, %v465
      %v473 = vunpack.c.l.b16 %v451
      %v474 = vunpack.c.l.b16 %v452
      %v475 = vunpack.c.l.b16 %v453
      %v476 = vunpack.c.l.b16 %v454
      %v477 = vpack.c.b16 %v474, %v473
      %v478 = vpack.c.b16 %v476, %v475
      %vm481 = vcmask 261120
      %v483 = vsel %vm481, %v467, 0
      %v486 = vsel %vm481, %v468, 0
      %488 = vmatpush.bf16.msra.mxu0 0
      %489 = vmatpush.bf16.msra.mxu0 0
      %490 = vmatpush.bf16.msra.mxu0 0
      %491 = vmatpush.bf16.msra.mxu0 0
      %492 = vmatpush.bf16.msra.mxu0 0
      %493 = vmatpush.bf16.msra.mxu0 0
      %494 = vmatpush.bf16.msra.mxu0 %v478
      %495 = vmatpush.bf16.msra.mxu0 %v477
      %496 = vmatmul.bf16.gmra.mxu0 %v483
      %v497 = vpop.f32.mrf.mxu0
      %v498 = vadd.f32 %v457, %v497
      %v499 = vpop.f32.mrf.mxu0
      %v500 = vadd.f32 %v457, %v499
      %501 = vmatmul.bf16.gmra.mxu0 %v486
      %v502 = vpop.f32.mrf.mxu0
      %v503 = vadd.f32 %v457, %v502
      %v504 = vpop.f32.mrf.mxu0
      %v505 = vadd.f32 %v457, %v504
      %506 = vdwg.mxu0
      %v507 = vadd.f32 %v498, %v443
      %v508 = vadd.f32 %v500, %v444
      %v509 = vadd.f32 %v503, %v445
      %v510 = vadd.f32 %v505, %v446
      %v511 = vld [vmem:[%s5] sm:$0x1]
      %v512 = vld [vmem:[%s6] sm:$0x1]
      %v513 = vsel %vm481, %v507, 0.0
      %514 = vadd.xlane.f32.xlu0 %v513
      %v515 = vpop.xlane.xlu0 %514
      %v516 = vsel %vm481, %v508, 0.0
      %517 = vadd.xlane.f32.xlu0 %v516
      %v518 = vpop.xlane.xlu0 %517
      %v519 = vsel %vm481, %v509, 0.0
      %520 = vadd.xlane.f32.xlu0 %v519
      %v521 = vpop.xlane.xlu0 %520
      %v522 = vsel %vm481, %v510, 0.0
      %523 = vadd.xlane.f32.xlu0 %v522
      %v524 = vpop.xlane.xlu0 %523
      %v525 = vrcp.pop 32.0
      %v526 = vmul.f32 32.0, %v525
      %v527 = vsub.f32 1.0, %v526
      %v528 = vmul.f32 %v525, %v527
      %v529 = vadd.f32 %v525, %v528
      %vm530 = vweird.f32 %v525
      %v531 = vsel %vm530, %v525, %v529
      %v532 = vmul.f32 %v515, %v531
      %v533 = vmul.f32 %v518, %v531
      %v534 = vmul.f32 %v521, %v531
      %v535 = vmul.f32 %v524, %v531
      %v536 = vsub.f32 %v507, %v532
      %v537 = vsub.f32 %v508, %v533
      %v538 = vsub.f32 %v509, %v534
      %v539 = vsub.f32 %v510, %v535
      %v540 = vmul.f32 %v536, %v536
      %v541 = vmul.f32 %v537, %v537
      %v542 = vmul.f32 %v538, %v538
      %v543 = vmul.f32 %v539, %v539
      %v544 = vsel %vm481, %v540, 0.0
      %545 = vadd.xlane.f32.xlu0 %v544
      %v546 = vpop.xlane.xlu0 %545
      %v547 = vsel %vm481, %v541, 0.0
      %548 = vadd.xlane.f32.xlu0 %v547
      %v549 = vpop.xlane.xlu0 %548
      %v550 = vsel %vm481, %v542, 0.0
      %551 = vadd.xlane.f32.xlu0 %v550
      %v552 = vpop.xlane.xlu0 %551
      %v553 = vsel %vm481, %v543, 0.0
      %554 = vadd.xlane.f32.xlu0 %v553
      %v555 = vpop.xlane.xlu0 %554
      %v556 = vmul.f32 %v546, %v531
      %v557 = vmul.f32 %v549, %v531
      %v558 = vmul.f32 %v552, %v531
      %v559 = vmul.f32 %v555, %v531
      %v560 = vadd.f32 %v556, 1e-05
      %v561 = vadd.f32 %v557, 1e-05
      %v562 = vadd.f32 %v558, 1e-05
      %v563 = vadd.f32 %v559, 1e-05
      %v564 = vrsqrt.pop %v560
      %v565 = vmul.f32 %v564, %v560
      %v566 = vmul.f32 %v565, %v564
      %v567 = vmul.f32 0.5, %v566
      %v568 = vsub.f32 1.5, %v567
      %v569 = vmul.f32 %v564, %v568
      %vm570 = vweird.f32 %v560
      %vm571 = vweird.f32 %v564
      %vm572 = vmor %vm570, %vm571
      %v573 = vsel %vm572, %v564, %v569
      %v574 = vrsqrt.pop %v561
      %v575 = vmul.f32 %v574, %v561
      %v576 = vmul.f32 %v575, %v574
      %v577 = vmul.f32 0.5, %v576
      %v578 = vsub.f32 1.5, %v577
      %v579 = vmul.f32 %v574, %v578
      %vm580 = vweird.f32 %v561
      %vm581 = vweird.f32 %v574
      %vm582 = vmor %vm580, %vm581
      %v583 = vsel %vm582, %v574, %v579
      %v584 = vrsqrt.pop %v562
      %v585 = vmul.f32 %v584, %v562
      %v586 = vmul.f32 %v585, %v584
      %v587 = vmul.f32 0.5, %v586
      %v588 = vsub.f32 1.5, %v587
      %v589 = vmul.f32 %v584, %v588
      %vm590 = vweird.f32 %v562
      %vm591 = vweird.f32 %v584
      %vm592 = vmor %vm590, %vm591
      %v593 = vsel %vm592, %v584, %v589
      %v594 = vrsqrt.pop %v563
      %v595 = vmul.f32 %v594, %v563
      %v596 = vmul.f32 %v595, %v594
      %v597 = vmul.f32 0.5, %v596
      %v598 = vsub.f32 1.5, %v597
      %v599 = vmul.f32 %v594, %v598
      %vm600 = vweird.f32 %v563
      %vm601 = vweird.f32 %v594
      %vm602 = vmor %vm600, %vm601
      %v603 = vsel %vm602, %v594, %v599
      %v604 = vmul.f32 %v536, %v573
      %v605 = vmul.f32 %v537, %v583
      %v606 = vmul.f32 %v538, %v593
      %v607 = vmul.f32 %v539, %v603
      %v609 = vperm.slane %v511, 0
      %v611 = vmul.f32 %v604, %v609
      %v612 = vmul.f32 %v605, %v609
      %v613 = vmul.f32 %v606, %v609
      %v614 = vmul.f32 %v607, %v609
      %v616 = vperm.slane %v512, 0
      %v618 = vadd.f32 %v611, %v616
      %v619 = vadd.f32 %v612, %v616
      %v620 = vadd.f32 %v613, %v616
      %v621 = vadd.f32 %v614, %v616
      %v622 = vpack.c.bf16 %v619, %v618
      %v623 = vpack.c.bf16 %v621, %v620
      %v624 = vld [vmem:[%s7] sm:$0xf]
      %v625 = vld [vmem:[%s7 + $0x4] sm:$0xf]
      %v626 = vld [vmem:[%s7 + $0x8] sm:$0xf]
      %v627 = vld [vmem:[%s7 + $0xc] sm:$0xf]
      %v628 = vld [vmem:[%s8] sm:$0x1]
      %v630 = vperm.slane %v628, 0
      %v636 = vunpack.c.l.b16 %v624
      %v637 = vunpack.c.l.b16 %v625
      %v638 = vunpack.c.l.b16 %v626
      %v639 = vunpack.c.l.b16 %v627
      %v640 = vpack.c.b16 %v637, %v636
      %v641 = vpack.c.b16 %v639, %v638
      %v645 = vsel %vm481, %v622, 0
      %v648 = vsel %vm481, %v623, 0
      %650 = vmatpush.bf16.msra.mxu0 0
      %651 = vmatpush.bf16.msra.mxu0 0
      %652 = vmatpush.bf16.msra.mxu0 0
      %653 = vmatpush.bf16.msra.mxu0 0
      %654 = vmatpush.bf16.msra.mxu0 0
      %655 = vmatpush.bf16.msra.mxu0 0
      %656 = vmatpush.bf16.msra.mxu0 %v641
      %657 = vmatpush.bf16.msra.mxu0 %v640
      %658 = vmatmul.bf16.gmra.mxu0 %v645
      %v659 = vpop.f32.mrf.mxu0
      %v660 = vadd.f32 %v630, %v659
      %v661 = vpop.f32.mrf.mxu0
      %v662 = vadd.f32 %v630, %v661
      %663 = vmatmul.bf16.gmra.mxu0 %v648
      %v664 = vpop.f32.mrf.mxu0
      %v665 = vadd.f32 %v630, %v664
      %v666 = vpop.f32.mrf.mxu0
      %v667 = vadd.f32 %v630, %v666
      %668 = vdwg.mxu0
      %v669 = vmul.f32 %v660, 0.5
      %v670 = vmul.f32 %v662, 0.5
      %v671 = vmul.f32 %v665, 0.5
      %v672 = vmul.f32 %v667, 0.5
      %v673 = vmul.f32 %v660, 0.044715
      %v674 = vmul.f32 %v662, 0.044715
      %v675 = vmul.f32 %v665, 0.044715
      %v676 = vmul.f32 %v667, 0.044715
      %v677 = vmul.f32 %v673, %v660
      %v678 = vmul.f32 %v674, %v662
      %v679 = vmul.f32 %v675, %v665
      %v680 = vmul.f32 %v676, %v667
      %v681 = vmul.f32 %v677, %v660
      %v682 = vmul.f32 %v678, %v662
      %v683 = vmul.f32 %v679, %v665
      %v684 = vmul.f32 %v680, %v667
      %v685 = vadd.f32 %v660, %v681
      %v686 = vadd.f32 %v662, %v682
      %v687 = vadd.f32 %v665, %v683
      %v688 = vadd.f32 %v667, %v684
      %v689 = vmul.f32 %v685, 0.7978846
      %v690 = vmul.f32 %v686, 0.7978846
      %v691 = vmul.f32 %v687, 0.7978846
      %v692 = vmul.f32 %v688, 0.7978846
      %v693 = vtanh.pop %v689
      %v694 = vtanh.pop %v690
      %v695 = vtanh.pop %v691
      %v696 = vtanh.pop %v692
      %v697 = vadd.f32 %v693, 1.0
      %v698 = vadd.f32 %v694, 1.0
      %v699 = vadd.f32 %v695, 1.0
      %v700 = vadd.f32 %v696, 1.0
      %v701 = vmul.f32 %v669, %v697
      %v702 = vmul.f32 %v670, %v698
      %v703 = vmul.f32 %v671, %v699
      %v704 = vmul.f32 %v672, %v700
      %v705 = vpack.c.bf16 %v702, %v701
      %v706 = vpack.c.bf16 %v704, %v703
      %v707 = vld [vmem:[%s9] sm:$0xf]
      %v708 = vld [vmem:[%s9 + $0x4] sm:$0xf]
      %v709 = vld [vmem:[%s9 + $0x8] sm:$0xf]
      %v710 = vld [vmem:[%s9 + $0xc] sm:$0xf]
      %v711 = vld [vmem:[%s9 + $0x10] sm:$0xf]
      %v712 = vld [vmem:[%s9 + $0x14] sm:$0xf]
      %v713 = vld [vmem:[%s9 + $0x18] sm:$0xf]
      %v714 = vld [vmem:[%s9 + $0x1c] sm:$0xf]
      %v715 = vld [vmem:[%s9 + $0x20] sm:$0xf]
      %v716 = vld [vmem:[%s9 + $0x24] sm:$0xf]
      %v717 = vld [vmem:[%s9 + $0x28] sm:$0xf]
      %v718 = vld [vmem:[%s9 + $0x2c] sm:$0xf]
      %v719 = vld [vmem:[%s9 + $0x30] sm:$0xf]
      %v720 = vld [vmem:[%s9 + $0x34] sm:$0xf]
      %v721 = vld [vmem:[%s9 + $0x38] sm:$0xf]
      %v722 = vld [vmem:[%s9 + $0x3c] sm:$0xf]
      %v723 = vld [vmem:[%s10] sm:$0x1]
      %v725 = vperm.slane %v723, 0
      %v743 = vunpack.c.l.b16 %v707
      %v744 = vunpack.c.l.b16 %v708
      %v745 = vunpack.c.l.b16 %v709
      %v746 = vunpack.c.l.b16 %v710
      %v747 = vunpack.c.l.b16 %v711
      %v748 = vunpack.c.l.b16 %v712
      %v749 = vunpack.c.l.b16 %v713
      %v750 = vunpack.c.l.b16 %v714
      %v751 = vunpack.c.l.b16 %v715
      %v752 = vunpack.c.l.b16 %v716
      %v753 = vunpack.c.l.b16 %v717
      %v754 = vunpack.c.l.b16 %v718
      %v755 = vunpack.c.l.b16 %v719
      %v756 = vunpack.c.l.b16 %v720
      %v757 = vunpack.c.l.b16 %v721
      %v758 = vunpack.c.l.b16 %v722
      %v759 = vpack.c.b16 %v744, %v743
      %v760 = vpack.c.b16 %v746, %v745
      %v761 = vpack.c.b16 %v748, %v747
      %v762 = vpack.c.b16 %v750, %v749
      %v763 = vpack.c.b16 %v752, %v751
      %v764 = vpack.c.b16 %v754, %v753
      %v765 = vpack.c.b16 %v756, %v755
      %v766 = vpack.c.b16 %v758, %v757
      %775 = vmatpush.bf16.msra.mxu0 %v766
      %776 = vmatpush.bf16.msra.mxu0 %v765
      %777 = vmatpush.bf16.msra.mxu0 %v764
      %778 = vmatpush.bf16.msra.mxu0 %v763
      %779 = vmatpush.bf16.msra.mxu0 %v762
      %780 = vmatpush.bf16.msra.mxu0 %v761
      %781 = vmatpush.bf16.msra.mxu0 %v760
      %782 = vmatpush.bf16.msra.mxu0 %v759
      %783 = vmatmul.bf16.gmra.mxu0 %v705
      %v784 = vpop.f32.mrf.mxu0
      %v785 = vadd.f32 %v725, %v784
      %v786 = vpop.f32.mrf.mxu0
      %v787 = vadd.f32 %v725, %v786
      %788 = vmatmul.bf16.gmra.mxu0 %v706
      %v789 = vpop.f32.mrf.mxu0
      %v790 = vadd.f32 %v725, %v789
      %v791 = vpop.f32.mrf.mxu0
      %v792 = vadd.f32 %v725, %v791
      %793 = vdwg.mxu0
      %v794 = vadd.f32 %v507, %v785
      %v795 = vadd.f32 %v508, %v787
      %v796 = vadd.f32 %v509, %v790
      %v797 = vadd.f32 %v510, %v792
      %798 = vst.msk [vmem:[%s432] sm:$0xff] %vm481, %v794
      %799 = vst.msk [vmem:[%s432 + $0x8] sm:$0xff] %vm481, %v795
      %800 = vst.msk [vmem:[%s432 + $0x10] sm:$0xff] %vm481, %v796
      %801 = vst.msk [vmem:[%s432 + $0x18] sm:$0xff] %vm481, %v797
      %s802 = smul.u32 4, %s22
      %p803 = scmp.lt.s32.totalorder %s802, 7
      %s804 = scalar_select %p803, %s802, 7
      %s805 = smul.addr %s804, 8
      %s806 = scalar_lea.vmem %s11, %s805
      // Predicated region
      $region65: #{basic_layer_up_forward.7} parent=63 // pred_check
        %p807 = pneg %p286
      $region66: #{basic_layer_up_forward.7} parent=63 // pred_check_branch
        %809 = sbr.rel (%p807) target = $region68
      $region67: #{basic_layer_up_forward.7} parent=63 // pred_region
        %s810 = smul.u32 4, %s22
      $region68: #{basic_layer_up_forward.7} parent=63 // pred_fallthru
        _
    $region64: #{basic_layer_up_forward.7} parent=5 // pred_fallthru
      _
    %p811 = scmp.le.s32.totalorder 2, %s17
    // Predicated region
    $region69: #{basic_layer_up_forward.7} parent=5 // pred_check
      %p812 = pneg %p811
    $region70: #{basic_layer_up_forward.7} parent=5 // pred_check_branch
      %814 = sbr.rel (%p812) target = $region72
    $region71: #{basic_layer_up_forward.7} parent=5 // pred_region
      %s815 = ssub.s32 %s17, 2
      // Predicated region
      $region73: #{basic_layer_up_forward.7} parent=71 // pred_check
        %p816 = pneg %p292
      $region74: #{basic_layer_up_forward.7} parent=71 // pred_check_branch
        %818 = sbr.rel (%p816) target = $region76
      $region75: #{basic_layer_up_forward.7} parent=71 // pred_region
        %s819 = smul.u32 4, %s23
        %p820 = scmp.lt.s32.totalorder %s819, 7
        %s821 = scalar_select %p820, %s819, 7
        %s822 = smul.addr %s821, 8
        %s823 = scalar_lea.vmem %s11, %s822
      $region76: #{basic_layer_up_forward.7} parent=71 // pred_fallthru
        _
    $region72: #{basic_layer_up_forward.7} parent=5 // pred_fallthru
      _
  $region6: #{basic_layer_up_forward.7} parent=0 // loop_footer
    %s21 = sadd.s32 1, %s17
  $region7: #{basic_layer_up_forward.7} parent=0 // loop_footer_branch
    %16 = sbr.rel target = $region3
  $region8: #{basic_layer_up_forward.7} parent=0 // loop_exit
    _

// kernel: basic_layer_up_forward.8
$region0: #{basic_layer_up_forward.8}
  #allocation0 [shape = 'u32[]', space=smem, size = 0x4, offset = 0x4, fixed_abs, tag = 'smem constant byte address 0x4 - core index']
  #allocation1 [shape = 'u32[72,128]{1,0:T(1,128)}', space=vmem, size = 0x9000, scoped, tag = 'internal scratch']
  %s0 = inlined_call_operand.vmem [shape: f32[8,8,32], index: 0, kind: input, shape index: {}]
  %s1 = inlined_call_operand.vmem [shape: f32[1,32], index: 1, kind: input, shape index: {}]
  %s2 = inlined_call_operand.vmem [shape: f32[1,32], index: 2, kind: input, shape index: {}]
  %s3 = inlined_call_operand.vmem [shape: bf16[32,96], index: 3, kind: input, shape index: {}]
  %s4 = inlined_call_operand.vmem [shape: f32[1,96], index: 4, kind: input, shape index: {}]
  %s5 = inlined_call_operand.vmem [shape: f32[2,8,8], index: 5, kind: input, shape index: {}]
  %s6 = inlined_call_operand.vmem [shape: f32[8,8,8], index: 6, kind: input, shape index: {}]
  %s7 = inlined_call_operand.vmem [shape: bf16[8,8,32], index: 7, kind: output, shape index: {}]
  %s8 = sld [smem:[#allocation0]]
  $region61: #{basic_layer_up_forward.8} parent=0
    _
  %s10 = ssub.s32 1, %s8
  %s11 = scalar_select 0, %s10, %s8
  loop: start=0, step=1, limit=4
  $region2: #{basic_layer_up_forward.8} parent=0 // loop_pre_header
    _
  $region3: #{basic_layer_up_forward.8} parent=0 // loop_header
    %s13 = sphi 0, %s17
    %p14 = scmp.ge.s32.totalorder %s13, 4
    %s23 = sphi 0, %s25
    %s26 = sphi 0, %s23
    %s27 = sphi 0, %s26
    %s43 = sphi 0, %s27
    %s47 = sphi 0, %s47
    %s49 = sphi 0, %s47
    %s50 = sphi 0, %s49
    %s64 = sphi 0, %s50
    %s68 = sphi 0, %s68
    %s70 = sphi 0, %s68
    %s71 = sphi 0, %s70
    %s85 = sphi 0, %s71
    %s89 = sphi 0, %s89
    %s91 = sphi 0, %s89
    %s92 = sphi 0, %s91
    %s106 = sphi 0, %s92
    %s110 = sphi 0, %s110
    %s112 = sphi 0, %s110
    %s113 = sphi 0, %s112
    %s127 = sphi 0, %s113
    %s131 = sphi 0, %s131
    %s133 = sphi 0, %s131
    %s134 = sphi 0, %s133
    %s148 = sphi 0, %s134
    %s178 = sphi 0, %s180
    %s181 = sphi 0, %s178
    %s182 = sphi 0, %s181
    %s198 = sphi 0, %s182
    %s204 = sphi 0, %s206
    %s207 = sphi 0, %s204
    %s208 = sphi 0, %s207
    %s224 = sphi 0, %s208
  $region4: #{basic_layer_up_forward.8} parent=0 // loop_header_branch
    %16 = sbr.rel (%p14) target = $region8
  $region5: #{basic_layer_up_forward.8} parent=0 // loop_body
    %s18 = ssub.s32 %s13, 1
    %s19 = ssub.s32 %s13, 2
    %s20 = sadd.s32 %s13, 1
    %s21 = ssub.s32 %s13, %s20
    %p22 = scmp.eq.s32.totalorder %s21, 0
    %s24 = sadd.s32 %s23, 1
    %s25 = scalar_select %p22, %s23, %s24
    %p28 = pneg %p22
    %p29 = scmp.eq.s32.totalorder %s13, 1
    %p30 = por %p28, %p29
    %p31 = scmp.ne.s32.totalorder %s23, %s26
    %p32 = scmp.eq.s32.totalorder %s13, 0
    %p33 = por %p31, %p32
    %p34 = scmp.ne.s32.totalorder %s23, %s26
    %p35 = scmp.eq.s32.totalorder %s18, 1
    %p36 = por %p34, %p35
    %p37 = scmp.ne.s32.totalorder %s26, %s27
    %p38 = scmp.eq.s32.totalorder %s18, 0
    %p39 = por %p37, %p38
    %p40 = scmp.ne.s32.totalorder %s26, %s27
    %p41 = scmp.eq.s32.totalorder %s19, 1
    %p42 = por %p40, %p41
    %p44 = scmp.ne.s32.totalorder %s27, %s43
    %p45 = scmp.eq.s32.totalorder %s19, 0
    %p46 = por %p44, %p45
    %s48 = sadd.s32 %s47, 1
    %p51 = scmp.eq.s32.totalorder %s13, 1
    %p52 = scmp.ne.s32.totalorder %s47, %s49
    %p53 = scmp.eq.s32.totalorder %s13, 0
    %p54 = por %p52, %p53
    %p55 = scmp.ne.s32.totalorder %s47, %s49
    %p56 = scmp.eq.s32.totalorder %s18, 1
    %p57 = por %p55, %p56
    %p58 = scmp.ne.s32.totalorder %s49, %s50
    %p59 = scmp.eq.s32.totalorder %s18, 0
    %p60 = por %p58, %p59
    %p61 = scmp.ne.s32.totalorder %s49, %s50
    %p62 = scmp.eq.s32.totalorder %s19, 1
    %p63 = por %p61, %p62
    %p65 = scmp.ne.s32.totalorder %s50, %s64
    %p66 = scmp.eq.s32.totalorder %s19, 0
    %p67 = por %p65, %p66
    %s69 = sadd.s32 %s68, 1
    %p72 = scmp.eq.s32.totalorder %s13, 1
    %p73 = scmp.ne.s32.totalorder %s68, %s70
    %p74 = scmp.eq.s32.totalorder %s13, 0
    %p75 = por %p73, %p74
    %p76 = scmp.ne.s32.totalorder %s68, %s70
    %p77 = scmp.eq.s32.totalorder %s18, 1
    %p78 = por %p76, %p77
    %p79 = scmp.ne.s32.totalorder %s70, %s71
    %p80 = scmp.eq.s32.totalorder %s18, 0
    %p81 = por %p79, %p80
    %p82 = scmp.ne.s32.totalorder %s70, %s71
    %p83 = scmp.eq.s32.totalorder %s19, 1
    %p84 = por %p82, %p83
    %p86 = scmp.ne.s32.totalorder %s71, %s85
    %p87 = scmp.eq.s32.totalorder %s19, 0
    %p88 = por %p86, %p87
    %s90 = sadd.s32 %s89, 1
    %p93 = scmp.eq.s32.totalorder %s13, 1
    %p94 = scmp.ne.s32.totalorder %s89, %s91
    %p95 = scmp.eq.s32.totalorder %s13, 0
    %p96 = por %p94, %p95
    %p97 = scmp.ne.s32.totalorder %s89, %s91
    %p98 = scmp.eq.s32.totalorder %s18, 1
    %p99 = por %p97, %p98
    %p100 = scmp.ne.s32.totalorder %s91, %s92
    %p101 = scmp.eq.s32.totalorder %s18, 0
    %p102 = por %p100, %p101
    %p103 = scmp.ne.s32.totalorder %s91, %s92
    %p104 = scmp.eq.s32.totalorder %s19, 1
    %p105 = por %p103, %p104
    %p107 = scmp.ne.s32.totalorder %s92, %s106
    %p108 = scmp.eq.s32.totalorder %s19, 0
    %p109 = por %p107, %p108
    %s111 = sadd.s32 %s110, 1
    %p114 = scmp.eq.s32.totalorder %s13, 1
    %p115 = scmp.ne.s32.totalorder %s110, %s112
    %p116 = scmp.eq.s32.totalorder %s13, 0
    %p117 = por %p115, %p116
    %p118 = scmp.ne.s32.totalorder %s110, %s112
    %p119 = scmp.eq.s32.totalorder %s18, 1
    %p120 = por %p118, %p119
    %p121 = scmp.ne.s32.totalorder %s112, %s113
    %p122 = scmp.eq.s32.totalorder %s18, 0
    %p123 = por %p121, %p122
    %p124 = scmp.ne.s32.totalorder %s112, %s113
    %p125 = scmp.eq.s32.totalorder %s19, 1
    %p126 = por %p124, %p125
    %p128 = scmp.ne.s32.totalorder %s113, %s127
    %p129 = scmp.eq.s32.totalorder %s19, 0
    %p130 = por %p128, %p129
    %s132 = sadd.s32 %s131, 1
    %p135 = scmp.eq.s32.totalorder %s13, 1
    %p136 = scmp.ne.s32.totalorder %s131, %s133
    %p137 = scmp.eq.s32.totalorder %s13, 0
    %p138 = por %p136, %p137
    %p139 = scmp.ne.s32.totalorder %s131, %s133
    %p140 = scmp.eq.s32.totalorder %s18, 1
    %p141 = por %p139, %p140
    %p142 = scmp.ne.s32.totalorder %s133, %s134
    %p143 = scmp.eq.s32.totalorder %s18, 0
    %p144 = por %p142, %p143
    %p145 = scmp.ne.s32.totalorder %s133, %s134
    %p146 = scmp.eq.s32.totalorder %s19, 1
    %p147 = por %p145, %p146
    %p149 = scmp.ne.s32.totalorder %s134, %s148
    %p150 = scmp.eq.s32.totalorder %s19, 0
    %p151 = por %p149, %p150
    %p152 = scmp.lt.s32.totalorder %s13, 0
    %s153 = ssub.s32 0, %s13
    %s154 = scalar_select %p152, %s153, %s13
    %s155 = sand.u32 %s154, 1
    %s156 = ssub.s32 0, %s155
    %s157 = scalar_select %p152, %s156, %s155
    %p158 = scmp.ne.s32.totalorder %s157, 0
    %p159 = scmp.lt.s32.totalorder %s157, 0
    %p160 = pnand %p159, %p158
    %p161 = pneg %p160
    %s162 = sadd.s32 %s157, 2
    %s163 = scalar_select %p161, %s162, %s157
    %p164 = scmp.lt.s32.totalorder %s20, 0
    %s165 = ssub.s32 0, %s20
    %s166 = scalar_select %p164, %s165, %s20
    %s167 = sand.u32 %s166, 1
    %s168 = ssub.s32 0, %s167
    %s169 = scalar_select %p164, %s168, %s167
    %p170 = scmp.ne.s32.totalorder %s169, 0
    %p171 = scmp.lt.s32.totalorder %s169, 0
    %p172 = pnand %p171, %p170
    %p173 = pneg %p172
    %s174 = sadd.s32 %s169, 2
    %s175 = scalar_select %p173, %s174, %s169
    %s176 = ssub.s32 %s163, %s175
    %p177 = scmp.eq.s32.totalorder %s176, 0
    %s179 = sadd.s32 %s178, 1
    %s180 = scalar_select %p177, %s178, %s179
    %p183 = pneg %p177
    %p184 = scmp.eq.s32.totalorder %s13, 1
    %p185 = por %p183, %p184
    %p186 = scmp.ne.s32.totalorder %s178, %s181
    %p187 = scmp.eq.s32.totalorder %s13, 0
    %p188 = por %p186, %p187
    %p189 = scmp.ne.s32.totalorder %s178, %s181
    %p190 = scmp.eq.s32.totalorder %s18, 1
    %p191 = por %p189, %p190
    %p192 = scmp.ne.s32.totalorder %s181, %s182
    %p193 = scmp.eq.s32.totalorder %s18, 0
    %p194 = por %p192, %p193
    %p195 = scmp.ne.s32.totalorder %s181, %s182
    %p196 = scmp.eq.s32.totalorder %s19, 1
    %p197 = por %p195, %p196
    %p199 = scmp.ne.s32.totalorder %s182, %s198
    %p200 = scmp.eq.s32.totalorder %s19, 0
    %p201 = por %p199, %p200
    %s202 = ssub.s32 %s13, %s20
    %p203 = scmp.eq.s32.totalorder %s202, 0
    %s205 = sadd.s32 %s204, 1
    %s206 = scalar_select %p203, %s204, %s205
    %p209 = pneg %p203
    %p210 = scmp.eq.s32.totalorder %s13, 1
    %p211 = por %p209, %p210
    %p212 = scmp.ne.s32.totalorder %s204, %s207
    %p213 = scmp.eq.s32.totalorder %s13, 0
    %p214 = por %p212, %p213
    %p215 = scmp.ne.s32.totalorder %s204, %s207
    %p216 = scmp.eq.s32.totalorder %s18, 1
    %p217 = por %p215, %p216
    %p218 = scmp.ne.s32.totalorder %s207, %s208
    %p219 = scmp.eq.s32.totalorder %s18, 0
    %p220 = por %p218, %p219
    %p221 = scmp.ne.s32.totalorder %s207, %s208
    %p222 = scmp.eq.s32.totalorder %s19, 1
    %p223 = por %p221, %p222
    %p225 = scmp.ne.s32.totalorder %s208, %s224
    %p226 = scmp.eq.s32.totalorder %s19, 0
    %p227 = por %p225, %p226
    %p228 = scmp.le.s32.totalorder 1, %s13
    %p229 = scmp.lt.s32.totalorder %s13, 3
    %p230 = pnand %p228, %p229
    %p231 = pneg %p230
    // Predicated region
    $region9: #{basic_layer_up_forward.8} parent=5 // pred_check
      _
    $region10: #{basic_layer_up_forward.8} parent=5 // pred_check_branch
      %233 = sbr.rel (%p230) target = $region12
    $region11: #{basic_layer_up_forward.8} parent=5 // pred_region
      %s234 = ssub.s32 %s13, 1
      // Predicated region
      $region13: #{basic_layer_up_forward.8} parent=11 // pred_check
        %p235 = pneg %p60
      $region14: #{basic_layer_up_forward.8} parent=11 // pred_check_branch
        %237 = sbr.rel (%p235) target = $region16
      $region15: #{basic_layer_up_forward.8} parent=11 // pred_region
        _
      $region16: #{basic_layer_up_forward.8} parent=11 // pred_fallthru
        _
      // Predicated region
      $region17: #{basic_layer_up_forward.8} parent=11 // pred_check
        %p238 = pneg %p81
      $region18: #{basic_layer_up_forward.8} parent=11 // pred_check_branch
        %240 = sbr.rel (%p238) target = $region20
      $region19: #{basic_layer_up_forward.8} parent=11 // pred_region
        _
      $region20: #{basic_layer_up_forward.8} parent=11 // pred_fallthru
        _
      // Predicated region
      $region21: #{basic_layer_up_forward.8} parent=11 // pred_check
        %p241 = pneg %p102
      $region22: #{basic_layer_up_forward.8} parent=11 // pred_check_branch
        %243 = sbr.rel (%p241) target = $region24
      $region23: #{basic_layer_up_forward.8} parent=11 // pred_region
        _
      $region24: #{basic_layer_up_forward.8} parent=11 // pred_fallthru
        _
      // Predicated region
      $region25: #{basic_layer_up_forward.8} parent=11 // pred_check
        %p244 = pneg %p123
      $region26: #{basic_layer_up_forward.8} parent=11 // pred_check_branch
        %246 = sbr.rel (%p244) target = $region28
      $region27: #{basic_layer_up_forward.8} parent=11 // pred_region
        _
      $region28: #{basic_layer_up_forward.8} parent=11 // pred_fallthru
        _
      // Predicated region
      $region29: #{basic_layer_up_forward.8} parent=11 // pred_check
        %p247 = pneg %p144
      $region30: #{basic_layer_up_forward.8} parent=11 // pred_check_branch
        %249 = sbr.rel (%p247) target = $region32
      $region31: #{basic_layer_up_forward.8} parent=11 // pred_region
        _
      $region32: #{basic_layer_up_forward.8} parent=11 // pred_fallthru
        _
    $region12: #{basic_layer_up_forward.8} parent=5 // pred_fallthru
      _
    %p250 = scmp.lt.s32.totalorder %s13, 2
    // Predicated region
    $region33: #{basic_layer_up_forward.8} parent=5 // pred_check
      %p251 = pneg %p250
    $region34: #{basic_layer_up_forward.8} parent=5 // pred_check_branch
      %253 = sbr.rel (%p251) target = $region36
    $region35: #{basic_layer_up_forward.8} parent=5 // pred_region
      // Predicated region
      $region37: #{basic_layer_up_forward.8} parent=35 // pred_check
        %p254 = pneg %p33
      $region38: #{basic_layer_up_forward.8} parent=35 // pred_check_branch
        %256 = sbr.rel (%p254) target = $region40
      $region39: #{basic_layer_up_forward.8} parent=35 // pred_region
        %s257 = smul.u32 4, %s13
        %p258 = scmp.lt.s32.totalorder %s257, 7
        %s259 = scalar_select %p258, %s257, 7
        %s260 = smul.addr %s259, 8
        %s261 = scalar_lea.vmem %s0, %s260
        %s262 = smul.u32 4, %s13
      $region40: #{basic_layer_up_forward.8} parent=35 // pred_fallthru
        _
      // Predicated region
      $region41: #{basic_layer_up_forward.8} parent=35 // pred_check
        %p263 = pneg %p188
      $region42: #{basic_layer_up_forward.8} parent=35 // pred_check_branch
        %265 = sbr.rel (%p263) target = $region44
      $region43: #{basic_layer_up_forward.8} parent=35 // pred_region
        %p266 = scmp.lt.s32.totalorder %s13, 0
        %s267 = ssub.s32 0, %s13
        %s268 = scalar_select %p266, %s267, %s13
        %s269 = sand.u32 %s268, 1
        %s270 = ssub.s32 0, %s269
        %s271 = scalar_select %p266, %s270, %s269
        %p272 = scmp.ne.s32.totalorder %s271, 0
        %p273 = scmp.lt.s32.totalorder %s271, 0
        %p274 = pnand %p273, %p272
        %p275 = pneg %p274
        %s276 = sadd.s32 %s271, 2
        %s277 = scalar_select %p275, %s276, %s271
        %s278 = smul.u32 4, %s277
        %p279 = scmp.lt.s32.totalorder %s278, 7
        %s280 = scalar_select %p279, %s278, 7
        %s281 = smul.addr %s280, 8
        %s282 = scalar_lea.vmem %s6, %s281
        %p283 = scmp.lt.s32.totalorder %s13, 0
        %s284 = ssub.s32 0, %s13
        %s285 = scalar_select %p283, %s284, %s13
        %s286 = sand.u32 %s285, 1
        %s287 = ssub.s32 0, %s286
        %s288 = scalar_select %p283, %s287, %s286
        %p289 = scmp.ne.s32.totalorder %s288, 0
        %p290 = scmp.lt.s32.totalorder %s288, 0
        %p291 = pnand %p290, %p289
        %p292 = pneg %p291
        %s293 = sadd.s32 %s288, 2
        %s294 = scalar_select %p292, %s293, %s288
        %s295 = smul.u32 4, %s294
      $region44: #{basic_layer_up_forward.8} parent=35 // pred_fallthru
        _
    $region36: #{basic_layer_up_forward.8} parent=5 // pred_fallthru
      _
    %p296 = scmp.le.s32.totalorder 1, %s13
    %p297 = scmp.lt.s32.totalorder %s13, 3
    %p298 = pnand %p296, %p297
    %p299 = pneg %p298
    // Predicated region
    $region45: #{basic_layer_up_forward.8} parent=5 // pred_check
      _
    $region46: #{basic_layer_up_forward.8} parent=5 // pred_check_branch
      %301 = sbr.rel (%p298) target = $region48
    $region47: #{basic_layer_up_forward.8} parent=5 // pred_region
      %s302 = ssub.s32 %s13, 1
      %s303 = smul.u32 4, %s18
      %p304 = scmp.lt.s32.totalorder %s303, 7
      %s305 = scalar_select %p304, %s303, 7
      %s306 = smul.addr %s305, 8
      %s307 = scalar_lea.vmem %s0, %s306
      %p308 = pneg %p39
      %p309 = pneg %p36
      %p310 = pneg %p60
      %p311 = pneg %p57
      %p312 = pneg %p81
      %p313 = pneg %p78
      %p314 = pneg %p102
      %p315 = pneg %p99
      %p316 = pneg %p123
      %p317 = pneg %p120
      %p318 = pneg %p144
      %p319 = pneg %p141
      %p320 = scmp.lt.s32.totalorder %s18, 0
      %s321 = ssub.s32 0, %s18
      %s322 = scalar_select %p320, %s321, %s18
      %s323 = sand.u32 %s322, 1
      %s324 = ssub.s32 0, %s323
      %s325 = scalar_select %p320, %s324, %s323
      %p326 = scmp.ne.s32.totalorder %s325, 0
      %p327 = scmp.lt.s32.totalorder %s325, 0
      %p328 = pnand %p327, %p326
      %p329 = pneg %p328
      %s330 = sadd.s32 %s325, 2
      %s331 = scalar_select %p329, %s330, %s325
      %s332 = smul.u32 4, %s331
      %p333 = scmp.lt.s32.totalorder %s332, 7
      %s334 = scalar_select %p333, %s332, 7
      %s335 = smul.addr %s334, 8
      %s336 = scalar_lea.vmem %s6, %s335
      %p337 = pneg %p194
      %p338 = pneg %p191
      %p339 = pneg %p220
      %p340 = pneg %p217
      %s341 = smul.u32 4, %s18
      %p342 = scmp.lt.s32.totalorder %s341, 7
      %s343 = scalar_select %p342, %s341, 7
      %s344 = smul.addr %s343, 4
      %s345 = scalar_lea.vmem %s7, %s344
      %s346 = smul.u32 4, %s18
      %p347 = scmp.lt.s32.totalorder %s346, 7
      %s348 = scalar_select %p347, %s346, 7
      %s349 = smul.addr %s348, 8
      %s350 = scalar_lea.vmem %s0, %s349
      %s351 = smul.u32 4, %s18
      %p352 = scmp.lt.s32.totalorder %s18, 0
      %s353 = ssub.s32 0, %s18
      %s354 = scalar_select %p352, %s353, %s18
      %s355 = sand.u32 %s354, 1
      %s356 = ssub.s32 0, %s355
      %s357 = scalar_select %p352, %s356, %s355
      %p358 = scmp.ne.s32.totalorder %s357, 0
      %p359 = scmp.lt.s32.totalorder %s357, 0
      %p360 = pnand %p359, %p358
      %p361 = pneg %p360
      %s362 = sadd.s32 %s357, 2
      %s363 = scalar_select %p361, %s362, %s357
      %s364 = smul.u32 4, %s363
      %p365 = scmp.lt.s32.totalorder %s364, 7
      %s366 = scalar_select %p365, %s364, 7
      %s367 = smul.addr %s366, 8
      %s368 = scalar_lea.vmem %s6, %s367
      %p369 = scmp.lt.s32.totalorder %s18, 0
      %s370 = ssub.s32 0, %s18
      %s371 = scalar_select %p369, %s370, %s18
      %s372 = sand.u32 %s371, 1
      %s373 = ssub.s32 0, %s372
      %s374 = scalar_select %p369, %s373, %s372
      %p375 = scmp.ne.s32.totalorder %s374, 0
      %p376 = scmp.lt.s32.totalorder %s374, 0
      %p377 = pnand %p376, %p375
      %p378 = pneg %p377
      %s379 = sadd.s32 %s374, 2
      %s380 = scalar_select %p378, %s379, %s374
      %s381 = smul.u32 4, %s380
      %s382 = smul.u32 4, %s18
      %p383 = scmp.lt.s32.totalorder %s382, 7
      %s384 = scalar_select %p383, %s382, 7
      %s385 = smul.addr %s384, 4
      %s386 = scalar_lea.vmem %s7, %s385
      %s387 = smul.u32 4, %s18
      %v389 = vld [vmem:[%s368] sm:$0xff]
      %v390 = vld [vmem:[%s368 + $0x8] sm:$0xff]
      %v391 = vld [vmem:[%s368 + $0x10] sm:$0xff]
      %v392 = vld [vmem:[%s368 + $0x18] sm:$0xff]
      %v393 = vld [vmem:[%s350] sm:$0xff]
      %v394 = vld [vmem:[%s350 + $0x8] sm:$0xff]
      %v395 = vld [vmem:[%s350 + $0x10] sm:$0xff]
      %v396 = vld [vmem:[%s350 + $0x18] sm:$0xff]
      %v397 = vld [vmem:[%s1] sm:$0x1]
      %v398 = vld [vmem:[%s2] sm:$0x1]
      %vm399 = vcmask 261120
      %v400 = vsel %vm399, %v393, 0.0
      %401 = vadd.xlane.f32.xlu0 %v400
      %v402 = vpop.xlane.xlu0 %401
      %v403 = vsel %vm399, %v394, 0.0
      %404 = vadd.xlane.f32.xlu0 %v403
      %v405 = vpop.xlane.xlu0 %404
      %v406 = vsel %vm399, %v395, 0.0
      %407 = vadd.xlane.f32.xlu0 %v406
      %v408 = vpop.xlane.xlu0 %407
      %v409 = vsel %vm399, %v396, 0.0
      %410 = vadd.xlane.f32.xlu0 %v409
      %v411 = vpop.xlane.xlu0 %410
      %v412 = vrcp.pop 32.0
      %v413 = vmul.f32 32.0, %v412
      %v414 = vsub.f32 1.0, %v413
      %v415 = vmul.f32 %v412, %v414
      %v416 = vadd.f32 %v412, %v415
      %vm417 = vweird.f32 %v412
      %v418 = vsel %vm417, %v412, %v416
      %v419 = vmul.f32 %v402, %v418
      %v420 = vmul.f32 %v405, %v418
      %v421 = vmul.f32 %v408, %v418
      %v422 = vmul.f32 %v411, %v418
      %v423 = vsub.f32 %v393, %v419
      %v424 = vsub.f32 %v394, %v420
      %v425 = vsub.f32 %v395, %v421
      %v426 = vsub.f32 %v396, %v422
      %v427 = vmul.f32 %v423, %v423
      %v428 = vmul.f32 %v424, %v424
      %v429 = vmul.f32 %v425, %v425
      %v430 = vmul.f32 %v426, %v426
      %v431 = vsel %vm399, %v427, 0.0
      %432 = vadd.xlane.f32.xlu0 %v431
      %v433 = vpop.xlane.xlu0 %432
      %v434 = vsel %vm399, %v428, 0.0
      %435 = vadd.xlane.f32.xlu0 %v434
      %v436 = vpop.xlane.xlu0 %435
      %v437 = vsel %vm399, %v429, 0.0
      %438 = vadd.xlane.f32.xlu0 %v437
      %v439 = vpop.xlane.xlu0 %438
      %v440 = vsel %vm399, %v430, 0.0
      %441 = vadd.xlane.f32.xlu0 %v440
      %v442 = vpop.xlane.xlu0 %441
      %v443 = vmul.f32 %v433, %v418
      %v444 = vmul.f32 %v436, %v418
      %v445 = vmul.f32 %v439, %v418
      %v446 = vmul.f32 %v442, %v418
      %v447 = vadd.f32 %v443, 1e-05
      %v448 = vadd.f32 %v444, 1e-05
      %v449 = vadd.f32 %v445, 1e-05
      %v450 = vadd.f32 %v446, 1e-05
      %v451 = vrsqrt.pop %v447
      %v452 = vmul.f32 %v451, %v447
      %v453 = vmul.f32 %v452, %v451
      %v454 = vmul.f32 0.5, %v453
      %v455 = vsub.f32 1.5, %v454
      %v456 = vmul.f32 %v451, %v455
      %vm457 = vweird.f32 %v447
      %vm458 = vweird.f32 %v451
      %vm459 = vmor %vm457, %vm458
      %v460 = vsel %vm459, %v451, %v456
      %v461 = vrsqrt.pop %v448
      %v462 = vmul.f32 %v461, %v448
      %v463 = vmul.f32 %v462, %v461
      %v464 = vmul.f32 0.5, %v463
      %v465 = vsub.f32 1.5, %v464
      %v466 = vmul.f32 %v461, %v465
      %vm467 = vweird.f32 %v448
      %vm468 = vweird.f32 %v461
      %vm469 = vmor %vm467, %vm468
      %v470 = vsel %vm469, %v461, %v466
      %v471 = vrsqrt.pop %v449
      %v472 = vmul.f32 %v471, %v449
      %v473 = vmul.f32 %v472, %v471
      %v474 = vmul.f32 0.5, %v473
      %v475 = vsub.f32 1.5, %v474
      %v476 = vmul.f32 %v471, %v475
      %vm477 = vweird.f32 %v449
      %vm478 = vweird.f32 %v471
      %vm479 = vmor %vm477, %vm478
      %v480 = vsel %vm479, %v471, %v476
      %v481 = vrsqrt.pop %v450
      %v482 = vmul.f32 %v481, %v450
      %v483 = vmul.f32 %v482, %v481
      %v484 = vmul.f32 0.5, %v483
      %v485 = vsub.f32 1.5, %v484
      %v486 = vmul.f32 %v481, %v485
      %vm487 = vweird.f32 %v450
      %vm488 = vweird.f32 %v481
      %vm489 = vmor %vm487, %vm488
      %v490 = vsel %vm489, %v481, %v486
      %v491 = vmul.f32 %v423, %v460
      %v492 = vmul.f32 %v424, %v470
      %v493 = vmul.f32 %v425, %v480
      %v494 = vmul.f32 %v426, %v490
      %v496 = vperm.slane %v397, 0
      %v498 = vmul.f32 %v491, %v496
      %v499 = vmul.f32 %v492, %v496
      %v500 = vmul.f32 %v493, %v496
      %v501 = vmul.f32 %v494, %v496
      %v503 = vperm.slane %v398, 0
      %v505 = vadd.f32 %v498, %v503
      %v506 = vadd.f32 %v499, %v503
      %v507 = vadd.f32 %v500, %v503
      %v508 = vadd.f32 %v501, %v503
      %v509 = vpack.c.bf16 %v506, %v505
      %v510 = vpack.c.bf16 %v508, %v507
      %v511 = vld [vmem:[%s3] sm:$0xf]
      %v512 = vld [vmem:[%s3 + $0x4] sm:$0xf]
      %v513 = vld [vmem:[%s3 + $0x8] sm:$0xf]
      %v514 = vld [vmem:[%s3 + $0xc] sm:$0xf]
      %v515 = vld [vmem:[%s4] sm:$0x1]
      %v517 = vperm.slane %v515, 0
      %v523 = vunpack.c.l.b16 %v511
      %v524 = vunpack.c.l.b16 %v512
      %v525 = vunpack.c.l.b16 %v513
      %v526 = vunpack.c.l.b16 %v514
      %v527 = vpack.c.b16 %v524, %v523
      %v528 = vpack.c.b16 %v526, %v525
      %v532 = vsel %vm399, %v509, 0
      %v535 = vsel %vm399, %v510, 0
      %537 = vmatpush.bf16.msra.mxu0 0
      %538 = vmatpush.bf16.msra.mxu0 0
      %539 = vmatpush.bf16.msra.mxu0 0
      %540 = vmatpush.bf16.msra.mxu0 0
      %541 = vmatpush.bf16.msra.mxu0 0
      %542 = vmatpush.bf16.msra.mxu0 0
      %543 = vmatpush.bf16.msra.mxu0 %v528
      %544 = vmatpush.bf16.msra.mxu0 %v527
      %545 = vmatmul.bf16.gmra.mxu0 %v532
      %v546 = vpop.f32.mrf.mxu0
      %v547 = vadd.f32 %v517, %v546
      %v548 = vpop.f32.mrf.mxu0
      %v549 = vadd.f32 %v517, %v548
      %550 = vmatmul.bf16.gmra.mxu0 %v535
      %v551 = vpop.f32.mrf.mxu0
      %v552 = vadd.f32 %v517, %v551
      %v553 = vpop.f32.mrf.mxu0
      %v554 = vadd.f32 %v517, %v553
      %555 = vdwg.mxu0
      %v556 = vld [vmem:[%s5] sm:$0xff]
      %v557 = vld [vmem:[%s5 + $0x8] sm:$0xff]
      %v558 = vpack.c.bf16 %v547, %v547
      %v559 = vpack.c.bf16 %v549, %v549
      %v560 = vpack.c.bf16 %v552, %v552
      %v561 = vpack.c.bf16 %v554, %v554
      %v563 = vunpack.c.l.b16 %v558
      %v564 = vpack.c.b16 %v563, %v563
      %565 = vrot.lane.b32.xlu0 %v564, 96
      %v566 = vpop.permute.xlu0 %565
      %vm567 = vcmask 130048
      %v569 = vsel %vm567, %v558, 0
      %v572 = vsel %vm567, %v566, 0
      %574 = vmatpush.bf16.xpose.msra.mxu0 0
      %575 = vmatpush.bf16.xpose.msra.mxu0 0
      %576 = vmatpush.bf16.xpose.msra.mxu0 0
      %577 = vmatpush.bf16.xpose.msra.mxu0 0
      %578 = vmatpush.bf16.xpose.msra.mxu0 0
      %579 = vmatpush.bf16.xpose.msra.mxu0 0
      %580 = vmatpush.bf16.xpose.msra.mxu0 0
      %581 = vmatpush.bf16.xpose.msra.mxu0 %v572
      %582 = vmatmul.bf16.gmra.mxu0 %v569
      %v583 = vpop.f32.mrf.mxu0
      %v584 = vadd.f32 0.0, %v583
      %v585 = vpop.f32.mrf.mxu0
      %586 = vdwg.mxu0
      %v588 = vunpack.c.l.b16 %v559
      %v589 = vpack.c.b16 %v588, %v588
      %590 = vrot.lane.b32.xlu0 %v589, 96
      %v591 = vpop.permute.xlu0 %590
      %v593 = vsel %vm567, %v559, 0
      %v596 = vsel %vm567, %v591, 0
      %598 = vmatpush.bf16.xpose.msra.mxu0 0
      %599 = vmatpush.bf16.xpose.msra.mxu0 0
      %600 = vmatpush.bf16.xpose.msra.mxu0 0
      %601 = vmatpush.bf16.xpose.msra.mxu0 0
      %602 = vmatpush.bf16.xpose.msra.mxu0 0
      %603 = vmatpush.bf16.xpose.msra.mxu0 0
      %604 = vmatpush.bf16.xpose.msra.mxu0 0
      %605 = vmatpush.bf16.xpose.msra.mxu0 %v596
      %606 = vmatmul.bf16.gmra.mxu0 %v593
      %v607 = vpop.f32.mrf.mxu0
      %v608 = vadd.f32 0.0, %v607
      %v609 = vpop.f32.mrf.mxu0
      %610 = vdwg.mxu0
      %v612 = vunpack.c.l.b16 %v560
      %v613 = vpack.c.b16 %v612, %v612
      %614 = vrot.lane.b32.xlu0 %v613, 96
      %v615 = vpop.permute.xlu0 %614
      %v617 = vsel %vm567, %v560, 0
      %v620 = vsel %vm567, %v615, 0
      %622 = vmatpush.bf16.xpose.msra.mxu0 0
      %623 = vmatpush.bf16.xpose.msra.mxu0 0
      %624 = vmatpush.bf16.xpose.msra.mxu0 0
      %625 = vmatpush.bf16.xpose.msra.mxu0 0
      %626 = vmatpush.bf16.xpose.msra.mxu0 0
      %627 = vmatpush.bf16.xpose.msra.mxu0 0
      %628 = vmatpush.bf16.xpose.msra.mxu0 0
      %629 = vmatpush.bf16.xpose.msra.mxu0 %v620
      %630 = vmatmul.bf16.gmra.mxu0 %v617
      %v631 = vpop.f32.mrf.mxu0
      %v632 = vadd.f32 0.0, %v631
      %v633 = vpop.f32.mrf.mxu0
      %634 = vdwg.mxu0
      %v636 = vunpack.c.l.b16 %v561
      %v637 = vpack.c.b16 %v636, %v636
      %638 = vrot.lane.b32.xlu0 %v637, 96
      %v639 = vpop.permute.xlu0 %638
      %v641 = vsel %vm567, %v561, 0
      %v644 = vsel %vm567, %v639, 0
      %646 = vmatpush.bf16.xpose.msra.mxu0 0
      %647 = vmatpush.bf16.xpose.msra.mxu0 0
      %648 = vmatpush.bf16.xpose.msra.mxu0 0
      %649 = vmatpush.bf16.xpose.msra.mxu0 0
      %650 = vmatpush.bf16.xpose.msra.mxu0 0
      %651 = vmatpush.bf16.xpose.msra.mxu0 0
      %652 = vmatpush.bf16.xpose.msra.mxu0 0
      %653 = vmatpush.bf16.xpose.msra.mxu0 %v644
      %654 = vmatmul.bf16.gmra.mxu0 %v641
      %v655 = vpop.f32.mrf.mxu0
      %v656 = vadd.f32 0.0, %v655
      %v657 = vpop.f32.mrf.mxu0
      %658 = vdwg.mxu0
      %v659 = vmul.f32 %v584, 0.25
      %v660 = vmul.f32 %v608, 0.25
      %v661 = vmul.f32 %v632, 0.25
      %v662 = vmul.f32 %v656, 0.25
      %v663 = vadd.f32 %v659, %v556
      %v664 = vadd.f32 %v660, %v556
      %v665 = vadd.f32 %v661, %v556
      %v666 = vadd.f32 %v662, %v556
      %v667 = vadd.f32 %v663, %v389
      %v668 = vadd.f32 %v664, %v390
      %v669 = vadd.f32 %v665, %v391
      %v670 = vadd.f32 %v666, %v392
      %vm671 = vcmask 64512
      %v672 = vsel %vm671, %v667, -inf
      %673 = vmax.xlane.f32.xlu0 %v672
      %v674 = vpop.xlane.xlu0 %673
      %v675 = vsel %vm671, %v668, -inf
      %676 = vmax.xlane.f32.xlu0 %v675
      %v677 = vpop.xlane.xlu0 %676
      %v678 = vsel %vm671, %v669, -inf
      %679 = vmax.xlane.f32.xlu0 %v678
      %v680 = vpop.xlane.xlu0 %679
      %v681 = vsel %vm671, %v670, -inf
      %682 = vmax.xlane.f32.xlu0 %v681
      %v683 = vpop.xlane.xlu0 %682
      %v684 = vsub.f32 %v667, %v674
      %v685 = vsub.f32 %v668, %v677
      %v686 = vsub.f32 %v669, %v680
      %v687 = vsub.f32 %v670, %v683
      %v688 = vmul.f32 %v684, 1.442695
      %v689 = vpow.pop %v688
      %v690 = vmul.f32 %v685, 1.442695
      %v691 = vpow.pop %v690
      %v692 = vmul.f32 %v686, 1.442695
      %v693 = vpow.pop %v692
      %v694 = vmul.f32 %v687, 1.442695
      %v695 = vpow.pop %v694
      %v696 = vsel %vm671, %v689, 0.0
      %697 = vadd.xlane.f32.xlu0 %v696
      %v698 = vpop.xlane.xlu0 %697
      %v699 = vsel %vm671, %v691, 0.0
      %700 = vadd.xlane.f32.xlu0 %v699
      %v701 = vpop.xlane.xlu0 %700
      %v702 = vsel %vm671, %v693, 0.0
      %703 = vadd.xlane.f32.xlu0 %v702
      %v704 = vpop.xlane.xlu0 %703
      %v705 = vsel %vm671, %v695, 0.0
      %706 = vadd.xlane.f32.xlu0 %v705
      %v707 = vpop.xlane.xlu0 %706
      %v708 = vrcp.pop %v698
      %v709 = vrcp.pop %v701
      %v710 = vrcp.pop %v704
      %v711 = vrcp.pop %v707
      %v712 = vmul.f32 %v689, %v708
      %v713 = vmul.f32 %v691, %v709
      %v714 = vmul.f32 %v693, %v710
      %v715 = vmul.f32 %v695, %v711
      %v716 = vpack.c.bf16 %v712, %v712
      %v717 = vpack.c.bf16 %v713, %v713
      %v718 = vpack.c.bf16 %v714, %v714
      %v719 = vpack.c.bf16 %v715, %v715
      %720 = vrot.lane.b32.xlu0 %v564, 64
      %v721 = vpop.permute.xlu0 %720
      %v723 = vsel %vm671, %v716, 0
      %vm725 = vcmask 1043456
      %v727 = vsel %vm725, %v721, 0
      %729 = vmatpush.bf16.msra.mxu0 0
      %730 = vmatpush.bf16.msra.mxu0 0
      %731 = vmatpush.bf16.msra.mxu0 0
      %732 = vmatpush.bf16.msra.mxu0 0
      %733 = vmatpush.bf16.msra.mxu0 0
      %734 = vmatpush.bf16.msra.mxu0 0
      %735 = vmatpush.bf16.msra.mxu0 0
      %736 = vmatpush.bf16.msra.mxu0 %v727
      %737 = vmatmul.bf16.gmra.mxu0 %v723
      %v738 = vpop.f32.mrf.mxu0
      %v739 = vadd.f32 0.0, %v738
      %v740 = vpop.f32.mrf.mxu0
      %741 = vdwg.mxu0
      %742 = vrot.lane.b32.xlu0 %v589, 64
      %v743 = vpop.permute.xlu0 %742
      %v745 = vsel %vm671, %v717, 0
      %v748 = vsel %vm725, %v743, 0
      %750 = vmatpush.bf16.msra.mxu0 0
      %751 = vmatpush.bf16.msra.mxu0 0
      %752 = vmatpush.bf16.msra.mxu0 0
      %753 = vmatpush.bf16.msra.mxu0 0
      %754 = vmatpush.bf16.msra.mxu0 0
      %755 = vmatpush.bf16.msra.mxu0 0
      %756 = vmatpush.bf16.msra.mxu0 0
      %757 = vmatpush.bf16.msra.mxu0 %v748
      %758 = vmatmul.bf16.gmra.mxu0 %v745
      %v759 = vpop.f32.mrf.mxu0
      %v760 = vadd.f32 0.0, %v759
      %v761 = vpop.f32.mrf.mxu0
      %762 = vdwg.mxu0
      %763 = vrot.lane.b32.xlu0 %v613, 64
      %v764 = vpop.permute.xlu0 %763
      %v766 = vsel %vm671, %v718, 0
      %v769 = vsel %vm725, %v764, 0
      %771 = vmatpush.bf16.msra.mxu0 0
      %772 = vmatpush.bf16.msra.mxu0 0
      %773 = vmatpush.bf16.msra.mxu0 0
      %774 = vmatpush.bf16.msra.mxu0 0
      %775 = vmatpush.bf16.msra.mxu0 0
      %776 = vmatpush.bf16.msra.mxu0 0
      %777 = vmatpush.bf16.msra.mxu0 0
      %778 = vmatpush.bf16.msra.mxu0 %v769
      %779 = vmatmul.bf16.gmra.mxu0 %v766
      %v780 = vpop.f32.mrf.mxu0
      %v781 = vadd.f32 0.0, %v780
      %v782 = vpop.f32.mrf.mxu0
      %783 = vdwg.mxu0
      %784 = vrot.lane.b32.xlu0 %v637, 64
      %v785 = vpop.permute.xlu0 %784
      %v787 = vsel %vm671, %v719, 0
      %v790 = vsel %vm725, %v785, 0
      %792 = vmatpush.bf16.msra.mxu0 0
      %793 = vmatpush.bf16.msra.mxu0 0
      %794 = vmatpush.bf16.msra.mxu0 0
      %795 = vmatpush.bf16.msra.mxu0 0
      %796 = vmatpush.bf16.msra.mxu0 0
      %797 = vmatpush.bf16.msra.mxu0 0
      %798 = vmatpush.bf16.msra.mxu0 0
      %799 = vmatpush.bf16.msra.mxu0 %v790
      %800 = vmatmul.bf16.gmra.mxu0 %v787
      %v801 = vpop.f32.mrf.mxu0
      %v802 = vadd.f32 0.0, %v801
      %v803 = vpop.f32.mrf.mxu0
      %804 = vdwg.mxu0
      %805 = vrot.lane.b32.xlu0 %v564, 112
      %v806 = vpop.permute.xlu0 %805
      %807 = vrot.lane.b32.xlu0 %v564, 80
      %v808 = vpop.permute.xlu0 %807
      %v810 = vsel %vm567, %v806, 0
      %v813 = vsel %vm567, %v808, 0
      %815 = vmatpush.bf16.xpose.msra.mxu0 0
      %816 = vmatpush.bf16.xpose.msra.mxu0 0
      %817 = vmatpush.bf16.xpose.msra.mxu0 0
      %818 = vmatpush.bf16.xpose.msra.mxu0 0
      %819 = vmatpush.bf16.xpose.msra.mxu0 0
      %820 = vmatpush.bf16.xpose.msra.mxu0 0
      %821 = vmatpush.bf16.xpose.msra.mxu0 0
      %822 = vmatpush.bf16.xpose.msra.mxu0 %v813
      %823 = vmatmul.bf16.gmra.mxu0 %v810
      %v824 = vpop.f32.mrf.mxu0
      %v825 = vadd.f32 0.0, %v824
      %v826 = vpop.f32.mrf.mxu0
      %827 = vdwg.mxu0
      %828 = vrot.lane.b32.xlu0 %v589, 112
      %v829 = vpop.permute.xlu0 %828
      %830 = vrot.lane.b32.xlu0 %v589, 80
      %v831 = vpop.permute.xlu0 %830
      %v833 = vsel %vm567, %v829, 0
      %v836 = vsel %vm567, %v831, 0
      %838 = vmatpush.bf16.xpose.msra.mxu0 0
      %839 = vmatpush.bf16.xpose.msra.mxu0 0
      %840 = vmatpush.bf16.xpose.msra.mxu0 0
      %841 = vmatpush.bf16.xpose.msra.mxu0 0
      %842 = vmatpush.bf16.xpose.msra.mxu0 0
      %843 = vmatpush.bf16.xpose.msra.mxu0 0
      %844 = vmatpush.bf16.xpose.msra.mxu0 0
      %845 = vmatpush.bf16.xpose.msra.mxu0 %v836
      %846 = vmatmul.bf16.gmra.mxu0 %v833
      %v847 = vpop.f32.mrf.mxu0
      %v848 = vadd.f32 0.0, %v847
      %v849 = vpop.f32.mrf.mxu0
      %850 = vdwg.mxu0
      %851 = vrot.lane.b32.xlu0 %v613, 112
      %v852 = vpop.permute.xlu0 %851
      %853 = vrot.lane.b32.xlu0 %v613, 80
      %v854 = vpop.permute.xlu0 %853
      %v856 = vsel %vm567, %v852, 0
      %v859 = vsel %vm567, %v854, 0
      %861 = vmatpush.bf16.xpose.msra.mxu0 0
      %862 = vmatpush.bf16.xpose.msra.mxu0 0
      %863 = vmatpush.bf16.xpose.msra.mxu0 0
      %864 = vmatpush.bf16.xpose.msra.mxu0 0
      %865 = vmatpush.bf16.xpose.msra.mxu0 0
      %866 = vmatpush.bf16.xpose.msra.mxu0 0
      %867 = vmatpush.bf16.xpose.msra.mxu0 0
      %868 = vmatpush.bf16.xpose.msra.mxu0 %v859
      %869 = vmatmul.bf16.gmra.mxu0 %v856
      %v870 = vpop.f32.mrf.mxu0
      %v871 = vadd.f32 0.0, %v870
      %v872 = vpop.f32.mrf.mxu0
      %873 = vdwg.mxu0
      %874 = vrot.lane.b32.xlu0 %v637, 112
      %v875 = vpop.permute.xlu0 %874
      %876 = vrot.lane.b32.xlu0 %v637, 80
      %v877 = vpop.permute.xlu0 %876
      %v879 = vsel %vm567, %v875, 0
      %v882 = vsel %vm567, %v877, 0
      %884 = vmatpush.bf16.xpose.msra.mxu0 0
      %885 = vmatpush.bf16.xpose.msra.mxu0 0
      %886 = vmatpush.bf16.xpose.msra.mxu0 0
      %887 = vmatpush.bf16.xpose.msra.mxu0 0
      %888 = vmatpush.bf16.xpose.msra.mxu0 0
      %889 = vmatpush.bf16.xpose.msra.mxu0 0
      %890 = vmatpush.bf16.xpose.msra.mxu0 0
      %891 = vmatpush.bf16.xpose.msra.mxu0 %v882
      %892 = vmatmul.bf16.gmra.mxu0 %v879
      %v893 = vpop.f32.mrf.mxu0
      %v894 = vadd.f32 0.0, %v893
      %v895 = vpop.f32.mrf.mxu0
      %896 = vdwg.mxu0
      %v897 = vmul.f32 %v825, 0.25
      %v898 = vmul.f32 %v848, 0.25
      %v899 = vmul.f32 %v871, 0.25
      %v900 = vmul.f32 %v894, 0.25
      %v901 = vadd.f32 %v897, %v557
      %v902 = vadd.f32 %v898, %v557
      %v903 = vadd.f32 %v899, %v557
      %v904 = vadd.f32 %v900, %v557
      %v905 = vadd.f32 %v901, %v389
      %v906 = vadd.f32 %v902, %v390
      %v907 = vadd.f32 %v903, %v391
      %v908 = vadd.f32 %v904, %v392
      %v909 = vsel %vm671, %v905, -inf
      %910 = vmax.xlane.f32.xlu0 %v909
      %v911 = vpop.xlane.xlu0 %910
      %v912 = vsel %vm671, %v906, -inf
      %913 = vmax.xlane.f32.xlu0 %v912
      %v914 = vpop.xlane.xlu0 %913
      %v915 = vsel %vm671, %v907, -inf
      %916 = vmax.xlane.f32.xlu0 %v915
      %v917 = vpop.xlane.xlu0 %916
      %v918 = vsel %vm671, %v908, -inf
      %919 = vmax.xlane.f32.xlu0 %v918
      %v920 = vpop.xlane.xlu0 %919
      %v921 = vsub.f32 %v905, %v911
      %v922 = vsub.f32 %v906, %v914
      %v923 = vsub.f32 %v907, %v917
      %v924 = vsub.f32 %v908, %v920
      %v925 = vmul.f32 %v921, 1.442695
      %v926 = vpow.pop %v925
      %v927 = vmul.f32 %v922, 1.442695
      %v928 = vpow.pop %v927
      %v929 = vmul.f32 %v923, 1.442695
      %v930 = vpow.pop %v929
      %v931 = vmul.f32 %v924, 1.442695
      %v932 = vpow.pop %v931
      %v933 = vsel %vm671, %v926, 0.0
      %934 = vadd.xlane.f32.xlu0 %v933
      %v935 = vpop.xlane.xlu0 %934
      %v936 = vsel %vm671, %v928, 0.0
      %937 = vadd.xlane.f32.xlu0 %v936
      %v938 = vpop.xlane.xlu0 %937
      %v939 = vsel %vm671, %v930, 0.0
      %940 = vadd.xlane.f32.xlu0 %v939
      %v941 = vpop.xlane.xlu0 %940
      %v942 = vsel %vm671, %v932, 0.0
      %943 = vadd.xlane.f32.xlu0 %v942
      %v944 = vpop.xlane.xlu0 %943
      %v945 = vrcp.pop %v935
      %v946 = vrcp.pop %v938
      %v947 = vrcp.pop %v941
      %v948 = vrcp.pop %v944
      %v949 = vmul.f32 %v926, %v945
      %v950 = vmul.f32 %v928, %v946
      %v951 = vmul.f32 %v930, %v947
      %v952 = vmul.f32 %v932, %v948
      %v953 = vpack.c.bf16 %v949, %v949
      %v954 = vpack.c.bf16 %v950, %v950
      %v955 = vpack.c.bf16 %v951, %v951
      %v956 = vpack.c.bf16 %v952, %v952
      %957 = vrot.lane.b32.xlu0 %v564, 48
      %v958 = vpop.permute.xlu0 %957
      %v960 = vsel %vm671, %v953, 0
      %v963 = vsel %vm725, %v958, 0
      %965 = vmatpush.bf16.msra.mxu0 0
      %966 = vmatpush.bf16.msra.mxu0 0
      %967 = vmatpush.bf16.msra.mxu0 0
      %968 = vmatpush.bf16.msra.mxu0 0
      %969 = vmatpush.bf16.msra.mxu0 0
      %970 = vmatpush.bf16.msra.mxu0 0
      %971 = vmatpush.bf16.msra.mxu0 0
      %972 = vmatpush.bf16.msra.mxu0 %v963
      %973 = vmatmul.bf16.gmra.mxu0 %v960
      %v974 = vpop.f32.mrf.mxu0
      %v975 = vadd.f32 0.0, %v974
      %v976 = vpop.f32.mrf.mxu0
      %977 = vdwg.mxu0
      %978 = vrot.lane.b32.xlu0 %v589, 48
      %v979 = vpop.permute.xlu0 %978
      %v981 = vsel %vm671, %v954, 0
      %v984 = vsel %vm725, %v979, 0
      %986 = vmatpush.bf16.msra.mxu0 0
      %987 = vmatpush.bf16.msra.mxu0 0
      %988 = vmatpush.bf16.msra.mxu0 0
      %989 = vmatpush.bf16.msra.mxu0 0
      %990 = vmatpush.bf16.msra.mxu0 0
      %991 = vmatpush.bf16.msra.mxu0 0
      %992 = vmatpush.bf16.msra.mxu0 0
      %993 = vmatpush.bf16.msra.mxu0 %v984
      %994 = vmatmul.bf16.gmra.mxu0 %v981
      %v995 = vpop.f32.mrf.mxu0
      %v996 = vadd.f32 0.0, %v995
      %v997 = vpop.f32.mrf.mxu0
      %998 = vdwg.mxu0
      %999 = vrot.lane.b32.xlu0 %v613, 48
      %v1000 = vpop.permute.xlu0 %999
      %v1002 = vsel %vm671, %v955, 0
      %v1005 = vsel %vm725, %v1000, 0
      %1007 = vmatpush.bf16.msra.mxu0 0
      %1008 = vmatpush.bf16.msra.mxu0 0
      %1009 = vmatpush.bf16.msra.mxu0 0
      %1010 = vmatpush.bf16.msra.mxu0 0
      %1011 = vmatpush.bf16.msra.mxu0 0
      %1012 = vmatpush.bf16.msra.mxu0 0
      %1013 = vmatpush.bf16.msra.mxu0 0
      %1014 = vmatpush.bf16.msra.mxu0 %v1005
      %1015 = vmatmul.bf16.gmra.mxu0 %v1002
      %v1016 = vpop.f32.mrf.mxu0
      %v1017 = vadd.f32 0.0, %v1016
      %v1018 = vpop.f32.mrf.mxu0
      %1019 = vdwg.mxu0
      %1020 = vrot.lane.b32.xlu0 %v637, 48
      %v1021 = vpop.permute.xlu0 %1020
      %v1023 = vsel %vm671, %v956, 0
      %v1026 = vsel %vm725, %v1021, 0
      %1028 = vmatpush.bf16.msra.mxu0 0
      %1029 = vmatpush.bf16.msra.mxu0 0
      %1030 = vmatpush.bf16.msra.mxu0 0
      %1031 = vmatpush.bf16.msra.mxu0 0
      %1032 = vmatpush.bf16.msra.mxu0 0
      %1033 = vmatpush.bf16.msra.mxu0 0
      %1034 = vmatpush.bf16.msra.mxu0 0
      %1035 = vmatpush.bf16.msra.mxu0 %v1026
      %1036 = vmatmul.bf16.gmra.mxu0 %v1023
      %v1037 = vpop.f32.mrf.mxu0
      %v1038 = vadd.f32 0.0, %v1037
      %v1039 = vpop.f32.mrf.mxu0
      %1040 = vdwg.mxu0
      %1045 = vrot.lane.b32.xlu0 %v975, 16
      %v1046 = vpop.permute.xlu0 %1045
      %1047 = vrot.lane.b32.xlu0 %v996, 16
      %v1048 = vpop.permute.xlu0 %1047
      %1049 = vrot.lane.b32.xlu0 %v1017, 16
      %v1050 = vpop.permute.xlu0 %1049
      %1051 = vrot.lane.b32.xlu0 %v1038, 16
      %v1052 = vpop.permute.xlu0 %1051
      %v1057 = vsel %vm567, %v739, %v1046
      %v1058 = vsel %vm567, %v760, %v1048
      %v1059 = vsel %vm567, %v781, %v1050
      %v1060 = vsel %vm567, %v802, %v1052
      %v1061 = vpack.c.bf16 %v1057, %v1057
      %v1062 = vpack.c.bf16 %v1058, %v1058
      %v1063 = vpack.c.bf16 %v1059, %v1059
      %v1064 = vpack.c.bf16 %v1060, %v1060
      %vm1065 = vcmask 257024
      %1066 = vst.msk [vmem:[%s386] sm:$0xf] %vm1065, %v1061
      %1067 = vst.msk [vmem:[%s386 + $0x4] sm:$0xf] %vm1065, %v1062
      %1068 = vst.msk [vmem:[%s386 + $0x8] sm:$0xf] %vm1065, %v1063
      %1069 = vst.msk [vmem:[%s386 + $0xc] sm:$0xf] %vm1065, %v1064
      %s1070 = smul.u32 4, %s18
      %p1071 = scmp.lt.s32.totalorder %s1070, 7
      %s1072 = scalar_select %p1071, %s1070, 7
      %s1073 = smul.addr %s1072, 4
      %s1074 = scalar_lea.vmem %s7, %s1073
      // Predicated region
      $region49: #{basic_layer_up_forward.8} parent=47 // pred_check
        %p1075 = pneg %p217
      $region50: #{basic_layer_up_forward.8} parent=47 // pred_check_branch
        %1077 = sbr.rel (%p1075) target = $region52
      $region51: #{basic_layer_up_forward.8} parent=47 // pred_region
        %s1078 = smul.u32 4, %s18
      $region52: #{basic_layer_up_forward.8} parent=47 // pred_fallthru
        _
    $region48: #{basic_layer_up_forward.8} parent=5 // pred_fallthru
      _
    %p1079 = scmp.le.s32.totalorder 2, %s13
    // Predicated region
    $region53: #{basic_layer_up_forward.8} parent=5 // pred_check
      %p1080 = pneg %p1079
    $region54: #{basic_layer_up_forward.8} parent=5 // pred_check_branch
      %1082 = sbr.rel (%p1080) target = $region56
    $region55: #{basic_layer_up_forward.8} parent=5 // pred_region
      %s1083 = ssub.s32 %s13, 2
      // Predicated region
      $region57: #{basic_layer_up_forward.8} parent=55 // pred_check
        %p1084 = pneg %p223
      $region58: #{basic_layer_up_forward.8} parent=55 // pred_check_branch
        %1086 = sbr.rel (%p1084) target = $region60
      $region59: #{basic_layer_up_forward.8} parent=55 // pred_region
        %s1087 = smul.u32 4, %s19
        %p1088 = scmp.lt.s32.totalorder %s1087, 7
        %s1089 = scalar_select %p1088, %s1087, 7
        %s1090 = smul.addr %s1089, 4
        %s1091 = scalar_lea.vmem %s7, %s1090
      $region60: #{basic_layer_up_forward.8} parent=55 // pred_fallthru
        _
    $region56: #{basic_layer_up_forward.8} parent=5 // pred_fallthru
      _
  $region6: #{basic_layer_up_forward.8} parent=0 // loop_footer
    %s17 = sadd.s32 1, %s13
  $region7: #{basic_layer_up_forward.8} parent=0 // loop_footer_branch
    %12 = sbr.rel target = $region3
  $region8: #{basic_layer_up_forward.8} parent=0 // loop_exit
    _

// kernel: basic_layer_up_forward.9
$region0: #{basic_layer_up_forward.9}
  #allocation0 [shape = 'u32[]', space=smem, size = 0x4, offset = 0x4, fixed_abs, tag = 'smem constant byte address 0x4 - core index']
  #allocation1 [shape = 'u32[72,128]{1,0:T(1,128)}', space=vmem, size = 0x9000, scoped, tag = 'internal scratch']
  %s0 = inlined_call_operand.vmem [shape: bf16[64,32], index: 0, kind: input, shape index: {}]
  %s1 = inlined_call_operand.vmem [shape: bf16[32,32], index: 1, kind: input, shape index: {}]
  %s2 = inlined_call_operand.vmem [shape: f32[1,32], index: 2, kind: input, shape index: {}]
  %s3 = inlined_call_operand.vmem [shape: f32[64,32], index: 3, kind: input, shape index: {}]
  %s4 = inlined_call_operand.vmem [shape: f32[1,32], index: 4, kind: input, shape index: {}]
  %s5 = inlined_call_operand.vmem [shape: f32[1,32], index: 5, kind: input, shape index: {}]
  %s6 = inlined_call_operand.vmem [shape: bf16[32,128], index: 6, kind: input, shape index: {}]
  %s7 = inlined_call_operand.vmem [shape: f32[1,128], index: 7, kind: input, shape index: {}]
  %s8 = inlined_call_operand.vmem [shape: bf16[128,32], index: 8, kind: input, shape index: {}]
  %s9 = inlined_call_operand.vmem [shape: f32[1,32], index: 9, kind: input, shape index: {}]
  %s10 = inlined_call_operand.vmem [shape: f32[64,32], index: 10, kind: output, shape index: {}]
  %s11 = sld [smem:[#allocation0]]
  $region73: #{basic_layer_up_forward.9} parent=0
    _
  %s13 = ssub.s32 1, %s11
  %s14 = scalar_select 0, %s13, %s11
  loop: start=0, step=1, limit=4
  $region2: #{basic_layer_up_forward.9} parent=0 // loop_pre_header
    _
  $region3: #{basic_layer_up_forward.9} parent=0 // loop_header
    %s16 = sphi 0, %s20
    %p17 = scmp.ge.s32.totalorder %s16, 4
    %s26 = sphi 0, %s28
    %s29 = sphi 0, %s26
    %s30 = sphi 0, %s29
    %s46 = sphi 0, %s30
    %s50 = sphi 0, %s50
    %s52 = sphi 0, %s50
    %s53 = sphi 0, %s52
    %s67 = sphi 0, %s53
    %s71 = sphi 0, %s71
    %s73 = sphi 0, %s71
    %s74 = sphi 0, %s73
    %s88 = sphi 0, %s74
    %s94 = sphi 0, %s96
    %s97 = sphi 0, %s94
    %s98 = sphi 0, %s97
    %s114 = sphi 0, %s98
    %s118 = sphi 0, %s118
    %s120 = sphi 0, %s118
    %s121 = sphi 0, %s120
    %s135 = sphi 0, %s121
    %s139 = sphi 0, %s139
    %s141 = sphi 0, %s139
    %s142 = sphi 0, %s141
    %s156 = sphi 0, %s142
    %s160 = sphi 0, %s160
    %s162 = sphi 0, %s160
    %s163 = sphi 0, %s162
    %s177 = sphi 0, %s163
    %s181 = sphi 0, %s181
    %s183 = sphi 0, %s181
    %s184 = sphi 0, %s183
    %s198 = sphi 0, %s184
    %s202 = sphi 0, %s202
    %s204 = sphi 0, %s202
    %s205 = sphi 0, %s204
    %s219 = sphi 0, %s205
    %s223 = sphi 0, %s223
    %s225 = sphi 0, %s223
    %s226 = sphi 0, %s225
    %s240 = sphi 0, %s226
    %s246 = sphi 0, %s248
    %s249 = sphi 0, %s246
    %s250 = sphi 0, %s249
    %s266 = sphi 0, %s250
  $region4: #{basic_layer_up_forward.9} parent=0 // loop_header_branch
    %19 = sbr.rel (%p17) target = $region8
  $region5: #{basic_layer_up_forward.9} parent=0 // loop_body
    %s21 = ssub.s32 %s16, 1
    %s22 = ssub.s32 %s16, 2
    %s23 = sadd.s32 %s16, 1
    %s24 = ssub.s32 %s16, %s23
    %p25 = scmp.eq.s32.totalorder %s24, 0
    %s27 = sadd.s32 %s26, 1
    %s28 = scalar_select %p25, %s26, %s27
    %p31 = pneg %p25
    %p32 = scmp.eq.s32.totalorder %s16, 1
    %p33 = por %p31, %p32
    %p34 = scmp.ne.s32.totalorder %s26, %s29
    %p35 = scmp.eq.s32.totalorder %s16, 0
    %p36 = por %p34, %p35
    %p37 = scmp.ne.s32.totalorder %s26, %s29
    %p38 = scmp.eq.s32.totalorder %s21, 1
    %p39 = por %p37, %p38
    %p40 = scmp.ne.s32.totalorder %s29, %s30
    %p41 = scmp.eq.s32.totalorder %s21, 0
    %p42 = por %p40, %p41
    %p43 = scmp.ne.s32.totalorder %s29, %s30
    %p44 = scmp.eq.s32.totalorder %s22, 1
    %p45 = por %p43, %p44
    %p47 = scmp.ne.s32.totalorder %s30, %s46
    %p48 = scmp.eq.s32.totalorder %s22, 0
    %p49 = por %p47, %p48
    %s51 = sadd.s32 %s50, 1
    %p54 = scmp.eq.s32.totalorder %s16, 1
    %p55 = scmp.ne.s32.totalorder %s50, %s52
    %p56 = scmp.eq.s32.totalorder %s16, 0
    %p57 = por %p55, %p56
    %p58 = scmp.ne.s32.totalorder %s50, %s52
    %p59 = scmp.eq.s32.totalorder %s21, 1
    %p60 = por %p58, %p59
    %p61 = scmp.ne.s32.totalorder %s52, %s53
    %p62 = scmp.eq.s32.totalorder %s21, 0
    %p63 = por %p61, %p62
    %p64 = scmp.ne.s32.totalorder %s52, %s53
    %p65 = scmp.eq.s32.totalorder %s22, 1
    %p66 = por %p64, %p65
    %p68 = scmp.ne.s32.totalorder %s53, %s67
    %p69 = scmp.eq.s32.totalorder %s22, 0
    %p70 = por %p68, %p69
    %s72 = sadd.s32 %s71, 1
    %p75 = scmp.eq.s32.totalorder %s16, 1
    %p76 = scmp.ne.s32.totalorder %s71, %s73
    %p77 = scmp.eq.s32.totalorder %s16, 0
    %p78 = por %p76, %p77
    %p79 = scmp.ne.s32.totalorder %s71, %s73
    %p80 = scmp.eq.s32.totalorder %s21, 1
    %p81 = por %p79, %p80
    %p82 = scmp.ne.s32.totalorder %s73, %s74
    %p83 = scmp.eq.s32.totalorder %s21, 0
    %p84 = por %p82, %p83
    %p85 = scmp.ne.s32.totalorder %s73, %s74
    %p86 = scmp.eq.s32.totalorder %s22, 1
    %p87 = por %p85, %p86
    %p89 = scmp.ne.s32.totalorder %s74, %s88
    %p90 = scmp.eq.s32.totalorder %s22, 0
    %p91 = por %p89, %p90
    %s92 = ssub.s32 %s16, %s23
    %p93 = scmp.eq.s32.totalorder %s92, 0
    %s95 = sadd.s32 %s94, 1
    %s96 = scalar_select %p93, %s94, %s95
    %p99 = pneg %p93
    %p100 = scmp.eq.s32.totalorder %s16, 1
    %p101 = por %p99, %p100
    %p102 = scmp.ne.s32.totalorder %s94, %s97
    %p103 = scmp.eq.s32.totalorder %s16, 0
    %p104 = por %p102, %p103
    %p105 = scmp.ne.s32.totalorder %s94, %s97
    %p106 = scmp.eq.s32.totalorder %s21, 1
    %p107 = por %p105, %p106
    %p108 = scmp.ne.s32.totalorder %s97, %s98
    %p109 = scmp.eq.s32.totalorder %s21, 0
    %p110 = por %p108, %p109
    %p111 = scmp.ne.s32.totalorder %s97, %s98
    %p112 = scmp.eq.s32.totalorder %s22, 1
    %p113 = por %p111, %p112
    %p115 = scmp.ne.s32.totalorder %s98, %s114
    %p116 = scmp.eq.s32.totalorder %s22, 0
    %p117 = por %p115, %p116
    %s119 = sadd.s32 %s118, 1
    %p122 = scmp.eq.s32.totalorder %s16, 1
    %p123 = scmp.ne.s32.totalorder %s118, %s120
    %p124 = scmp.eq.s32.totalorder %s16, 0
    %p125 = por %p123, %p124
    %p126 = scmp.ne.s32.totalorder %s118, %s120
    %p127 = scmp.eq.s32.totalorder %s21, 1
    %p128 = por %p126, %p127
    %p129 = scmp.ne.s32.totalorder %s120, %s121
    %p130 = scmp.eq.s32.totalorder %s21, 0
    %p131 = por %p129, %p130
    %p132 = scmp.ne.s32.totalorder %s120, %s121
    %p133 = scmp.eq.s32.totalorder %s22, 1
    %p134 = por %p132, %p133
    %p136 = scmp.ne.s32.totalorder %s121, %s135
    %p137 = scmp.eq.s32.totalorder %s22, 0
    %p138 = por %p136, %p137
    %s140 = sadd.s32 %s139, 1
    %p143 = scmp.eq.s32.totalorder %s16, 1
    %p144 = scmp.ne.s32.totalorder %s139, %s141
    %p145 = scmp.eq.s32.totalorder %s16, 0
    %p146 = por %p144, %p145
    %p147 = scmp.ne.s32.totalorder %s139, %s141
    %p148 = scmp.eq.s32.totalorder %s21, 1
    %p149 = por %p147, %p148
    %p150 = scmp.ne.s32.totalorder %s141, %s142
    %p151 = scmp.eq.s32.totalorder %s21, 0
    %p152 = por %p150, %p151
    %p153 = scmp.ne.s32.totalorder %s141, %s142
    %p154 = scmp.eq.s32.totalorder %s22, 1
    %p155 = por %p153, %p154
    %p157 = scmp.ne.s32.totalorder %s142, %s156
    %p158 = scmp.eq.s32.totalorder %s22, 0
    %p159 = por %p157, %p158
    %s161 = sadd.s32 %s160, 1
    %p164 = scmp.eq.s32.totalorder %s16, 1
    %p165 = scmp.ne.s32.totalorder %s160, %s162
    %p166 = scmp.eq.s32.totalorder %s16, 0
    %p167 = por %p165, %p166
    %p168 = scmp.ne.s32.totalorder %s160, %s162
    %p169 = scmp.eq.s32.totalorder %s21, 1
    %p170 = por %p168, %p169
    %p171 = scmp.ne.s32.totalorder %s162, %s163
    %p172 = scmp.eq.s32.totalorder %s21, 0
    %p173 = por %p171, %p172
    %p174 = scmp.ne.s32.totalorder %s162, %s163
    %p175 = scmp.eq.s32.totalorder %s22, 1
    %p176 = por %p174, %p175
    %p178 = scmp.ne.s32.totalorder %s163, %s177
    %p179 = scmp.eq.s32.totalorder %s22, 0
    %p180 = por %p178, %p179
    %s182 = sadd.s32 %s181, 1
    %p185 = scmp.eq.s32.totalorder %s16, 1
    %p186 = scmp.ne.s32.totalorder %s181, %s183
    %p187 = scmp.eq.s32.totalorder %s16, 0
    %p188 = por %p186, %p187
    %p189 = scmp.ne.s32.totalorder %s181, %s183
    %p190 = scmp.eq.s32.totalorder %s21, 1
    %p191 = por %p189, %p190
    %p192 = scmp.ne.s32.totalorder %s183, %s184
    %p193 = scmp.eq.s32.totalorder %s21, 0
    %p194 = por %p192, %p193
    %p195 = scmp.ne.s32.totalorder %s183, %s184
    %p196 = scmp.eq.s32.totalorder %s22, 1
    %p197 = por %p195, %p196
    %p199 = scmp.ne.s32.totalorder %s184, %s198
    %p200 = scmp.eq.s32.totalorder %s22, 0
    %p201 = por %p199, %p200
    %s203 = sadd.s32 %s202, 1
    %p206 = scmp.eq.s32.totalorder %s16, 1
    %p207 = scmp.ne.s32.totalorder %s202, %s204
    %p208 = scmp.eq.s32.totalorder %s16, 0
    %p209 = por %p207, %p208
    %p210 = scmp.ne.s32.totalorder %s202, %s204
    %p211 = scmp.eq.s32.totalorder %s21, 1
    %p212 = por %p210, %p211
    %p213 = scmp.ne.s32.totalorder %s204, %s205
    %p214 = scmp.eq.s32.totalorder %s21, 0
    %p215 = por %p213, %p214
    %p216 = scmp.ne.s32.totalorder %s204, %s205
    %p217 = scmp.eq.s32.totalorder %s22, 1
    %p218 = por %p216, %p217
    %p220 = scmp.ne.s32.totalorder %s205, %s219
    %p221 = scmp.eq.s32.totalorder %s22, 0
    %p222 = por %p220, %p221
    %s224 = sadd.s32 %s223, 1
    %p227 = scmp.eq.s32.totalorder %s16, 1
    %p228 = scmp.ne.s32.totalorder %s223, %s225
    %p229 = scmp.eq.s32.totalorder %s16, 0
    %p230 = por %p228, %p229
    %p231 = scmp.ne.s32.totalorder %s223, %s225
    %p232 = scmp.eq.s32.totalorder %s21, 1
    %p233 = por %p231, %p232
    %p234 = scmp.ne.s32.totalorder %s225, %s226
    %p235 = scmp.eq.s32.totalorder %s21, 0
    %p236 = por %p234, %p235
    %p237 = scmp.ne.s32.totalorder %s225, %s226
    %p238 = scmp.eq.s32.totalorder %s22, 1
    %p239 = por %p237, %p238
    %p241 = scmp.ne.s32.totalorder %s226, %s240
    %p242 = scmp.eq.s32.totalorder %s22, 0
    %p243 = por %p241, %p242
    %s244 = ssub.s32 %s16, %s23
    %p245 = scmp.eq.s32.totalorder %s244, 0
    %s247 = sadd.s32 %s246, 1
    %s248 = scalar_select %p245, %s246, %s247
    %p251 = pneg %p245
    %p252 = scmp.eq.s32.totalorder %s16, 1
    %p253 = por %p251, %p252
    %p254 = scmp.ne.s32.totalorder %s246, %s249
    %p255 = scmp.eq.s32.totalorder %s16, 0
    %p256 = por %p254, %p255
    %p257 = scmp.ne.s32.totalorder %s246, %s249
    %p258 = scmp.eq.s32.totalorder %s21, 1
    %p259 = por %p257, %p258
    %p260 = scmp.ne.s32.totalorder %s249, %s250
    %p261 = scmp.eq.s32.totalorder %s21, 0
    %p262 = por %p260, %p261
    %p263 = scmp.ne.s32.totalorder %s249, %s250
    %p264 = scmp.eq.s32.totalorder %s22, 1
    %p265 = por %p263, %p264
    %p267 = scmp.ne.s32.totalorder %s250, %s266
    %p268 = scmp.eq.s32.totalorder %s22, 0
    %p269 = por %p267, %p268
    %p270 = scmp.le.s32.totalorder 1, %s16
    %p271 = scmp.lt.s32.totalorder %s16, 3
    %p272 = pnand %p270, %p271
    %p273 = pneg %p272
    // Predicated region
    $region9: #{basic_layer_up_forward.9} parent=5 // pred_check
      _
    $region10: #{basic_layer_up_forward.9} parent=5 // pred_check_branch
      %275 = sbr.rel (%p272) target = $region12
    $region11: #{basic_layer_up_forward.9} parent=5 // pred_region
      %s276 = ssub.s32 %s16, 1
      // Predicated region
      $region13: #{basic_layer_up_forward.9} parent=11 // pred_check
        %p277 = pneg %p63
      $region14: #{basic_layer_up_forward.9} parent=11 // pred_check_branch
        %279 = sbr.rel (%p277) target = $region16
      $region15: #{basic_layer_up_forward.9} parent=11 // pred_region
        _
      $region16: #{basic_layer_up_forward.9} parent=11 // pred_fallthru
        _
      // Predicated region
      $region17: #{basic_layer_up_forward.9} parent=11 // pred_check
        %p280 = pneg %p84
      $region18: #{basic_layer_up_forward.9} parent=11 // pred_check_branch
        %282 = sbr.rel (%p280) target = $region20
      $region19: #{basic_layer_up_forward.9} parent=11 // pred_region
        _
      $region20: #{basic_layer_up_forward.9} parent=11 // pred_fallthru
        _
      // Predicated region
      $region21: #{basic_layer_up_forward.9} parent=11 // pred_check
        %p283 = pneg %p131
      $region22: #{basic_layer_up_forward.9} parent=11 // pred_check_branch
        %285 = sbr.rel (%p283) target = $region24
      $region23: #{basic_layer_up_forward.9} parent=11 // pred_region
        _
      $region24: #{basic_layer_up_forward.9} parent=11 // pred_fallthru
        _
      // Predicated region
      $region25: #{basic_layer_up_forward.9} parent=11 // pred_check
        %p286 = pneg %p152
      $region26: #{basic_layer_up_forward.9} parent=11 // pred_check_branch
        %288 = sbr.rel (%p286) target = $region28
      $region27: #{basic_layer_up_forward.9} parent=11 // pred_region
        _
      $region28: #{basic_layer_up_forward.9} parent=11 // pred_fallthru
        _
      // Predicated region
      $region29: #{basic_layer_up_forward.9} parent=11 // pred_check
        %p289 = pneg %p173
      $region30: #{basic_layer_up_forward.9} parent=11 // pred_check_branch
        %291 = sbr.rel (%p289) target = $region32
      $region31: #{basic_layer_up_forward.9} parent=11 // pred_region
        _
      $region32: #{basic_layer_up_forward.9} parent=11 // pred_fallthru
        _
      // Predicated region
      $region33: #{basic_layer_up_forward.9} parent=11 // pred_check
        %p292 = pneg %p194
      $region34: #{basic_layer_up_forward.9} parent=11 // pred_check_branch
        %294 = sbr.rel (%p292) target = $region36
      $region35: #{basic_layer_up_forward.9} parent=11 // pred_region
        _
      $region36: #{basic_layer_up_forward.9} parent=11 // pred_fallthru
        _
      // Predicated region
      $region37: #{basic_layer_up_forward.9} parent=11 // pred_check
        %p295 = pneg %p215
      $region38: #{basic_layer_up_forward.9} parent=11 // pred_check_branch
        %297 = sbr.rel (%p295) target = $region40
      $region39: #{basic_layer_up_forward.9} parent=11 // pred_region
        _
      $region40: #{basic_layer_up_forward.9} parent=11 // pred_fallthru
        _
      // Predicated region
      $region41: #{basic_layer_up_forward.9} parent=11 // pred_check
        %p298 = pneg %p236
      $region42: #{basic_layer_up_forward.9} parent=11 // pred_check_branch
        %300 = sbr.rel (%p298) target = $region44
      $region43: #{basic_layer_up_forward.9} parent=11 // pred_region
        _
      $region44: #{basic_layer_up_forward.9} parent=11 // pred_fallthru
        _
    $region12: #{basic_layer_up_forward.9} parent=5 // pred_fallthru
      _
    %p301 = scmp.lt.s32.totalorder %s16, 2
    // Predicated region
    $region45: #{basic_layer_up_forward.9} parent=5 // pred_check
      %p302 = pneg %p301
    $region46: #{basic_layer_up_forward.9} parent=5 // pred_check_branch
      %304 = sbr.rel (%p302) target = $region48
    $region47: #{basic_layer_up_forward.9} parent=5 // pred_region
      // Predicated region
      $region49: #{basic_layer_up_forward.9} parent=47 // pred_check
        %p305 = pneg %p36
      $region50: #{basic_layer_up_forward.9} parent=47 // pred_check_branch
        %307 = sbr.rel (%p305) target = $region52
      $region51: #{basic_layer_up_forward.9} parent=47 // pred_region
        %s308 = smul.u32 4, %s16
        %p309 = scmp.lt.s32.totalorder %s308, 7
        %s310 = scalar_select %p309, %s308, 7
        %s311 = smul.addr %s310, 4
        %s312 = scalar_lea.vmem %s0, %s311
        %s313 = smul.u32 4, %s16
      $region52: #{basic_layer_up_forward.9} parent=47 // pred_fallthru
        _
      // Predicated region
      $region53: #{basic_layer_up_forward.9} parent=47 // pred_check
        %p314 = pneg %p104
      $region54: #{basic_layer_up_forward.9} parent=47 // pred_check_branch
        %316 = sbr.rel (%p314) target = $region56
      $region55: #{basic_layer_up_forward.9} parent=47 // pred_region
        %s317 = smul.u32 4, %s16
        %p318 = scmp.lt.s32.totalorder %s317, 7
        %s319 = scalar_select %p318, %s317, 7
        %s320 = smul.addr %s319, 8
        %s321 = scalar_lea.vmem %s3, %s320
        %s322 = smul.u32 4, %s16
      $region56: #{basic_layer_up_forward.9} parent=47 // pred_fallthru
        _
    $region48: #{basic_layer_up_forward.9} parent=5 // pred_fallthru
      _
    %p323 = scmp.le.s32.totalorder 1, %s16
    %p324 = scmp.lt.s32.totalorder %s16, 3
    %p325 = pnand %p323, %p324
    %p326 = pneg %p325
    // Predicated region
    $region57: #{basic_layer_up_forward.9} parent=5 // pred_check
      _
    $region58: #{basic_layer_up_forward.9} parent=5 // pred_check_branch
      %328 = sbr.rel (%p325) target = $region60
    $region59: #{basic_layer_up_forward.9} parent=5 // pred_region
      %s329 = ssub.s32 %s16, 1
      %s330 = smul.u32 4, %s21
      %p331 = scmp.lt.s32.totalorder %s330, 7
      %s332 = scalar_select %p331, %s330, 7
      %s333 = smul.addr %s332, 4
      %s334 = scalar_lea.vmem %s0, %s333
      %p335 = pneg %p42
      %p336 = pneg %p39
      %p337 = pneg %p63
      %p338 = pneg %p60
      %p339 = pneg %p84
      %p340 = pneg %p81
      %s341 = smul.u32 4, %s21
      %p342 = scmp.lt.s32.totalorder %s341, 7
      %s343 = scalar_select %p342, %s341, 7
      %s344 = smul.addr %s343, 8
      %s345 = scalar_lea.vmem %s3, %s344
      %p346 = pneg %p110
      %p347 = pneg %p107
      %p348 = pneg %p131
      %p349 = pneg %p128
      %p350 = pneg %p152
      %p351 = pneg %p149
      %p352 = pneg %p173
      %p353 = pneg %p170
      %p354 = pneg %p194
      %p355 = pneg %p191
      %p356 = pneg %p215
      %p357 = pneg %p212
      %p358 = pneg %p236
      %p359 = pneg %p233
      %p360 = pneg %p262
      %p361 = pneg %p259
      %s362 = smul.u32 4, %s21
      %p363 = scmp.lt.s32.totalorder %s362, 7
      %s364 = scalar_select %p363, %s362, 7
      %s365 = smul.addr %s364, 8
      %s366 = scalar_lea.vmem %s10, %s365
      %s367 = smul.u32 4, %s21
      %p368 = scmp.lt.s32.totalorder %s367, 7
      %s369 = scalar_select %p368, %s367, 7
      %s370 = smul.addr %s369, 4
      %s371 = scalar_lea.vmem %s0, %s370
      %s372 = smul.u32 4, %s21
      %s373 = smul.u32 4, %s21
      %p374 = scmp.lt.s32.totalorder %s373, 7
      %s375 = scalar_select %p374, %s373, 7
      %s376 = smul.addr %s375, 8
      %s377 = scalar_lea.vmem %s3, %s376
      %s378 = smul.u32 4, %s21
      %s379 = smul.u32 4, %s21
      %p380 = scmp.lt.s32.totalorder %s379, 7
      %s381 = scalar_select %p380, %s379, 7
      %s382 = smul.addr %s381, 8
      %s383 = scalar_lea.vmem %s10, %s382
      %s384 = smul.u32 4, %s21
      %v386 = vld [vmem:[%s377] sm:$0xff]
      %v387 = vld [vmem:[%s377 + $0x8] sm:$0xff]
      %v388 = vld [vmem:[%s377 + $0x10] sm:$0xff]
      %v389 = vld [vmem:[%s377 + $0x18] sm:$0xff]
      %v390 = vld [vmem:[%s371] sm:$0xf]
      %v391 = vld [vmem:[%s371 + $0x4] sm:$0xf]
      %v392 = vld [vmem:[%s371 + $0x8] sm:$0xf]
      %v393 = vld [vmem:[%s371 + $0xc] sm:$0xf]
      %v394 = vld [vmem:[%s1] sm:$0xf]
      %v395 = vld [vmem:[%s1 + $0x4] sm:$0xf]
      %v396 = vld [vmem:[%s1 + $0x8] sm:$0xf]
      %v397 = vld [vmem:[%s1 + $0xc] sm:$0xf]
      %v398 = vld [vmem:[%s2] sm:$0x1]
      %v400 = vperm.slane %v398, 0
      %v406 = vunpack.c.l.b16 %v390
      %v407 = vunpack.c.l.b16 %v391
      %v408 = vunpack.c.l.b16 %v392
      %v409 = vunpack.c.l.b16 %v393
      %v410 = vpack.c.b16 %v407, %v406
      %v411 = vpack.c.b16 %v409, %v408
      %v416 = vunpack.c.l.b16 %v394
      %v417 = vunpack.c.l.b16 %v395
      %v418 = vunpack.c.l.b16 %v396
      %v419 = vunpack.c.l.b16 %v397
      %v420 = vpack.c.b16 %v417, %v416
      %v421 = vpack.c.b16 %v419, %v418
      %vm424 = vcmask 261120
      %v426 = vsel %vm424, %v410, 0
      %v429 = vsel %vm424, %v411, 0
      %431 = vmatpush.bf16.msra.mxu0 0
      %432 = vmatpush.bf16.msra.mxu0 0
      %433 = vmatpush.bf16.msra.mxu0 0
      %434 = vmatpush.bf16.msra.mxu0 0
      %435 = vmatpush.bf16.msra.mxu0 0
      %436 = vmatpush.bf16.msra.mxu0 0
      %437 = vmatpush.bf16.msra.mxu0 %v421
      %438 = vmatpush.bf16.msra.mxu0 %v420
      %439 = vmatmul.bf16.gmra.mxu0 %v426
      %v440 = vpop.f32.mrf.mxu0
      %v441 = vadd.f32 %v400, %v440
      %v442 = vpop.f32.mrf.mxu0
      %v443 = vadd.f32 %v400, %v442
      %444 = vmatmul.bf16.gmra.mxu0 %v429
      %v445 = vpop.f32.mrf.mxu0
      %v446 = vadd.f32 %v400, %v445
      %v447 = vpop.f32.mrf.mxu0
      %v448 = vadd.f32 %v400, %v447
      %449 = vdwg.mxu0
      %v450 = vadd.f32 %v441, %v386
      %v451 = vadd.f32 %v443, %v387
      %v452 = vadd.f32 %v446, %v388
      %v453 = vadd.f32 %v448, %v389
      %v454 = vld [vmem:[%s4] sm:$0x1]
      %v455 = vld [vmem:[%s5] sm:$0x1]
      %v456 = vsel %vm424, %v450, 0.0
      %457 = vadd.xlane.f32.xlu0 %v456
      %v458 = vpop.xlane.xlu0 %457
      %v459 = vsel %vm424, %v451, 0.0
      %460 = vadd.xlane.f32.xlu0 %v459
      %v461 = vpop.xlane.xlu0 %460
      %v462 = vsel %vm424, %v452, 0.0
      %463 = vadd.xlane.f32.xlu0 %v462
      %v464 = vpop.xlane.xlu0 %463
      %v465 = vsel %vm424, %v453, 0.0
      %466 = vadd.xlane.f32.xlu0 %v465
      %v467 = vpop.xlane.xlu0 %466
      %v468 = vrcp.pop 32.0
      %v469 = vmul.f32 32.0, %v468
      %v470 = vsub.f32 1.0, %v469
      %v471 = vmul.f32 %v468, %v470
      %v472 = vadd.f32 %v468, %v471
      %vm473 = vweird.f32 %v468
      %v474 = vsel %vm473, %v468, %v472
      %v475 = vmul.f32 %v458, %v474
      %v476 = vmul.f32 %v461, %v474
      %v477 = vmul.f32 %v464, %v474
      %v478 = vmul.f32 %v467, %v474
      %v479 = vsub.f32 %v450, %v475
      %v480 = vsub.f32 %v451, %v476
      %v481 = vsub.f32 %v452, %v477
      %v482 = vsub.f32 %v453, %v478
      %v483 = vmul.f32 %v479, %v479
      %v484 = vmul.f32 %v480, %v480
      %v485 = vmul.f32 %v481, %v481
      %v486 = vmul.f32 %v482, %v482
      %v487 = vsel %vm424, %v483, 0.0
      %488 = vadd.xlane.f32.xlu0 %v487
      %v489 = vpop.xlane.xlu0 %488
      %v490 = vsel %vm424, %v484, 0.0
      %491 = vadd.xlane.f32.xlu0 %v490
      %v492 = vpop.xlane.xlu0 %491
      %v493 = vsel %vm424, %v485, 0.0
      %494 = vadd.xlane.f32.xlu0 %v493
      %v495 = vpop.xlane.xlu0 %494
      %v496 = vsel %vm424, %v486, 0.0
      %497 = vadd.xlane.f32.xlu0 %v496
      %v498 = vpop.xlane.xlu0 %497
      %v499 = vmul.f32 %v489, %v474
      %v500 = vmul.f32 %v492, %v474
      %v501 = vmul.f32 %v495, %v474
      %v502 = vmul.f32 %v498, %v474
      %v503 = vadd.f32 %v499, 1e-05
      %v504 = vadd.f32 %v500, 1e-05
      %v505 = vadd.f32 %v501, 1e-05
      %v506 = vadd.f32 %v502, 1e-05
      %v507 = vrsqrt.pop %v503
      %v508 = vmul.f32 %v507, %v503
      %v509 = vmul.f32 %v508, %v507
      %v510 = vmul.f32 0.5, %v509
      %v511 = vsub.f32 1.5, %v510
      %v512 = vmul.f32 %v507, %v511
      %vm513 = vweird.f32 %v503
      %vm514 = vweird.f32 %v507
      %vm515 = vmor %vm513, %vm514
      %v516 = vsel %vm515, %v507, %v512
      %v517 = vrsqrt.pop %v504
      %v518 = vmul.f32 %v517, %v504
      %v519 = vmul.f32 %v518, %v517
      %v520 = vmul.f32 0.5, %v519
      %v521 = vsub.f32 1.5, %v520
      %v522 = vmul.f32 %v517, %v521
      %vm523 = vweird.f32 %v504
      %vm524 = vweird.f32 %v517
      %vm525 = vmor %vm523, %vm524
      %v526 = vsel %vm525, %v517, %v522
      %v527 = vrsqrt.pop %v505
      %v528 = vmul.f32 %v527, %v505
      %v529 = vmul.f32 %v528, %v527
      %v530 = vmul.f32 0.5, %v529
      %v531 = vsub.f32 1.5, %v530
      %v532 = vmul.f32 %v527, %v531
      %vm533 = vweird.f32 %v505
      %vm534 = vweird.f32 %v527
      %vm535 = vmor %vm533, %vm534
      %v536 = vsel %vm535, %v527, %v532
      %v537 = vrsqrt.pop %v506
      %v538 = vmul.f32 %v537, %v506
      %v539 = vmul.f32 %v538, %v537
      %v540 = vmul.f32 0.5, %v539
      %v541 = vsub.f32 1.5, %v540
      %v542 = vmul.f32 %v537, %v541
      %vm543 = vweird.f32 %v506
      %vm544 = vweird.f32 %v537
      %vm545 = vmor %vm543, %vm544
      %v546 = vsel %vm545, %v537, %v542
      %v547 = vmul.f32 %v479, %v516
      %v548 = vmul.f32 %v480, %v526
      %v549 = vmul.f32 %v481, %v536
      %v550 = vmul.f32 %v482, %v546
      %v552 = vperm.slane %v454, 0
      %v554 = vmul.f32 %v547, %v552
      %v555 = vmul.f32 %v548, %v552
      %v556 = vmul.f32 %v549, %v552
      %v557 = vmul.f32 %v550, %v552
      %v559 = vperm.slane %v455, 0
      %v561 = vadd.f32 %v554, %v559
      %v562 = vadd.f32 %v555, %v559
      %v563 = vadd.f32 %v556, %v559
      %v564 = vadd.f32 %v557, %v559
      %v565 = vpack.c.bf16 %v562, %v561
      %v566 = vpack.c.bf16 %v564, %v563
      %v567 = vld [vmem:[%s6] sm:$0xf]
      %v568 = vld [vmem:[%s6 + $0x4] sm:$0xf]
      %v569 = vld [vmem:[%s6 + $0x8] sm:$0xf]
      %v570 = vld [vmem:[%s6 + $0xc] sm:$0xf]
      %v571 = vld [vmem:[%s7] sm:$0x1]
      %v573 = vperm.slane %v571, 0
      %v579 = vunpack.c.l.b16 %v567
      %v580 = vunpack.c.l.b16 %v568
      %v581 = vunpack.c.l.b16 %v569
      %v582 = vunpack.c.l.b16 %v570
      %v583 = vpack.c.b16 %v580, %v579
      %v584 = vpack.c.b16 %v582, %v581
      %v588 = vsel %vm424, %v565, 0
      %v591 = vsel %vm424, %v566, 0
      %593 = vmatpush.bf16.msra.mxu0 0
      %594 = vmatpush.bf16.msra.mxu0 0
      %595 = vmatpush.bf16.msra.mxu0 0
      %596 = vmatpush.bf16.msra.mxu0 0
      %597 = vmatpush.bf16.msra.mxu0 0
      %598 = vmatpush.bf16.msra.mxu0 0
      %599 = vmatpush.bf16.msra.mxu0 %v584
      %600 = vmatpush.bf16.msra.mxu0 %v583
      %601 = vmatmul.bf16.gmra.mxu0 %v588
      %v602 = vpop.f32.mrf.mxu0
      %v603 = vadd.f32 %v573, %v602
      %v604 = vpop.f32.mrf.mxu0
      %v605 = vadd.f32 %v573, %v604
      %606 = vmatmul.bf16.gmra.mxu0 %v591
      %v607 = vpop.f32.mrf.mxu0
      %v608 = vadd.f32 %v573, %v607
      %v609 = vpop.f32.mrf.mxu0
      %v610 = vadd.f32 %v573, %v609
      %611 = vdwg.mxu0
      %v612 = vmul.f32 %v603, 0.5
      %v613 = vmul.f32 %v605, 0.5
      %v614 = vmul.f32 %v608, 0.5
      %v615 = vmul.f32 %v610, 0.5
      %v616 = vmul.f32 %v603, 0.044715
      %v617 = vmul.f32 %v605, 0.044715
      %v618 = vmul.f32 %v608, 0.044715
      %v619 = vmul.f32 %v610, 0.044715
      %v620 = vmul.f32 %v616, %v603
      %v621 = vmul.f32 %v617, %v605
      %v622 = vmul.f32 %v618, %v608
      %v623 = vmul.f32 %v619, %v610
      %v624 = vmul.f32 %v620, %v603
      %v625 = vmul.f32 %v621, %v605
      %v626 = vmul.f32 %v622, %v608
      %v627 = vmul.f32 %v623, %v610
      %v628 = vadd.f32 %v603, %v624
      %v629 = vadd.f32 %v605, %v625
      %v630 = vadd.f32 %v608, %v626
      %v631 = vadd.f32 %v610, %v627
      %v632 = vmul.f32 %v628, 0.7978846
      %v633 = vmul.f32 %v629, 0.7978846
      %v634 = vmul.f32 %v630, 0.7978846
      %v635 = vmul.f32 %v631, 0.7978846
      %v636 = vtanh.pop %v632
      %v637 = vtanh.pop %v633
      %v638 = vtanh.pop %v634
      %v639 = vtanh.pop %v635
      %v640 = vadd.f32 %v636, 1.0
      %v641 = vadd.f32 %v637, 1.0
      %v642 = vadd.f32 %v638, 1.0
      %v643 = vadd.f32 %v639, 1.0
      %v644 = vmul.f32 %v612, %v640
      %v645 = vmul.f32 %v613, %v641
      %v646 = vmul.f32 %v614, %v642
      %v647 = vmul.f32 %v615, %v643
      %v648 = vpack.c.bf16 %v645, %v644
      %v649 = vpack.c.bf16 %v647, %v646
      %v650 = vld [vmem:[%s8] sm:$0xf]
      %v651 = vld [vmem:[%s8 + $0x4] sm:$0xf]
      %v652 = vld [vmem:[%s8 + $0x8] sm:$0xf]
      %v653 = vld [vmem:[%s8 + $0xc] sm:$0xf]
      %v654 = vld [vmem:[%s8 + $0x10] sm:$0xf]
      %v655 = vld [vmem:[%s8 + $0x14] sm:$0xf]
      %v656 = vld [vmem:[%s8 + $0x18] sm:$0xf]
      %v657 = vld [vmem:[%s8 + $0x1c] sm:$0xf]
      %v658 = vld [vmem:[%s8 + $0x20] sm:$0xf]
      %v659 = vld [vmem:[%s8 + $0x24] sm:$0xf]
      %v660 = vld [vmem:[%s8 + $0x28] sm:$0xf]
      %v661 = vld [vmem:[%s8 + $0x2c] sm:$0xf]
      %v662 = vld [vmem:[%s8 + $0x30] sm:$0xf]
      %v663 = vld [vmem:[%s8 + $0x34] sm:$0xf]
      %v664 = vld [vmem:[%s8 + $0x38] sm:$0xf]
      %v665 = vld [vmem:[%s8 + $0x3c] sm:$0xf]
      %v666 = vld [vmem:[%s9] sm:$0x1]
      %v668 = vperm.slane %v666, 0
      %v686 = vunpack.c.l.b16 %v650
      %v687 = vunpack.c.l.b16 %v651
      %v688 = vunpack.c.l.b16 %v652
      %v689 = vunpack.c.l.b16 %v653
      %v690 = vunpack.c.l.b16 %v654
      %v691 = vunpack.c.l.b16 %v655
      %v692 = vunpack.c.l.b16 %v656
      %v693 = vunpack.c.l.b16 %v657
      %v694 = vunpack.c.l.b16 %v658
      %v695 = vunpack.c.l.b16 %v659
      %v696 = vunpack.c.l.b16 %v660
      %v697 = vunpack.c.l.b16 %v661
      %v698 = vunpack.c.l.b16 %v662
      %v699 = vunpack.c.l.b16 %v663
      %v700 = vunpack.c.l.b16 %v664
      %v701 = vunpack.c.l.b16 %v665
      %v702 = vpack.c.b16 %v687, %v686
      %v703 = vpack.c.b16 %v689, %v688
      %v704 = vpack.c.b16 %v691, %v690
      %v705 = vpack.c.b16 %v693, %v692
      %v706 = vpack.c.b16 %v695, %v694
      %v707 = vpack.c.b16 %v697, %v696
      %v708 = vpack.c.b16 %v699, %v698
      %v709 = vpack.c.b16 %v701, %v700
      %718 = vmatpush.bf16.msra.mxu0 %v709
      %719 = vmatpush.bf16.msra.mxu0 %v708
      %720 = vmatpush.bf16.msra.mxu0 %v707
      %721 = vmatpush.bf16.msra.mxu0 %v706
      %722 = vmatpush.bf16.msra.mxu0 %v705
      %723 = vmatpush.bf16.msra.mxu0 %v704
      %724 = vmatpush.bf16.msra.mxu0 %v703
      %725 = vmatpush.bf16.msra.mxu0 %v702
      %726 = vmatmul.bf16.gmra.mxu0 %v648
      %v727 = vpop.f32.mrf.mxu0
      %v728 = vadd.f32 %v668, %v727
      %v729 = vpop.f32.mrf.mxu0
      %v730 = vadd.f32 %v668, %v729
      %731 = vmatmul.bf16.gmra.mxu0 %v649
      %v732 = vpop.f32.mrf.mxu0
      %v733 = vadd.f32 %v668, %v732
      %v734 = vpop.f32.mrf.mxu0
      %v735 = vadd.f32 %v668, %v734
      %736 = vdwg.mxu0
      %v737 = vadd.f32 %v450, %v728
      %v738 = vadd.f32 %v451, %v730
      %v739 = vadd.f32 %v452, %v733
      %v740 = vadd.f32 %v453, %v735
      %741 = vst.msk [vmem:[%s383] sm:$0xff] %vm424, %v737
      %742 = vst.msk [vmem:[%s383 + $0x8] sm:$0xff] %vm424, %v738
      %743 = vst.msk [vmem:[%s383 + $0x10] sm:$0xff] %vm424, %v739
      %744 = vst.msk [vmem:[%s383 + $0x18] sm:$0xff] %vm424, %v740
      %s745 = smul.u32 4, %s21
      %p746 = scmp.lt.s32.totalorder %s745, 7
      %s747 = scalar_select %p746, %s745, 7
      %s748 = smul.addr %s747, 8
      %s749 = scalar_lea.vmem %s10, %s748
      // Predicated region
      $region61: #{basic_layer_up_forward.9} parent=59 // pred_check
        %p750 = pneg %p259
      $region62: #{basic_layer_up_forward.9} parent=59 // pred_check_branch
        %752 = sbr.rel (%p750) target = $region64
      $region63: #{basic_layer_up_forward.9} parent=59 // pred_region
        %s753 = smul.u32 4, %s21
      $region64: #{basic_layer_up_forward.9} parent=59 // pred_fallthru
        _
    $region60: #{basic_layer_up_forward.9} parent=5 // pred_fallthru
      _
    %p754 = scmp.le.s32.totalorder 2, %s16
    // Predicated region
    $region65: #{basic_layer_up_forward.9} parent=5 // pred_check
      %p755 = pneg %p754
    $region66: #{basic_layer_up_forward.9} parent=5 // pred_check_branch
      %757 = sbr.rel (%p755) target = $region68
    $region67: #{basic_layer_up_forward.9} parent=5 // pred_region
      %s758 = ssub.s32 %s16, 2
      // Predicated region
      $region69: #{basic_layer_up_forward.9} parent=67 // pred_check
        %p759 = pneg %p265
      $region70: #{basic_layer_up_forward.9} parent=67 // pred_check_branch
        %761 = sbr.rel (%p759) target = $region72
      $region71: #{basic_layer_up_forward.9} parent=67 // pred_region
        %s762 = smul.u32 4, %s22
        %p763 = scmp.lt.s32.totalorder %s762, 7
        %s764 = scalar_select %p763, %s762, 7
        %s765 = smul.addr %s764, 8
        %s766 = scalar_lea.vmem %s10, %s765
      $region72: #{basic_layer_up_forward.9} parent=67 // pred_fallthru
        _
    $region68: #{basic_layer_up_forward.9} parent=5 // pred_fallthru
      _
  $region6: #{basic_layer_up_forward.9} parent=0 // loop_footer
    %s20 = sadd.s32 1, %s16
  $region7: #{basic_layer_up_forward.9} parent=0 // loop_footer_branch
    %15 = sbr.rel target = $region3
  $region8: #{basic_layer_up_forward.9} parent=0 // loop_exit
    _

</llo_original>
